<compile_context>
chip_gen: v7x
topology: tpu7x:2x2x1
jax: 0.10.0
libtpu: 0.0.40
codegen_flags: <defaults>
</compile_context>

<pallas_src>
import functools
import math

import numpy as np
import jax
import jax.numpy as jnp
from jax.experimental import pallas as pl
from jax.experimental.pallas import tpu as pltpu


def _cumsum_tiles(tri_h_ref, tri_w_ref, mask_ref, th, normalize, scale):
    """Returns (y_tile, x_tile): f32 (TH, W) row-tiles of the (normalized) cumsum embeds."""
    h0 = pl.multiple_of(pl.program_id(1) * th, th)

    nm_full_f32 = 1.0 - mask_ref[0].astype(jnp.float32)                     # (Hp, W)
    nm_tile_f32 = 1.0 - mask_ref[0, pl.ds(h0, th), :].astype(jnp.float32)   # (TH, W)

    # bf16 operands are exact for 0/1 values; accumulate in f32 on the MXU.
    y_tile = jnp.dot(tri_h_ref[...], nm_full_f32.astype(jnp.bfloat16),
                     preferred_element_type=jnp.float32)                    # (TH, W)
    x_tile = jnp.dot(nm_tile_f32.astype(jnp.bfloat16), tri_w_ref[...],
                     preferred_element_type=jnp.float32)                    # (TH, W)

    if normalize:
        eps = jnp.float32(1e-06)
        # Denominators: full-column totals (last cumsum row) / per-row totals (last column).
        # One reciprocal per row/column with the scale folded in, then a broadcast multiply,
        # keeping the EUP slot free for the sin.
        y_last = jnp.sum(nm_full_f32, axis=0, keepdims=True)                # (1, W)
        x_last = jnp.sum(nm_tile_f32, axis=1, keepdims=True)                # (TH, 1)
        y_tile = y_tile * (jnp.float32(scale) / (y_last + eps))
        x_tile = x_tile * (jnp.float32(scale) / (x_last + eps))
    return y_tile, x_tile


def _pos_embed_kernel_nhwc(tri_h_ref, tri_w_ref, inv_ref, phase_ref, mask_ref, out_ref,
                           *, normalize, scale, th):
    """Channel-last output block (1, TH, W, 2F); lane-dense store when 2F % 128 == 0."""
    y_tile, x_tile = _cumsum_tiles(tri_h_ref, tri_w_ref, mask_ref, th, normalize, scale)
    inv = inv_ref[...]     # (1, 1, F)  = 1 / dim_t
    ph = phase_ref[...]    # (1, 1, F)  = 0 (even channel) or pi/2 (odd channel)
    # cos(a) == sin(a + pi/2): one sin over the 2F width, one full-width store.
    out_ref[0] = jnp.sin(jnp.concatenate([y_tile[:, :, None] * inv + ph,
                                          x_tile[:, :, None] * inv + ph], axis=-1))


def _pos_embed_kernel_nchw(tri_h_ref, tri_w_ref, inv_ref, phase_ref, mask_ref, out_ref,
                           *, normalize, scale, th, num_pos_feats):
    """NCHW output block (1, 2F, TH, W); embeds stay in native (sublane=H, lane=W) layout."""
    F = num_pos_feats
    y_tile, x_tile = _cumsum_tiles(tri_h_ref, tri_w_ref, mask_ref, th, normalize, scale)
    inv = inv_ref[...]     # (F, 1, W): inv[c] replicated across lanes (built in the wrapper)
    ph = phase_ref[...]    # (F, 1, W)
    # Only leading-dim / sublane broadcasts (no lane splat), no concat temp, no transpose.
    out_ref[0, 0:F, :, :] = jnp.sin(y_tile[None, :, :] * inv + ph)          # (F, TH, W)
    out_ref[0, F:2 * F, :, :] = jnp.sin(x_tile[None, :, :] * inv + ph)      # (F, TH, W)


def _pick_h_tile(H, W, F, target_block_bytes=2 << 20):
    """Rows per grid step: a multiple of 8 (or all of H) sized to a ~2 MiB output block."""
    row_bytes = W * 2 * F * 4
    th = max(8, (target_block_bytes // max(row_bytes, 1)) // 8 * 8)
    if th >= H:
        return H, 1, H                     # single tile covering all rows, no padding
    n_tiles = -(-H // th)                  # cdiv
    return th, n_tiles, th * n_tiles       # (TH, n_tiles, padded H)


@functools.partial(jax.jit, static_argnames=("num_pos_feats", "temperature", "normalize",
                                             "scale", "channels_last"))
def _position_embedding_sine_impl(mask_i8, *, num_pos_feats, temperature, normalize, scale,
                                  channels_last):
    B, H, W = mask_i8.shape
    F = num_pos_feats
    th, n_h, Hp = _pick_h_tile(H, W, F)

    if Hp > H:
        # Pad with "masked" rows: not_mask == 0 there, so valid rows and the normalize sums
        # are unaffected; the partial final output block is clipped on writeback.
        mask_i8 = jnp.pad(mask_i8, ((0, 0), (0, Hp - H), (0, 0)), constant_values=1)

    # ---- loop-invariant constants (fold at compile time; constant index_maps in-kernel) ----
    rh = np.arange(Hp)
    tri_h = jnp.asarray((rh[:, None] >= rh[None, :]).astype(np.float32),
                        dtype=jnp.bfloat16)                                  # (Hp, Hp) lower-tri
    rw = np.arange(W)
    tri_w = jnp.asarray((rw[:, None] <= rw[None, :]).astype(np.float32),
                        dtype=jnp.bfloat16)                                  # (W, W) upper-tri

    j = jnp.arange(F)
    dim_t = jnp.float32(temperature) ** ((2 * (j // 2)).astype(jnp.float32) / jnp.float32(F))
    inv_f = jnp.float32(1.0) / dim_t                                         # (F,)
    phase_f = jnp.where((j % 2) == 1, jnp.float32(math.pi / 2.0), jnp.float32(0.0))

    use_nchw = (not channels_last) and (W % 128 == 0)

    if use_nchw:
        inv_in = jnp.broadcast_to(inv_f[:, None, None], (F, 1, W))
        ph_in = jnp.broadcast_to(phase_f[:, None, None], (F, 1, W))
        kernel = functools.partial(_pos_embed_kernel_nchw, normalize=normalize,
                                   scale=float(scale), th=th, num_pos_feats=F)
        return pl.pallas_call(
            kernel,
            out_shape=jax.ShapeDtypeStruct((B, 2 * F, H, W), jnp.float32),
            grid=(B, n_h),
            in_specs=[
                pl.BlockSpec((th, Hp), lambda b, h: (h, 0)),        # tri_h row-slice
                pl.BlockSpec((W, W), lambda b, h: (0, 0)),          # tri_w   (constant)
                pl.BlockSpec((F, 1, W), lambda b, h: (0, 0, 0)),    # 1/dim_t (constant)
                pl.BlockSpec((F, 1, W), lambda b, h: (0, 0, 0)),    # phase   (constant)
                pl.BlockSpec((1, Hp, W), lambda b, h: (b, 0, 0)),   # mask (full plane)
            ],
            out_specs=pl.BlockSpec((1, 2 * F, th, W), lambda b, h: (b, 0, h, 0)),
            compiler_params=pltpu.CompilerParams(
                dimension_semantics=("parallel", "parallel")),
        )(tri_h, tri_w, inv_in, ph_in, mask_i8)

    inv_in = inv_f.reshape(1, 1, F)
    ph_in = phase_f.reshape(1, 1, F)
    kernel = functools.partial(_pos_embed_kernel_nhwc, normalize=normalize,
                               scale=float(scale), th=th)
    out_hwc = pl.pallas_call(
        kernel,
        out_shape=jax.ShapeDtypeStruct((B, H, W, 2 * F), jnp.float32),
        grid=(B, n_h),
        in_specs=[
            pl.BlockSpec((th, Hp), lambda b, h: (h, 0)),            # tri_h row-slice
            pl.BlockSpec((W, W), lambda b, h: (0, 0)),              # tri_w   (constant)
            pl.BlockSpec((1, 1, F), lambda b, h: (0, 0, 0)),        # 1/dim_t (constant)
            pl.BlockSpec((1, 1, F), lambda b, h: (0, 0, 0)),        # phase   (constant)
            pl.BlockSpec((1, Hp, W), lambda b, h: (b, 0, 0)),       # mask (full plane)
        ],
        out_specs=pl.BlockSpec((1, th, W, 2 * F), lambda b, h: (b, h, 0, 0)),
        compiler_params=pltpu.CompilerParams(
            dimension_semantics=("parallel", "parallel")),
    )(tri_h, tri_w, inv_in, ph_in, mask_i8)

    if channels_last:
        return out_hwc
    # Small W (< 128 lanes): NHWC compute + XLA transpose back to PyTorch's NCHW layout.
    return jnp.transpose(out_hwc, (0, 3, 1, 2))


def position_embedding_sine(x, mask, *, num_pos_feats=64, temperature=10000,
                            normalize=False, scale=None, channels_last=False):
    """Pallas equivalent of PositionEmbeddingSine.forward(x, mask).

    x:    (B, C, H, W) -- only used (as in PyTorch) to define device/dtype context
    mask: (B, H, W) bool, True = padded
    returns pos: (B, 2*num_pos_feats, H, W) float32   (or (B, H, W, 2F) if channels_last)
    """
    assert mask is not None
    if scale is not None and normalize is False:
        raise ValueError('normalize should be True if scale is passed')
    if scale is None:
        scale = 2 * math.pi
    del x
    mask_i8 = mask.astype(jnp.int8)  # bool is already 1 byte; int8 just keeps Mosaic off i1
    return _position_embedding_sine_impl(
        mask_i8, num_pos_feats=int(num_pos_feats), temperature=temperature,
        normalize=bool(normalize), scale=float(scale), channels_last=bool(channels_last))


def _reference(mask, *, num_pos_feats, temperature, normalize, scale):
    """Pure-JAX reference matching the PyTorch forward exactly."""
    not_mask = (~mask).astype(jnp.float32)
    y_embed = jnp.cumsum(not_mask, axis=1)
    x_embed = jnp.cumsum(not_mask, axis=2)
    if normalize:
        eps = 1e-06
        y_embed = y_embed / (y_embed[:, -1:, :] + eps) * scale
        x_embed = x_embed / (x_embed[:, :, -1:] + eps) * scale
    dim_t = jnp.arange(num_pos_feats)
    dim_t = temperature ** ((2 * (dim_t // 2)).astype(jnp.float32) / num_pos_feats)
    pos_x = x_embed[:, :, :, None] / dim_t
    pos_y = y_embed[:, :, :, None] / dim_t
    pos_x = jnp.stack((jnp.sin(pos_x[:, :, :, 0::2]),
                       jnp.cos(pos_x[:, :, :, 1::2])), axis=4).reshape(*pos_x.shape[:3], -1)
    pos_y = jnp.stack((jnp.sin(pos_y[:, :, :, 0::2]),
                       jnp.cos(pos_y[:, :, :, 1::2])), axis=4).reshape(*pos_y.shape[:3], -1)
    pos = jnp.concatenate((pos_y, pos_x), axis=3).transpose(0, 3, 1, 2)
    return pos


if __name__ == "__main__":
    key = jax.random.PRNGKey(0)
    kx, km, km2 = jax.random.split(key, 3)

    # --- small config (W < 128 -> NHWC kernel path), module defaults ---
    B, C, H, W = 2, 4, 16, 16
    F = 64  # 2F = 128 output channels -> lane-dense stores
    x = jax.random.normal(kx, (B, C, H, W), dtype=jnp.float32)
    mask = jax.random.bernoulli(km, 0.2, (B, H, W))  # True = padded

    pos = position_embedding_sine(x, mask, num_pos_feats=F, temperature=10000,
                                  normalize=False)
    pos = jax.block_until_ready(pos)
    ref = _reference(mask, num_pos_feats=F, temperature=10000, normalize=False,
                     scale=2 * math.pi)
    assert pos.shape == (B, 2 * F, H, W), pos.shape
    assert jnp.allclose(pos, ref, atol=1e-5, rtol=1e-5), float(jnp.max(jnp.abs(pos - ref)))

    pos_n = position_embedding_sine(x, mask, num_pos_feats=F, temperature=10000,
                                    normalize=True)
    pos_n = jax.block_until_ready(pos_n)
    ref_n = _reference(mask, num_pos_feats=F, temperature=10000, normalize=True,
                       scale=2 * math.pi)
    assert jnp.allclose(pos_n, ref_n, atol=1e-5, rtol=1e-5), \
        float(jnp.max(jnp.abs(pos_n - ref_n)))

    # --- lane-dense direct-NCHW path (W % 128 == 0) with a multi-step H-tile grid ---
    B2, H2, W2 = 2, 64, 128
    x2 = jnp.zeros((B2, C, H2, W2), dtype=jnp.float32)
    mask2 = jax.random.bernoulli(km2, 0.2, (B2, H2, W2))
    pos2 = position_embedding_sine(x2, mask2, num_pos_feats=F, temperature=10000,
                                   normalize=True)
    pos2 = jax.block_until_ready(pos2)
    ref2 = _reference(mask2, num_pos_feats=F, temperature=10000, normalize=True,
                      scale=2 * math.pi)
    assert pos2.shape == (B2, 2 * F, H2, W2), pos2.shape
    assert jnp.allclose(pos2, ref2, atol=1e-5, rtol=1e-5), \
        float(jnp.max(jnp.abs(pos2 - ref2)))

    print("KERNEL_OK")
</pallas_src>

<mosaic_0001>
module attributes {stable_mosaic.version = 11 : i64} {
  func.func @_pos_embed_kernel_nhwc(%arg0: i32, %arg1: i32, %arg2: memref<16x16xbf16, #tpu.memory_space<vmem>>, %arg3: memref<16x16xbf16, #tpu.memory_space<vmem>>, %arg4: memref<1x1x64xf32, #tpu.memory_space<vmem>>, %arg5: memref<1x1x64xf32, #tpu.memory_space<vmem>>, %arg6: memref<1x16x16xi8, #tpu.memory_space<vmem>>, %arg7: memref<1x16x16x128xf32, #tpu.memory_space<vmem>>) attributes {dimension_semantics = [#tpu.dimension_semantics<parallel>, #tpu.dimension_semantics<parallel>], iteration_bounds = array<i64: 2, 1>, scalar_prefetch = 0 : i64, scratch_operands = 0 : i64, tpu.core_type = #tpu.core_type<tc>, window_params = [{transform_indices = @transform_0, window_bounds = array<i64: 16, 16>}, {pipeline_mode = #tpu.pipeline_mode<synchronous>, transform_indices = @transform_1, window_bounds = array<i64: 16, 16>}, {pipeline_mode = #tpu.pipeline_mode<synchronous>, transform_indices = @transform_2, window_bounds = array<i64: 1, 1, 64>}, {pipeline_mode = #tpu.pipeline_mode<synchronous>, transform_indices = @transform_3, window_bounds = array<i64: 1, 1, 64>}, {transform_indices = @transform_4, window_bounds = array<i64: 1, 16, 16>}, {transform_indices = @transform_5, window_bounds = array<i64: 1, 16, 16, 128>}]} {
    %c16_i32 = arith.constant 16 : i32
    %0 = arith.muli %arg1, %c16_i32 : i32
    %1 = tpu.assume_multiple %0, 16 : i32
    %c0 = arith.constant 0 : index
    %c0_0 = arith.constant 0 : index
    %c0_1 = arith.constant 0 : index
    %2 = vector.load %arg6[%c0, %c0_0, %c0_1] : memref<1x16x16xi8, #tpu.memory_space<vmem>>, vector<1x16x16xi8>
    %3 = vector.shape_cast %2 : vector<1x16x16xi8> to vector<16x16xi8>
    %4 = arith.sitofp %3 : vector<16x16xi8> to vector<16x16xf32>
    %cst = arith.constant 1.000000e+00 : f32
    %5 = vector.broadcast %cst : f32 to vector<16x16xf32>
    %6 = arith.subf %5, %4 : vector<16x16xf32>
    %c0_2 = arith.constant 0 : index
    %7 = arith.index_cast %1 : i32 to index
    %c0_3 = arith.constant 0 : index
    %8 = vector.load %arg6[%c0_2, %7, %c0_3] : memref<1x16x16xi8, #tpu.memory_space<vmem>>, vector<1x16x16xi8>
    %9 = vector.shape_cast %8 : vector<1x16x16xi8> to vector<16x16xi8>
    %10 = arith.sitofp %9 : vector<16x16xi8> to vector<16x16xf32>
    %cst_4 = arith.constant 1.000000e+00 : f32
    %11 = vector.broadcast %cst_4 : f32 to vector<16x16xf32>
    %12 = arith.subf %11, %10 : vector<16x16xf32>
    %c0_5 = arith.constant 0 : index
    %c0_6 = arith.constant 0 : index
    %13 = vector.load %arg2[%c0_5, %c0_6] : memref<16x16xbf16, #tpu.memory_space<vmem>>, vector<16x16xbf16>
    %14 = arith.truncf %6 : vector<16x16xf32> to vector<16x16xbf16>
    %cst_7 = arith.constant dense<0.000000e+00> : vector<16x16xf32>
    %15 = tpu.matmul %13, %14, %cst_7 {dimension_numbers = #tpu.dot_dimension_numbers<[1], [0], [0], [1], [0, 0, 1, 1], [], []>} : vector<16x16xbf16>, vector<16x16xbf16>, vector<16x16xf32> -> vector<16x16xf32>
    %16 = arith.truncf %12 : vector<16x16xf32> to vector<16x16xbf16>
    %c0_8 = arith.constant 0 : index
    %c0_9 = arith.constant 0 : index
    %17 = vector.load %arg3[%c0_8, %c0_9] : memref<16x16xbf16, #tpu.memory_space<vmem>>, vector<16x16xbf16>
    %cst_10 = arith.constant dense<0.000000e+00> : vector<16x16xf32>
    %18 = tpu.matmul %16, %17, %cst_10 {dimension_numbers = #tpu.dot_dimension_numbers<[1], [0], [0], [1], [0, 0, 1, 1], [], []>} : vector<16x16xbf16>, vector<16x16xbf16>, vector<16x16xf32> -> vector<16x16xf32>
    %c0_11 = arith.constant 0 : index
    %c0_12 = arith.constant 0 : index
    %c0_13 = arith.constant 0 : index
    %19 = vector.load %arg4[%c0_11, %c0_12, %c0_13] : memref<1x1x64xf32, #tpu.memory_space<vmem>>, vector<1x1x64xf32>
    %c0_14 = arith.constant 0 : index
    %c0_15 = arith.constant 0 : index
    %c0_16 = arith.constant 0 : index
    %20 = vector.load %arg5[%c0_14, %c0_15, %c0_16] : memref<1x1x64xf32, #tpu.memory_space<vmem>>, vector<1x1x64xf32>
    %21 = vector.shape_cast %15 : vector<16x16xf32> to vector<16x16x1xf32>
    %22 = vector.broadcast %21 : vector<16x16x1xf32> to vector<16x16x64xf32>
    %23 = vector.broadcast %19 : vector<1x1x64xf32> to vector<16x16x64xf32>
    %24 = arith.mulf %22, %23 : vector<16x16x64xf32>
    %25 = vector.broadcast %20 : vector<1x1x64xf32> to vector<16x16x64xf32>
    %26 = arith.addf %24, %25 : vector<16x16x64xf32>
    %27 = vector.shape_cast %18 : vector<16x16xf32> to vector<16x16x1xf32>
    %28 = vector.broadcast %27 : vector<16x16x1xf32> to vector<16x16x64xf32>
    %29 = vector.broadcast %19 : vector<1x1x64xf32> to vector<16x16x64xf32>
    %30 = arith.mulf %28, %29 : vector<16x16x64xf32>
    %31 = vector.broadcast %20 : vector<1x1x64xf32> to vector<16x16x64xf32>
    %32 = arith.addf %30, %31 : vector<16x16x64xf32>
    %33 = tpu.concatenate %26, %32 in 2 : vector<16x16x64xf32>, vector<16x16x64xf32> -> vector<16x16x128xf32>
    %34 = math.sin %33 : vector<16x16x128xf32>
    %c0_17 = arith.constant 0 : index
    %c0_18 = arith.constant 0 : index
    %c0_19 = arith.constant 0 : index
    %c0_20 = arith.constant 0 : index
    %35 = vector.load %arg7[%c0_17, %c0_18, %c0_19, %c0_20] : memref<1x16x16x128xf32, #tpu.memory_space<vmem>>, vector<1x16x16x128xf32>
    %36 = vector.shape_cast %35 : vector<1x16x16x128xf32> to vector<16x16x128xf32>
    %37 = vector.shape_cast %34 : vector<16x16x128xf32> to vector<1x16x16x128xf32>
    tpu.vector_store %arg7[%c0_17, %c0_18, %c0_19, %c0_20], %37 {strides = array<i32>} : memref<1x16x16x128xf32, #tpu.memory_space<vmem>>, vector<1x16x16x128xf32>,
    return
  }
  func.func @transform_0(%arg0: i32, %arg1: i32) -> (i32, i32) {
    %c0_i32 = arith.constant 0 : i32
    %c0_i32_0 = arith.constant 0 : i32
    return %arg1, %c0_i32 : i32, i32
  }
  func.func @transform_1(%arg0: i32, %arg1: i32) -> (i32, i32) {
    %c0_i32 = arith.constant 0 : i32
    %c0_i32_0 = arith.constant 0 : i32
    %c0_i32_1 = arith.constant 0 : i32
    return %c0_i32, %c0_i32_0 : i32, i32
  }
  func.func @transform_2(%arg0: i32, %arg1: i32) -> (i32, i32, i32) {
    %c0_i32 = arith.constant 0 : i32
    %c0_i32_0 = arith.constant 0 : i32
    %c0_i32_1 = arith.constant 0 : i32
    %c0_i32_2 = arith.constant 0 : i32
    return %c0_i32, %c0_i32_0, %c0_i32_1 : i32, i32, i32
  }
  func.func @transform_3(%arg0: i32, %arg1: i32) -> (i32, i32, i32) {
    %c0_i32 = arith.constant 0 : i32
    %c0_i32_0 = arith.constant 0 : i32
    %c0_i32_1 = arith.constant 0 : i32
    %c0_i32_2 = arith.constant 0 : i32
    return %c0_i32, %c0_i32_0, %c0_i32_1 : i32, i32, i32
  }
  func.func @transform_4(%arg0: i32, %arg1: i32) -> (i32, i32, i32) {
    %c0_i32 = arith.constant 0 : i32
    %c0_i32_0 = arith.constant 0 : i32
    %c0_i32_1 = arith.constant 0 : i32
    return %arg0, %c0_i32, %c0_i32_0 : i32, i32, i32
  }
  func.func @transform_5(%arg0: i32, %arg1: i32) -> (i32, i32, i32, i32) {
    %c0_i32 = arith.constant 0 : i32
    %c0_i32_0 = arith.constant 0 : i32
    %c0_i32_1 = arith.constant 0 : i32
    return %arg0, %arg1, %c0_i32, %c0_i32_0 : i32, i32, i32, i32
  }
}

</mosaic_0001>

<llo_original>
// kernel: _position_embedding_sine_impl.1
$region0: #{_position_embedding_sine_impl.1}
  #allocation0 [shape = 'u32[]', space=smem, size = 0x4, offset = 0x4, fixed_abs, tag = 'smem constant byte address 0x4 - core index']
  #allocation1 [shape = 'u32[144,128]{1,0:T(1,128)}', space=vmem, size = 0x12000, scoped, tag = 'internal scratch']
  %s0 = inlined_call_operand.hbm [shape: bf16[16,16], index: 0, kind: input, shape index: {}]
  %s1 = inlined_call_operand.vmem [shape: bf16[16,16], index: 1, kind: input, shape index: {}]
  %s2 = inlined_call_operand.vmem [shape: f32[1,1,64], index: 2, kind: input, shape index: {}]
  %s3 = inlined_call_operand.vmem [shape: f32[1,1,64], index: 3, kind: input, shape index: {}]
  %s4 = inlined_call_operand.vmem [shape: s8[2,16,16], index: 4, kind: input, shape index: {}]
  %s5 = inlined_call_operand.hbm [shape: f32[2,16,16,128], index: 5, kind: output, shape index: {}]
  %s6 = sld [smem:[#allocation0]]
  $region57: #{_position_embedding_sine_impl.1} parent=0
    _
  %s8 = ssub.s32 1, %s6
  %s9 = scalar_select 0, %s8, %s6
  $region1: #{_position_embedding_sine_impl.1} parent=0
    #allocation2 [shape = 'u8[4096]{0}', space=vmem, size = 0x1000, scoped, tag = 'input window, operand 0, single buffered']
    #allocation3 [shape = 's32[2]{0}', space=sflag, size = 0x8, scoped, tag = 'scoped memory for _position_embedding_sine_impl.1']
    #allocation4 [shape = 's32[2]{0}', space=sflag, size = 0x8, scoped, tag = 'scoped memory for _position_embedding_sine_impl.1']
    #allocation5 [shape = 'u8[262144]{0}', space=vmem, size = 0x40000, scoped, tag = 'output window, operand 0']
    %10 = vsyncpa [#allocation3], 0
    %11 = vsyncpa [#allocation4], 0
    %s12 = scalar_lea.sflag [#allocation4], 1
    %13 = vsyncpa %s12, 0
    loop: start=0, step=1, limit=4
    $region2: #{_position_embedding_sine_impl.1} parent=1 // loop_pre_header
      _
    $region3: #{_position_embedding_sine_impl.1} parent=1 // loop_header
      %s15 = sphi 0, %s19
      %p16 = scmp.ge.s32.totalorder %s15, 4
      %s22 = sphi 0, %s34
      %s23 = sphi 0, %s30
      %s24 = sphi 0, %s22
      %s25 = sphi 0, %s23
      %s26 = sphi 0, %s24
      %s27 = sphi 0, %s25
      %s37 = sphi 0, %s39
      %s40 = sphi 0, %s37
      %s41 = sphi 0, %s40
      %s57 = sphi 0, %s41
      %s61 = sphi 0, %s61
      %s63 = sphi 0, %s61
      %s64 = sphi 0, %s63
      %s78 = sphi 0, %s64
      %s82 = sphi 0, %s82
      %s84 = sphi 0, %s82
      %s85 = sphi 0, %s84
      %s99 = sphi 0, %s85
      %s103 = sphi 0, %s103
      %s105 = sphi 0, %s103
      %s106 = sphi 0, %s105
      %s120 = sphi 0, %s106
      %s126 = sphi 0, %s128
      %s129 = sphi 0, %s126
      %s130 = sphi 0, %s129
      %s146 = sphi 0, %s130
      %s154 = sphi 0, %s156
      %s157 = sphi 0, %s154
      %s158 = sphi 0, %s157
      %s174 = sphi 0, %s158
    $region4: #{_position_embedding_sine_impl.1} parent=1 // loop_header_branch
      %18 = sbr.rel (%p16) target = $region8
    $region5: #{_position_embedding_sine_impl.1} parent=1 // loop_body
      %s20 = ssub.s32 %s15, 1
      %s21 = ssub.s32 %s15, 2
      %s28 = sadd.s32 1, %s23
      %p29 = scmp.ge.s32.totalorder %s28, 1
      %s30 = scalar_select %p29, 0, %s28
      %s31 = sadd.s32 1, %s22
      %s32 = scalar_select %p29, %s31, %s22
      %p33 = scmp.ge.s32.totalorder %s32, 2
      %s34 = scalar_select %p33, 0, %s32
      %s35 = ssub.s32 %s23, %s30
      %p36 = scmp.eq.s32.totalorder %s35, 0
      %s38 = sadd.s32 %s37, 1
      %s39 = scalar_select %p36, %s37, %s38
      %p42 = pneg %p36
      %p43 = scmp.eq.s32.totalorder %s15, 1
      %p44 = por %p42, %p43
      %p45 = scmp.ne.s32.totalorder %s37, %s40
      %p46 = scmp.eq.s32.totalorder %s15, 0
      %p47 = por %p45, %p46
      %p48 = scmp.ne.s32.totalorder %s37, %s40
      %p49 = scmp.eq.s32.totalorder %s20, 1
      %p50 = por %p48, %p49
      %p51 = scmp.ne.s32.totalorder %s40, %s41
      %p52 = scmp.eq.s32.totalorder %s20, 0
      %p53 = por %p51, %p52
      %p54 = scmp.ne.s32.totalorder %s40, %s41
      %p55 = scmp.eq.s32.totalorder %s21, 1
      %p56 = por %p54, %p55
      %p58 = scmp.ne.s32.totalorder %s41, %s57
      %p59 = scmp.eq.s32.totalorder %s21, 0
      %p60 = por %p58, %p59
      %s62 = sadd.s32 %s61, 1
      %p65 = scmp.eq.s32.totalorder %s15, 1
      %p66 = scmp.ne.s32.totalorder %s61, %s63
      %p67 = scmp.eq.s32.totalorder %s15, 0
      %p68 = por %p66, %p67
      %p69 = scmp.ne.s32.totalorder %s61, %s63
      %p70 = scmp.eq.s32.totalorder %s20, 1
      %p71 = por %p69, %p70
      %p72 = scmp.ne.s32.totalorder %s63, %s64
      %p73 = scmp.eq.s32.totalorder %s20, 0
      %p74 = por %p72, %p73
      %p75 = scmp.ne.s32.totalorder %s63, %s64
      %p76 = scmp.eq.s32.totalorder %s21, 1
      %p77 = por %p75, %p76
      %p79 = scmp.ne.s32.totalorder %s64, %s78
      %p80 = scmp.eq.s32.totalorder %s21, 0
      %p81 = por %p79, %p80
      %s83 = sadd.s32 %s82, 1
      %p86 = scmp.eq.s32.totalorder %s15, 1
      %p87 = scmp.ne.s32.totalorder %s82, %s84
      %p88 = scmp.eq.s32.totalorder %s15, 0
      %p89 = por %p87, %p88
      %p90 = scmp.ne.s32.totalorder %s82, %s84
      %p91 = scmp.eq.s32.totalorder %s20, 1
      %p92 = por %p90, %p91
      %p93 = scmp.ne.s32.totalorder %s84, %s85
      %p94 = scmp.eq.s32.totalorder %s20, 0
      %p95 = por %p93, %p94
      %p96 = scmp.ne.s32.totalorder %s84, %s85
      %p97 = scmp.eq.s32.totalorder %s21, 1
      %p98 = por %p96, %p97
      %p100 = scmp.ne.s32.totalorder %s85, %s99
      %p101 = scmp.eq.s32.totalorder %s21, 0
      %p102 = por %p100, %p101
      %s104 = sadd.s32 %s103, 1
      %p107 = scmp.eq.s32.totalorder %s15, 1
      %p108 = scmp.ne.s32.totalorder %s103, %s105
      %p109 = scmp.eq.s32.totalorder %s15, 0
      %p110 = por %p108, %p109
      %p111 = scmp.ne.s32.totalorder %s103, %s105
      %p112 = scmp.eq.s32.totalorder %s20, 1
      %p113 = por %p111, %p112
      %p114 = scmp.ne.s32.totalorder %s105, %s106
      %p115 = scmp.eq.s32.totalorder %s20, 0
      %p116 = por %p114, %p115
      %p117 = scmp.ne.s32.totalorder %s105, %s106
      %p118 = scmp.eq.s32.totalorder %s21, 1
      %p119 = por %p117, %p118
      %p121 = scmp.ne.s32.totalorder %s106, %s120
      %p122 = scmp.eq.s32.totalorder %s21, 0
      %p123 = por %p121, %p122
      %s124 = ssub.s32 %s22, %s34
      %p125 = scmp.eq.s32.totalorder %s124, 0
      %s127 = sadd.s32 %s126, 1
      %s128 = scalar_select %p125, %s126, %s127
      %p131 = pneg %p125
      %p132 = scmp.eq.s32.totalorder %s15, 1
      %p133 = por %p131, %p132
      %p134 = scmp.ne.s32.totalorder %s126, %s129
      %p135 = scmp.eq.s32.totalorder %s15, 0
      %p136 = por %p134, %p135
      %p137 = scmp.ne.s32.totalorder %s126, %s129
      %p138 = scmp.eq.s32.totalorder %s20, 1
      %p139 = por %p137, %p138
      %p140 = scmp.ne.s32.totalorder %s129, %s130
      %p141 = scmp.eq.s32.totalorder %s20, 0
      %p142 = por %p140, %p141
      %p143 = scmp.ne.s32.totalorder %s129, %s130
      %p144 = scmp.eq.s32.totalorder %s21, 1
      %p145 = por %p143, %p144
      %p147 = scmp.ne.s32.totalorder %s130, %s146
      %p148 = scmp.eq.s32.totalorder %s21, 0
      %p149 = por %p147, %p148
      %s150 = ssub.s32 %s22, %s34
      %s151 = ssub.s32 %s23, %s30
      %s152 = sor.u32 %s150, %s151
      %p153 = scmp.eq.s32.totalorder %s152, 0
      %s155 = sadd.s32 %s154, 1
      %s156 = scalar_select %p153, %s154, %s155
      %p159 = pneg %p153
      %p160 = scmp.eq.s32.totalorder %s15, 1
      %p161 = por %p159, %p160
      %p162 = scmp.ne.s32.totalorder %s154, %s157
      %p163 = scmp.eq.s32.totalorder %s15, 0
      %p164 = por %p162, %p163
      %p165 = scmp.ne.s32.totalorder %s154, %s157
      %p166 = scmp.eq.s32.totalorder %s20, 1
      %p167 = por %p165, %p166
      %p168 = scmp.ne.s32.totalorder %s157, %s158
      %p169 = scmp.eq.s32.totalorder %s20, 0
      %p170 = por %p168, %p169
      %p171 = scmp.ne.s32.totalorder %s157, %s158
      %p172 = scmp.eq.s32.totalorder %s21, 1
      %p173 = por %p171, %p172
      %p175 = scmp.ne.s32.totalorder %s158, %s174
      %p176 = scmp.eq.s32.totalorder %s21, 0
      %p177 = por %p175, %p176
      %p178 = scmp.le.s32.totalorder 1, %s15
      %p179 = scmp.lt.s32.totalorder %s15, 3
      %p180 = pnand %p178, %p179
      %p181 = pneg %p180
      // Predicated region
      $region9: #{_position_embedding_sine_impl.1} parent=5 // pred_check
        _
      $region10: #{_position_embedding_sine_impl.1} parent=5 // pred_check_branch
        %183 = sbr.rel (%p180) target = $region12
      $region11: #{_position_embedding_sine_impl.1} parent=5 // pred_region
        %s184 = ssub.s32 %s15, 1
        // Predicated region
        $region13: #{_position_embedding_sine_impl.1} parent=11 // pred_check
          %p185 = pneg %p53
        $region14: #{_position_embedding_sine_impl.1} parent=11 // pred_check_branch
          %187 = sbr.rel (%p185) target = $region16
        $region15: #{_position_embedding_sine_impl.1} parent=11 // pred_region
          %s188 = smul.u32 2, %s25
          %s190 = ssub.s32 128, 128
          %191 = vsyncadd [#allocation3], %s190
          %s192 = smul.addr %s188, 64
          %s193 = scalar_lea.hbm %s0, %s192
          %s194 = sshll.u32 [#allocation2], 4
          %s195 = int_to_ptr.vmem [resolvable:$true] %s194
          %200 = dma.hbm_to_vmem [thread:$0]  %s193, 128, %s195, [#allocation3], 64, 64, 4
        $region16: #{_position_embedding_sine_impl.1} parent=11 // pred_fallthru
          _
        // Predicated region
        $region17: #{_position_embedding_sine_impl.1} parent=11 // pred_check
          %p201 = pneg %p74
        $region18: #{_position_embedding_sine_impl.1} parent=11 // pred_check_branch
          %203 = sbr.rel (%p201) target = $region20
        $region19: #{_position_embedding_sine_impl.1} parent=11 // pred_region
          _
        $region20: #{_position_embedding_sine_impl.1} parent=11 // pred_fallthru
          _
        // Predicated region
        $region21: #{_position_embedding_sine_impl.1} parent=11 // pred_check
          %p204 = pneg %p95
        $region22: #{_position_embedding_sine_impl.1} parent=11 // pred_check_branch
          %206 = sbr.rel (%p204) target = $region24
        $region23: #{_position_embedding_sine_impl.1} parent=11 // pred_region
          _
        $region24: #{_position_embedding_sine_impl.1} parent=11 // pred_fallthru
          _
        // Predicated region
        $region25: #{_position_embedding_sine_impl.1} parent=11 // pred_check
          %p207 = pneg %p116
        $region26: #{_position_embedding_sine_impl.1} parent=11 // pred_check_branch
          %209 = sbr.rel (%p207) target = $region28
        $region27: #{_position_embedding_sine_impl.1} parent=11 // pred_region
          _
        $region28: #{_position_embedding_sine_impl.1} parent=11 // pred_fallthru
          _
      $region12: #{_position_embedding_sine_impl.1} parent=5 // pred_fallthru
        _
      %p210 = scmp.lt.s32.totalorder %s15, 2
      // Predicated region
      $region29: #{_position_embedding_sine_impl.1} parent=5 // pred_check
        %p211 = pneg %p210
      $region30: #{_position_embedding_sine_impl.1} parent=5 // pred_check_branch
        %213 = sbr.rel (%p211) target = $region32
      $region31: #{_position_embedding_sine_impl.1} parent=5 // pred_region
        // Predicated region
        $region33: #{_position_embedding_sine_impl.1} parent=31 // pred_check
          %p214 = pneg %p136
        $region34: #{_position_embedding_sine_impl.1} parent=31 // pred_check_branch
          %216 = sbr.rel (%p214) target = $region36
        $region35: #{_position_embedding_sine_impl.1} parent=31 // pred_region
          %p217 = scmp.lt.s32.totalorder %s22, 1
          %s218 = scalar_select %p217, %s22, 1
          %s219 = smul.addr %s218, 2
          %s220 = smul.addr %s219, 2
          %s221 = scalar_lea.vmem %s4, %s220
        $region36: #{_position_embedding_sine_impl.1} parent=31 // pred_fallthru
          _
      $region32: #{_position_embedding_sine_impl.1} parent=5 // pred_fallthru
        _
      %p222 = scmp.le.s32.totalorder 1, %s15
      %p223 = scmp.lt.s32.totalorder %s15, 3
      %p224 = pnand %p222, %p223
      %p225 = pneg %p224
      // Predicated region
      $region37: #{_position_embedding_sine_impl.1} parent=5 // pred_check
        _
      $region38: #{_position_embedding_sine_impl.1} parent=5 // pred_check_branch
        %227 = sbr.rel (%p224) target = $region40
      $region39: #{_position_embedding_sine_impl.1} parent=5 // pred_region
        %s228 = ssub.s32 %s15, 1
        // Predicated region
        $region41: #{_position_embedding_sine_impl.1} parent=39 // pred_check
          %p229 = pneg %p53
        $region42: #{_position_embedding_sine_impl.1} parent=39 // pred_check_branch
          %231 = sbr.rel (%p229) target = $region44
        $region43: #{_position_embedding_sine_impl.1} parent=39 // pred_region
          %232 = dma.done [#allocation3], 128
        $region44: #{_position_embedding_sine_impl.1} parent=39 // pred_fallthru
          _
        %p233 = pneg %p53
        %p234 = pneg %p50
        %p235 = pneg %p74
        %p236 = pneg %p71
        %p237 = pneg %p95
        %p238 = pneg %p92
        %p239 = pneg %p116
        %p240 = pneg %p113
        %p241 = scmp.lt.s32.totalorder %s24, 1
        %s242 = scalar_select %p241, %s24, 1
        %s243 = smul.addr %s242, 2
        %s244 = smul.addr %s243, 2
        %s245 = scalar_lea.vmem %s4, %s244
        %p246 = pneg %p142
        %p247 = pneg %p139
        %p248 = pneg %p170
        %p249 = pneg %p167
        %s250 = sand.u32 %s157, 1
        %s251 = scalar_lea.sflag [#allocation4], %s250
        %s252 = sand.u32 %s157, 1
        %s253 = smul.addr %s252, 256
        %s254 = scalar_lea.vmem [#allocation5], %s253
        %s255 = smul.u32 2, %s25
        %p256 = scmp.lt.s32.totalorder %s24, 1
        %s257 = scalar_select %p256, %s24, 1
        %s258 = smul.addr %s257, 2
        %s259 = smul.addr %s258, 2
        %s260 = scalar_lea.vmem %s4, %s259
        %s261 = smul.u32 16, %s25
        %s263 = smul.u32 %s25, 16
        %v264 = vld [vmem:[%s260] sm:$0x3]
        %v265 = vld [vmem:[%s260 + $0x2] sm:$0x3]
        %v266 = vunpack.c.0.s8 %v264
        %v267 = vunpack.c.0.s8 %v265
        %v268 = vcvt.s32.f32 %v266
        %v269 = vcvt.s32.f32 %v267
        %v270 = vsub.f32 1.0, %v268
        %v271 = vsub.f32 1.0, %v269
        %s272 = sshra.s32 %s263, 3
        %s273 = sand.u32 %s263, 7
        %s274 = smul.addr %s272, 2
        %s275 = scalar_lea.vmem %s260, %s274
        %v276 = vld [vmem:[%s275] sm:$0x3]
        %v277 = vld [vmem:[%s275 + $0x2] sm:$0x3]
        %v278 = vunpack.c.0.s8 %v276
        %v279 = vunpack.c.0.s8 %v277
        %v280 = vcvt.s32.f32 %v278
        %v281 = vcvt.s32.f32 %v279
        %v282 = vsub.f32 1.0, %v280
        %v283 = vsub.f32 1.0, %v281
        %v284 = vld [vmem:[#allocation2] sm:$0xf]
        %v285 = vld [vmem:[#allocation2 + $0x4] sm:$0xf]
        %v286 = vpack.c.bf16 %v271, %v270
        %v289 = vunpack.c.l.b16 %v284
        %v290 = vunpack.c.l.b16 %v285
        %v291 = vpack.c.b16 %v290, %v289
        %vm292 = vcmask 130048
        %v294 = vsel %vm292, %v291, 0
        %296 = vmatprep.subr.bf16.mxu0 0
        %297 = vmatpush1.bf16.msra.mxu0 %v286
        %298 = vmatprep.subr.bf16.mxu0 0
        %299 = vmatpush1.bf16.msra.mxu0 0
        %300 = vmatprep.subr.bf16.mxu0 0
        %301 = vmatpush1.bf16.msra.mxu0 0
        %302 = vmatprep.subr.bf16.mxu0 0
        %303 = vmatpush1.bf16.msra.mxu0 0
        %304 = vmatprep.subr.bf16.mxu0 0
        %305 = vmatpush1.bf16.msra.mxu0 0
        %306 = vmatprep.subr.bf16.mxu0 0
        %307 = vmatpush1.bf16.msra.mxu0 0
        %308 = vmatprep.subr.bf16.mxu0 0
        %309 = vmatpush1.bf16.msra.mxu0 0
        %310 = vmatprep.subr.bf16.mxu0 0
        %311 = vmatpush1.bf16.msra.mxu0 0
        %312 = vmatprep.subr.bf16.mxu0 0
        %313 = vmatpush1.bf16.msra.mxu0 0
        %314 = vmatprep.subr.bf16.mxu0 0
        %315 = vmatpush1.bf16.msra.mxu0 0
        %316 = vmatprep.subr.bf16.mxu0 0
        %317 = vmatpush1.bf16.msra.mxu0 0
        %318 = vmatprep.subr.bf16.mxu0 0
        %319 = vmatpush1.bf16.msra.mxu0 0
        %320 = vmatprep.subr.bf16.mxu0 0
        %321 = vmatpush1.bf16.msra.mxu0 0
        %322 = vmatprep.subr.bf16.mxu0 0
        %323 = vmatpush1.bf16.msra.mxu0 0
        %324 = vmatprep.subr.bf16.mxu0 0
        %325 = vmatpush1.bf16.msra.mxu0 0
        %326 = vmatprep.subr.bf16.mxu0 0
        %327 = vmatpush1.bf16.msra.mxu0 0
        %328 = vmatprep.mubr.bf16.mxu0 0
        %329 = vmatmul.mubr.bf16.gmra.mrb[0].mxu0 %v294
        %v330 = vpop.f32.mrb[0].mxu0
        %v331 = vadd.f32 0.0, %v330
        %v332 = vpop.f32.mrb[0].mxu0
        %v333 = vpop.f32.mrb[0].mxu0
        %v334 = vadd.f32 0.0, %v333
        %v335 = vpop.f32.mrb[0].mxu0
        %336 = vdwg.mxu0
        %v337 = vpack.c.bf16 %v283, %v282
        %v338 = vld [vmem:[%s1] sm:$0xf]
        %v339 = vld [vmem:[%s1 + $0x4] sm:$0xf]
        %v342 = vunpack.c.l.b16 %v338
        %v343 = vunpack.c.l.b16 %v339
        %v344 = vpack.c.b16 %v343, %v342
        %v347 = vsel %vm292, %v337, 0
        %349 = vmatprep.subr.bf16.mxu0 0
        %350 = vmatpush1.bf16.msra.mxu0 %v344
        %351 = vmatprep.subr.bf16.mxu0 0
        %352 = vmatpush1.bf16.msra.mxu0 0
        %353 = vmatprep.subr.bf16.mxu0 0
        %354 = vmatpush1.bf16.msra.mxu0 0
        %355 = vmatprep.subr.bf16.mxu0 0
        %356 = vmatpush1.bf16.msra.mxu0 0
        %357 = vmatprep.subr.bf16.mxu0 0
        %358 = vmatpush1.bf16.msra.mxu0 0
        %359 = vmatprep.subr.bf16.mxu0 0
        %360 = vmatpush1.bf16.msra.mxu0 0
        %361 = vmatprep.subr.bf16.mxu0 0
        %362 = vmatpush1.bf16.msra.mxu0 0
        %363 = vmatprep.subr.bf16.mxu0 0
        %364 = vmatpush1.bf16.msra.mxu0 0
        %365 = vmatprep.subr.bf16.mxu0 0
        %366 = vmatpush1.bf16.msra.mxu0 0
        %367 = vmatprep.subr.bf16.mxu0 0
        %368 = vmatpush1.bf16.msra.mxu0 0
        %369 = vmatprep.subr.bf16.mxu0 0
        %370 = vmatpush1.bf16.msra.mxu0 0
        %371 = vmatprep.subr.bf16.mxu0 0
        %372 = vmatpush1.bf16.msra.mxu0 0
        %373 = vmatprep.subr.bf16.mxu0 0
        %374 = vmatpush1.bf16.msra.mxu0 0
        %375 = vmatprep.subr.bf16.mxu0 0
        %376 = vmatpush1.bf16.msra.mxu0 0
        %377 = vmatprep.subr.bf16.mxu0 0
        %378 = vmatpush1.bf16.msra.mxu0 0
        %379 = vmatprep.subr.bf16.mxu0 0
        %380 = vmatpush1.bf16.msra.mxu0 0
        %381 = vmatprep.mubr.bf16.mxu0 0
        %382 = vmatmul.mubr.bf16.gmra.mrb[0].mxu0 %v347
        %v383 = vpop.f32.mrb[0].mxu0
        %v384 = vadd.f32 0.0, %v383
        %v385 = vpop.f32.mrb[0].mxu0
        %v386 = vpop.f32.mrb[0].mxu0
        %v387 = vadd.f32 0.0, %v386
        %v388 = vpop.f32.mrb[0].mxu0
        %389 = vdwg.mxu0
        %v390 = vld [vmem:[%s2] sm:$0x1]
        %v391 = vld [vmem:[%s3] sm:$0x1]
        %v392 = vlaneseq
        %v393 = vshrl.u32 %v392, 7
        %v394 = vsub.s32 0, %v393
        %v395 = vrot.slane %v331, %v394
        %397 = vbcast.lane.b32.xlu0 %v395, 256
        %v398 = vpop.permute.xlu0 %397
        %s400 = sor.u32 256, 8
        %401 = vbcast.lane.b32.xlu0 %v395, %s400
        %v402 = vpop.permute.xlu0 %401
        %v403 = vlaneseq
        %v404 = vshrl.u32 %v403, 7
        %v405 = vsub.s32 1, %v404
        %v406 = vrot.slane %v331, %v405
        %408 = vbcast.lane.b32.xlu0 %v406, 256
        %v409 = vpop.permute.xlu0 %408
        %s411 = sor.u32 256, 8
        %412 = vbcast.lane.b32.xlu0 %v406, %s411
        %v413 = vpop.permute.xlu0 %412
        %v414 = vlaneseq
        %v415 = vshrl.u32 %v414, 7
        %v416 = vsub.s32 2, %v415
        %v417 = vrot.slane %v331, %v416
        %419 = vbcast.lane.b32.xlu0 %v417, 256
        %v420 = vpop.permute.xlu0 %419
        %s422 = sor.u32 256, 8
        %423 = vbcast.lane.b32.xlu0 %v417, %s422
        %v424 = vpop.permute.xlu0 %423
        %v425 = vlaneseq
        %v426 = vshrl.u32 %v425, 7
        %v427 = vsub.s32 3, %v426
        %v428 = vrot.slane %v331, %v427
        %430 = vbcast.lane.b32.xlu0 %v428, 256
        %v431 = vpop.permute.xlu0 %430
        %s433 = sor.u32 256, 8
        %434 = vbcast.lane.b32.xlu0 %v428, %s433
        %v435 = vpop.permute.xlu0 %434
        %v436 = vlaneseq
        %v437 = vshrl.u32 %v436, 7
        %v438 = vsub.s32 4, %v437
        %v439 = vrot.slane %v331, %v438
        %441 = vbcast.lane.b32.xlu0 %v439, 256
        %v442 = vpop.permute.xlu0 %441
        %s444 = sor.u32 256, 8
        %445 = vbcast.lane.b32.xlu0 %v439, %s444
        %v446 = vpop.permute.xlu0 %445
        %v447 = vlaneseq
        %v448 = vshrl.u32 %v447, 7
        %v449 = vsub.s32 5, %v448
        %v450 = vrot.slane %v331, %v449
        %452 = vbcast.lane.b32.xlu0 %v450, 256
        %v453 = vpop.permute.xlu0 %452
        %s455 = sor.u32 256, 8
        %456 = vbcast.lane.b32.xlu0 %v450, %s455
        %v457 = vpop.permute.xlu0 %456
        %v458 = vlaneseq
        %v459 = vshrl.u32 %v458, 7
        %v460 = vsub.s32 6, %v459
        %v461 = vrot.slane %v331, %v460
        %463 = vbcast.lane.b32.xlu0 %v461, 256
        %v464 = vpop.permute.xlu0 %463
        %s466 = sor.u32 256, 8
        %467 = vbcast.lane.b32.xlu0 %v461, %s466
        %v468 = vpop.permute.xlu0 %467
        %v469 = vlaneseq
        %v470 = vshrl.u32 %v469, 7
        %v471 = vsub.s32 7, %v470
        %v472 = vrot.slane %v331, %v471
        %474 = vbcast.lane.b32.xlu0 %v472, 256
        %v475 = vpop.permute.xlu0 %474
        %s477 = sor.u32 256, 8
        %478 = vbcast.lane.b32.xlu0 %v472, %s477
        %v479 = vpop.permute.xlu0 %478
        %v480 = vlaneseq
        %v481 = vshrl.u32 %v480, 7
        %v482 = vsub.s32 0, %v481
        %v483 = vrot.slane %v334, %v482
        %485 = vbcast.lane.b32.xlu0 %v483, 256
        %v486 = vpop.permute.xlu0 %485
        %s488 = sor.u32 256, 8
        %489 = vbcast.lane.b32.xlu0 %v483, %s488
        %v490 = vpop.permute.xlu0 %489
        %v491 = vlaneseq
        %v492 = vshrl.u32 %v491, 7
        %v493 = vsub.s32 1, %v492
        %v494 = vrot.slane %v334, %v493
        %496 = vbcast.lane.b32.xlu0 %v494, 256
        %v497 = vpop.permute.xlu0 %496
        %s499 = sor.u32 256, 8
        %500 = vbcast.lane.b32.xlu0 %v494, %s499
        %v501 = vpop.permute.xlu0 %500
        %v502 = vlaneseq
        %v503 = vshrl.u32 %v502, 7
        %v504 = vsub.s32 2, %v503
        %v505 = vrot.slane %v334, %v504
        %507 = vbcast.lane.b32.xlu0 %v505, 256
        %v508 = vpop.permute.xlu0 %507
        %s510 = sor.u32 256, 8
        %511 = vbcast.lane.b32.xlu0 %v505, %s510
        %v512 = vpop.permute.xlu0 %511
        %v513 = vlaneseq
        %v514 = vshrl.u32 %v513, 7
        %v515 = vsub.s32 3, %v514
        %v516 = vrot.slane %v334, %v515
        %518 = vbcast.lane.b32.xlu0 %v516, 256
        %v519 = vpop.permute.xlu0 %518
        %s521 = sor.u32 256, 8
        %522 = vbcast.lane.b32.xlu0 %v516, %s521
        %v523 = vpop.permute.xlu0 %522
        %v524 = vlaneseq
        %v525 = vshrl.u32 %v524, 7
        %v526 = vsub.s32 4, %v525
        %v527 = vrot.slane %v334, %v526
        %529 = vbcast.lane.b32.xlu0 %v527, 256
        %v530 = vpop.permute.xlu0 %529
        %s532 = sor.u32 256, 8
        %533 = vbcast.lane.b32.xlu0 %v527, %s532
        %v534 = vpop.permute.xlu0 %533
        %v535 = vlaneseq
        %v536 = vshrl.u32 %v535, 7
        %v537 = vsub.s32 5, %v536
        %v538 = vrot.slane %v334, %v537
        %540 = vbcast.lane.b32.xlu0 %v538, 256
        %v541 = vpop.permute.xlu0 %540
        %s543 = sor.u32 256, 8
        %544 = vbcast.lane.b32.xlu0 %v538, %s543
        %v545 = vpop.permute.xlu0 %544
        %v546 = vlaneseq
        %v547 = vshrl.u32 %v546, 7
        %v548 = vsub.s32 6, %v547
        %v549 = vrot.slane %v334, %v548
        %551 = vbcast.lane.b32.xlu0 %v549, 256
        %v552 = vpop.permute.xlu0 %551
        %s554 = sor.u32 256, 8
        %555 = vbcast.lane.b32.xlu0 %v549, %s554
        %v556 = vpop.permute.xlu0 %555
        %v557 = vlaneseq
        %v558 = vshrl.u32 %v557, 7
        %v559 = vsub.s32 7, %v558
        %v560 = vrot.slane %v334, %v559
        %562 = vbcast.lane.b32.xlu0 %v560, 256
        %v563 = vpop.permute.xlu0 %562
        %s565 = sor.u32 256, 8
        %566 = vbcast.lane.b32.xlu0 %v560, %s565
        %v567 = vpop.permute.xlu0 %566
        %v569 = vlaneseq
        %v570 = vshrl.u32 %v569, 7
        %v571 = vsub.s32 0, %v570
        %v572 = vrot.slane %v390, %v571
        %v574 = vmul.f32 %v398, %v572
        %v575 = vmul.f32 %v402, %v572
        %v576 = vmul.f32 %v409, %v572
        %v577 = vmul.f32 %v413, %v572
        %v578 = vmul.f32 %v420, %v572
        %v579 = vmul.f32 %v424, %v572
        %v580 = vmul.f32 %v431, %v572
        %v581 = vmul.f32 %v435, %v572
        %v582 = vmul.f32 %v442, %v572
        %v583 = vmul.f32 %v446, %v572
        %v584 = vmul.f32 %v453, %v572
        %v585 = vmul.f32 %v457, %v572
        %v586 = vmul.f32 %v464, %v572
        %v587 = vmul.f32 %v468, %v572
        %v588 = vmul.f32 %v475, %v572
        %v589 = vmul.f32 %v479, %v572
        %v590 = vmul.f32 %v486, %v572
        %v591 = vmul.f32 %v490, %v572
        %v592 = vmul.f32 %v497, %v572
        %v593 = vmul.f32 %v501, %v572
        %v594 = vmul.f32 %v508, %v572
        %v595 = vmul.f32 %v512, %v572
        %v596 = vmul.f32 %v519, %v572
        %v597 = vmul.f32 %v523, %v572
        %v598 = vmul.f32 %v530, %v572
        %v599 = vmul.f32 %v534, %v572
        %v600 = vmul.f32 %v541, %v572
        %v601 = vmul.f32 %v545, %v572
        %v602 = vmul.f32 %v552, %v572
        %v603 = vmul.f32 %v556, %v572
        %v604 = vmul.f32 %v563, %v572
        %v605 = vmul.f32 %v567, %v572
        %v607 = vlaneseq
        %v608 = vshrl.u32 %v607, 7
        %v609 = vsub.s32 0, %v608
        %v610 = vrot.slane %v391, %v609
        %v612 = vadd.f32 %v574, %v610
        %v613 = vadd.f32 %v575, %v610
        %v614 = vadd.f32 %v576, %v610
        %v615 = vadd.f32 %v577, %v610
        %v616 = vadd.f32 %v578, %v610
        %v617 = vadd.f32 %v579, %v610
        %v618 = vadd.f32 %v580, %v610
        %v619 = vadd.f32 %v581, %v610
        %v620 = vadd.f32 %v582, %v610
        %v621 = vadd.f32 %v583, %v610
        %v622 = vadd.f32 %v584, %v610
        %v623 = vadd.f32 %v585, %v610
        %v624 = vadd.f32 %v586, %v610
        %v625 = vadd.f32 %v587, %v610
        %v626 = vadd.f32 %v588, %v610
        %v627 = vadd.f32 %v589, %v610
        %v628 = vadd.f32 %v590, %v610
        %v629 = vadd.f32 %v591, %v610
        %v630 = vadd.f32 %v592, %v610
        %v631 = vadd.f32 %v593, %v610
        %v632 = vadd.f32 %v594, %v610
        %v633 = vadd.f32 %v595, %v610
        %v634 = vadd.f32 %v596, %v610
        %v635 = vadd.f32 %v597, %v610
        %v636 = vadd.f32 %v598, %v610
        %v637 = vadd.f32 %v599, %v610
        %v638 = vadd.f32 %v600, %v610
        %v639 = vadd.f32 %v601, %v610
        %v640 = vadd.f32 %v602, %v610
        %v641 = vadd.f32 %v603, %v610
        %v642 = vadd.f32 %v604, %v610
        %v643 = vadd.f32 %v605, %v610
        %v644 = vlaneseq
        %v645 = vshrl.u32 %v644, 7
        %v646 = vsub.s32 0, %v645
        %v647 = vrot.slane %v384, %v646
        %649 = vbcast.lane.b32.xlu0 %v647, 256
        %v650 = vpop.permute.xlu0 %649
        %s652 = sor.u32 256, 8
        %653 = vbcast.lane.b32.xlu0 %v647, %s652
        %v654 = vpop.permute.xlu0 %653
        %v655 = vlaneseq
        %v656 = vshrl.u32 %v655, 7
        %v657 = vsub.s32 1, %v656
        %v658 = vrot.slane %v384, %v657
        %660 = vbcast.lane.b32.xlu0 %v658, 256
        %v661 = vpop.permute.xlu0 %660
        %s663 = sor.u32 256, 8
        %664 = vbcast.lane.b32.xlu0 %v658, %s663
        %v665 = vpop.permute.xlu0 %664
        %v666 = vlaneseq
        %v667 = vshrl.u32 %v666, 7
        %v668 = vsub.s32 2, %v667
        %v669 = vrot.slane %v384, %v668
        %671 = vbcast.lane.b32.xlu0 %v669, 256
        %v672 = vpop.permute.xlu0 %671
        %s674 = sor.u32 256, 8
        %675 = vbcast.lane.b32.xlu0 %v669, %s674
        %v676 = vpop.permute.xlu0 %675
        %v677 = vlaneseq
        %v678 = vshrl.u32 %v677, 7
        %v679 = vsub.s32 3, %v678
        %v680 = vrot.slane %v384, %v679
        %682 = vbcast.lane.b32.xlu0 %v680, 256
        %v683 = vpop.permute.xlu0 %682
        %s685 = sor.u32 256, 8
        %686 = vbcast.lane.b32.xlu0 %v680, %s685
        %v687 = vpop.permute.xlu0 %686
        %v688 = vlaneseq
        %v689 = vshrl.u32 %v688, 7
        %v690 = vsub.s32 4, %v689
        %v691 = vrot.slane %v384, %v690
        %693 = vbcast.lane.b32.xlu0 %v691, 256
        %v694 = vpop.permute.xlu0 %693
        %s696 = sor.u32 256, 8
        %697 = vbcast.lane.b32.xlu0 %v691, %s696
        %v698 = vpop.permute.xlu0 %697
        %v699 = vlaneseq
        %v700 = vshrl.u32 %v699, 7
        %v701 = vsub.s32 5, %v700
        %v702 = vrot.slane %v384, %v701
        %704 = vbcast.lane.b32.xlu0 %v702, 256
        %v705 = vpop.permute.xlu0 %704
        %s707 = sor.u32 256, 8
        %708 = vbcast.lane.b32.xlu0 %v702, %s707
        %v709 = vpop.permute.xlu0 %708
        %v710 = vlaneseq
        %v711 = vshrl.u32 %v710, 7
        %v712 = vsub.s32 6, %v711
        %v713 = vrot.slane %v384, %v712
        %715 = vbcast.lane.b32.xlu0 %v713, 256
        %v716 = vpop.permute.xlu0 %715
        %s718 = sor.u32 256, 8
        %719 = vbcast.lane.b32.xlu0 %v713, %s718
        %v720 = vpop.permute.xlu0 %719
        %v721 = vlaneseq
        %v722 = vshrl.u32 %v721, 7
        %v723 = vsub.s32 7, %v722
        %v724 = vrot.slane %v384, %v723
        %726 = vbcast.lane.b32.xlu0 %v724, 256
        %v727 = vpop.permute.xlu0 %726
        %s729 = sor.u32 256, 8
        %730 = vbcast.lane.b32.xlu0 %v724, %s729
        %v731 = vpop.permute.xlu0 %730
        %v732 = vlaneseq
        %v733 = vshrl.u32 %v732, 7
        %v734 = vsub.s32 0, %v733
        %v735 = vrot.slane %v387, %v734
        %737 = vbcast.lane.b32.xlu0 %v735, 256
        %v738 = vpop.permute.xlu0 %737
        %s740 = sor.u32 256, 8
        %741 = vbcast.lane.b32.xlu0 %v735, %s740
        %v742 = vpop.permute.xlu0 %741
        %v743 = vlaneseq
        %v744 = vshrl.u32 %v743, 7
        %v745 = vsub.s32 1, %v744
        %v746 = vrot.slane %v387, %v745
        %748 = vbcast.lane.b32.xlu0 %v746, 256
        %v749 = vpop.permute.xlu0 %748
        %s751 = sor.u32 256, 8
        %752 = vbcast.lane.b32.xlu0 %v746, %s751
        %v753 = vpop.permute.xlu0 %752
        %v754 = vlaneseq
        %v755 = vshrl.u32 %v754, 7
        %v756 = vsub.s32 2, %v755
        %v757 = vrot.slane %v387, %v756
        %759 = vbcast.lane.b32.xlu0 %v757, 256
        %v760 = vpop.permute.xlu0 %759
        %s762 = sor.u32 256, 8
        %763 = vbcast.lane.b32.xlu0 %v757, %s762
        %v764 = vpop.permute.xlu0 %763
        %v765 = vlaneseq
        %v766 = vshrl.u32 %v765, 7
        %v767 = vsub.s32 3, %v766
        %v768 = vrot.slane %v387, %v767
        %770 = vbcast.lane.b32.xlu0 %v768, 256
        %v771 = vpop.permute.xlu0 %770
        %s773 = sor.u32 256, 8
        %774 = vbcast.lane.b32.xlu0 %v768, %s773
        %v775 = vpop.permute.xlu0 %774
        %v776 = vlaneseq
        %v777 = vshrl.u32 %v776, 7
        %v778 = vsub.s32 4, %v777
        %v779 = vrot.slane %v387, %v778
        %781 = vbcast.lane.b32.xlu0 %v779, 256
        %v782 = vpop.permute.xlu0 %781
        %s784 = sor.u32 256, 8
        %785 = vbcast.lane.b32.xlu0 %v779, %s784
        %v786 = vpop.permute.xlu0 %785
        %v787 = vlaneseq
        %v788 = vshrl.u32 %v787, 7
        %v789 = vsub.s32 5, %v788
        %v790 = vrot.slane %v387, %v789
        %792 = vbcast.lane.b32.xlu0 %v790, 256
        %v793 = vpop.permute.xlu0 %792
        %s795 = sor.u32 256, 8
        %796 = vbcast.lane.b32.xlu0 %v790, %s795
        %v797 = vpop.permute.xlu0 %796
        %v798 = vlaneseq
        %v799 = vshrl.u32 %v798, 7
        %v800 = vsub.s32 6, %v799
        %v801 = vrot.slane %v387, %v800
        %803 = vbcast.lane.b32.xlu0 %v801, 256
        %v804 = vpop.permute.xlu0 %803
        %s806 = sor.u32 256, 8
        %807 = vbcast.lane.b32.xlu0 %v801, %s806
        %v808 = vpop.permute.xlu0 %807
        %v809 = vlaneseq
        %v810 = vshrl.u32 %v809, 7
        %v811 = vsub.s32 7, %v810
        %v812 = vrot.slane %v387, %v811
        %814 = vbcast.lane.b32.xlu0 %v812, 256
        %v815 = vpop.permute.xlu0 %814
        %s817 = sor.u32 256, 8
        %818 = vbcast.lane.b32.xlu0 %v812, %s817
        %v819 = vpop.permute.xlu0 %818
        %v820 = vmul.f32 %v650, %v572
        %v821 = vmul.f32 %v654, %v572
        %v822 = vmul.f32 %v661, %v572
        %v823 = vmul.f32 %v665, %v572
        %v824 = vmul.f32 %v672, %v572
        %v825 = vmul.f32 %v676, %v572
        %v826 = vmul.f32 %v683, %v572
        %v827 = vmul.f32 %v687, %v572
        %v828 = vmul.f32 %v694, %v572
        %v829 = vmul.f32 %v698, %v572
        %v830 = vmul.f32 %v705, %v572
        %v831 = vmul.f32 %v709, %v572
        %v832 = vmul.f32 %v716, %v572
        %v833 = vmul.f32 %v720, %v572
        %v834 = vmul.f32 %v727, %v572
        %v835 = vmul.f32 %v731, %v572
        %v836 = vmul.f32 %v738, %v572
        %v837 = vmul.f32 %v742, %v572
        %v838 = vmul.f32 %v749, %v572
        %v839 = vmul.f32 %v753, %v572
        %v840 = vmul.f32 %v760, %v572
        %v841 = vmul.f32 %v764, %v572
        %v842 = vmul.f32 %v771, %v572
        %v843 = vmul.f32 %v775, %v572
        %v844 = vmul.f32 %v782, %v572
        %v845 = vmul.f32 %v786, %v572
        %v846 = vmul.f32 %v793, %v572
        %v847 = vmul.f32 %v797, %v572
        %v848 = vmul.f32 %v804, %v572
        %v849 = vmul.f32 %v808, %v572
        %v850 = vmul.f32 %v815, %v572
        %v851 = vmul.f32 %v819, %v572
        %v852 = vadd.f32 %v820, %v610
        %v853 = vadd.f32 %v821, %v610
        %v854 = vadd.f32 %v822, %v610
        %v855 = vadd.f32 %v823, %v610
        %v856 = vadd.f32 %v824, %v610
        %v857 = vadd.f32 %v825, %v610
        %v858 = vadd.f32 %v826, %v610
        %v859 = vadd.f32 %v827, %v610
        %v860 = vadd.f32 %v828, %v610
        %v861 = vadd.f32 %v829, %v610
        %v862 = vadd.f32 %v830, %v610
        %v863 = vadd.f32 %v831, %v610
        %v864 = vadd.f32 %v832, %v610
        %v865 = vadd.f32 %v833, %v610
        %v866 = vadd.f32 %v834, %v610
        %v867 = vadd.f32 %v835, %v610
        %v868 = vadd.f32 %v836, %v610
        %v869 = vadd.f32 %v837, %v610
        %v870 = vadd.f32 %v838, %v610
        %v871 = vadd.f32 %v839, %v610
        %v872 = vadd.f32 %v840, %v610
        %v873 = vadd.f32 %v841, %v610
        %v874 = vadd.f32 %v842, %v610
        %v875 = vadd.f32 %v843, %v610
        %v876 = vadd.f32 %v844, %v610
        %v877 = vadd.f32 %v845, %v610
        %v878 = vadd.f32 %v846, %v610
        %v879 = vadd.f32 %v847, %v610
        %v880 = vadd.f32 %v848, %v610
        %v881 = vadd.f32 %v849, %v610
        %v882 = vadd.f32 %v850, %v610
        %v883 = vadd.f32 %v851, %v610
        %916 = vrot.lane.b32.xlu0 %v852, 64
        %v917 = vpop.permute.xlu0 %916
        %918 = vrot.lane.b32.xlu0 %v853, 64
        %v919 = vpop.permute.xlu0 %918
        %920 = vrot.lane.b32.xlu0 %v854, 64
        %v921 = vpop.permute.xlu0 %920
        %922 = vrot.lane.b32.xlu0 %v855, 64
        %v923 = vpop.permute.xlu0 %922
        %924 = vrot.lane.b32.xlu0 %v856, 64
        %v925 = vpop.permute.xlu0 %924
        %926 = vrot.lane.b32.xlu0 %v857, 64
        %v927 = vpop.permute.xlu0 %926
        %928 = vrot.lane.b32.xlu0 %v858, 64
        %v929 = vpop.permute.xlu0 %928
        %930 = vrot.lane.b32.xlu0 %v859, 64
        %v931 = vpop.permute.xlu0 %930
        %932 = vrot.lane.b32.xlu0 %v860, 64
        %v933 = vpop.permute.xlu0 %932
        %934 = vrot.lane.b32.xlu0 %v861, 64
        %v935 = vpop.permute.xlu0 %934
        %936 = vrot.lane.b32.xlu0 %v862, 64
        %v937 = vpop.permute.xlu0 %936
        %938 = vrot.lane.b32.xlu0 %v863, 64
        %v939 = vpop.permute.xlu0 %938
        %940 = vrot.lane.b32.xlu0 %v864, 64
        %v941 = vpop.permute.xlu0 %940
        %942 = vrot.lane.b32.xlu0 %v865, 64
        %v943 = vpop.permute.xlu0 %942
        %944 = vrot.lane.b32.xlu0 %v866, 64
        %v945 = vpop.permute.xlu0 %944
        %946 = vrot.lane.b32.xlu0 %v867, 64
        %v947 = vpop.permute.xlu0 %946
        %948 = vrot.lane.b32.xlu0 %v868, 64
        %v949 = vpop.permute.xlu0 %948
        %950 = vrot.lane.b32.xlu0 %v869, 64
        %v951 = vpop.permute.xlu0 %950
        %952 = vrot.lane.b32.xlu0 %v870, 64
        %v953 = vpop.permute.xlu0 %952
        %954 = vrot.lane.b32.xlu0 %v871, 64
        %v955 = vpop.permute.xlu0 %954
        %956 = vrot.lane.b32.xlu0 %v872, 64
        %v957 = vpop.permute.xlu0 %956
        %958 = vrot.lane.b32.xlu0 %v873, 64
        %v959 = vpop.permute.xlu0 %958
        %960 = vrot.lane.b32.xlu0 %v874, 64
        %v961 = vpop.permute.xlu0 %960
        %962 = vrot.lane.b32.xlu0 %v875, 64
        %v963 = vpop.permute.xlu0 %962
        %964 = vrot.lane.b32.xlu0 %v876, 64
        %v965 = vpop.permute.xlu0 %964
        %966 = vrot.lane.b32.xlu0 %v877, 64
        %v967 = vpop.permute.xlu0 %966
        %968 = vrot.lane.b32.xlu0 %v878, 64
        %v969 = vpop.permute.xlu0 %968
        %970 = vrot.lane.b32.xlu0 %v879, 64
        %v971 = vpop.permute.xlu0 %970
        %972 = vrot.lane.b32.xlu0 %v880, 64
        %v973 = vpop.permute.xlu0 %972
        %974 = vrot.lane.b32.xlu0 %v881, 64
        %v975 = vpop.permute.xlu0 %974
        %976 = vrot.lane.b32.xlu0 %v882, 64
        %v977 = vpop.permute.xlu0 %976
        %978 = vrot.lane.b32.xlu0 %v883, 64
        %v979 = vpop.permute.xlu0 %978
        %vm1012 = vcmask 523264
        %v1013 = vsel %vm1012, %v612, %v917
        %v1014 = vsel %vm1012, %v613, %v919
        %v1015 = vsel %vm1012, %v614, %v921
        %v1016 = vsel %vm1012, %v615, %v923
        %v1017 = vsel %vm1012, %v616, %v925
        %v1018 = vsel %vm1012, %v617, %v927
        %v1019 = vsel %vm1012, %v618, %v929
        %v1020 = vsel %vm1012, %v619, %v931
        %v1021 = vsel %vm1012, %v620, %v933
        %v1022 = vsel %vm1012, %v621, %v935
        %v1023 = vsel %vm1012, %v622, %v937
        %v1024 = vsel %vm1012, %v623, %v939
        %v1025 = vsel %vm1012, %v624, %v941
        %v1026 = vsel %vm1012, %v625, %v943
        %v1027 = vsel %vm1012, %v626, %v945
        %v1028 = vsel %vm1012, %v627, %v947
        %v1029 = vsel %vm1012, %v628, %v949
        %v1030 = vsel %vm1012, %v629, %v951
        %v1031 = vsel %vm1012, %v630, %v953
        %v1032 = vsel %vm1012, %v631, %v955
        %v1033 = vsel %vm1012, %v632, %v957
        %v1034 = vsel %vm1012, %v633, %v959
        %v1035 = vsel %vm1012, %v634, %v961
        %v1036 = vsel %vm1012, %v635, %v963
        %v1037 = vsel %vm1012, %v636, %v965
        %v1038 = vsel %vm1012, %v637, %v967
        %v1039 = vsel %vm1012, %v638, %v969
        %v1040 = vsel %vm1012, %v639, %v971
        %v1041 = vsel %vm1012, %v640, %v973
        %v1042 = vsel %vm1012, %v641, %v975
        %v1043 = vsel %vm1012, %v642, %v977
        %v1044 = vsel %vm1012, %v643, %v979
        %v1045 = vand.u32 2147483647, %v1013
        %vm1046 = vcmp.le.f32.partialorder %v1045, 0.7853982
        %vm1047 = vcmp.lt.s32.totalorder %v1013, 0
        %v1048 = vand.u32 %v1013, 2139095040
        %v1049 = vshrl.u32 %v1048, 23
        %v1050 = vsub.s32 %v1049, 127
        %v1051 = vand.u32 2147483647, %v1013
        %v1052 = vand.u32 %v1051, 8388607
        %v1053 = vor.u32 %v1052, 8388608
        %v1054 = vsub.s32 0, %v1053
        %v1055 = vadd.s32 %v1050, 1
        %vm1056 = vcmp.gt.s32.totalorder %v1055, 0
        %v1057 = vsel %vm1056, %v1055, 0
        %v1058 = vshrl.u32 %v1057, 5
        %v1059 = vand.u32 %v1057, 31
        %v1060 = vsub.s32 32, %v1059
        %v1061 = vshrl.u32 683565275, %v1060
        %v1062 = vshll.u32 683565275, %v1059
        %v1063 = vshrl.u32 2475754826, %v1060
        %v1064 = vor.u32 %v1062, %v1063
        %v1065 = vshll.u32 2475754826, %v1059
        %v1066 = vshrl.u32 2131351028, %v1060
        %v1067 = vor.u32 %v1065, %v1066
        %v1068 = vshll.u32 2131351028, %v1059
        %v1069 = vshrl.u32 2102212464, %v1060
        %v1070 = vor.u32 %v1068, %v1069
        %v1071 = vshll.u32 2102212464, %v1059
        %v1072 = vshrl.u32 920167782, %v1060
        %v1073 = vor.u32 %v1071, %v1072
        %v1074 = vshll.u32 920167782, %v1059
        %v1075 = vshrl.u32 1326507024, %v1060
        %v1076 = vor.u32 %v1074, %v1075
        %vm1077 = vcmp.lt.s32.totalorder %v1058, 1
        %vm1078 = vcmp.lt.s32.totalorder %v1058, 2
        %vm1079 = vcmp.lt.s32.totalorder %v1058, 3
        %vm1080 = vcmp.lt.s32.totalorder %v1058, 4
        %v1081 = vsel %vm1077, %v1061, %v1064
        %v1082 = vsel %vm1080, %v1070, 2102212464
        %v1083 = vsel %vm1079, %v1067, %v1082
        %v1084 = vsel %vm1078, %v1081, %v1083
        %v1085 = vsel %vm1077, %v1064, %v1067
        %v1086 = vsel %vm1080, %v1073, 920167782
        %v1087 = vsel %vm1079, %v1070, %v1086
        %v1088 = vsel %vm1078, %v1085, %v1087
        %v1089 = vsel %vm1077, %v1067, %v1070
        %v1090 = vsel %vm1080, %v1076, 1326507024
        %v1091 = vsel %vm1079, %v1073, %v1090
        %v1092 = vsel %vm1078, %v1089, %v1091
        %v1093 = vshll.u32 %v1053, 8
        %v1094 = vmul.u32.u64.compose %v1093, %v1092
        %v1095 = vextract.low.u32 %v1094
        %v1096 = vextract.high.u32 %v1094
        %v1097 = vmul.u32.u64.compose %v1093, %v1088
        %v1098 = vextract.low.u32 %v1097
        %v1099 = vextract.high.u32 %v1097
        %v1100 = vmul.u32 %v1093, %v1084
        %v1101 = vadd.s32 %v1096, %v1098
        %vm1102 = vc.u32 %v1096, %v1098
        %v1103 = vadd.s32 %v1099, 1
        %v1104 = vsel %vm1102, %v1103, %v1099
        %v1105 = vadd.s32 %v1100, %v1104
        %v1106 = vadd.s32 %v1105, 536870912
        %v1107 = vshrl.u32 %v1106, 30
        %v1108 = vshll.u32 %v1107, 30
        %v1109 = vsub.s32 %v1105, %v1108
        %vm1110 = vcmp.lt.s32.totalorder %v1109, 0
        %v1111 = vsub.s32 0, %v1109
        %v1112 = vsel %vm1110, %v1111, %v1109
        %v1113 = vclz %v1112
        %v1114 = vsub.s32 %v1113, 2
        %vm1115 = vcmp.gt.s32.totalorder 0, %v1114
        %v1116 = vsel %vm1115, 0, %v1114
        %v1117 = vsub.s32 32, %v1116
        %v1118 = vshll.u32 %v1109, %v1116
        %v1119 = vshrl.u32 %v1101, %v1117
        %v1120 = vor.u32 %v1118, %v1119
        %v1121 = vsub.s32 4294967266, %v1116
        %v1122 = vadd.s32 %v1121, 127
        %v1123 = vshll.u32 %v1122, 23
        %v1124 = vor.u32 4788187, %v1123
        %v1125 = vand.u32 2147483647, %v1124
        %v1127 = vcvt.s32.f32 %v1120
        %v1128 = vmul.f32 %v1127, %v1125
        %v1129 = vxor.u32 %v1128, 2147483648
        %v1130 = vsel %vm1047, %v1129, %v1128
        %v1131 = vsub.s32 4, %v1107
        %v1132 = vsel %vm1047, %v1131, %v1107
        %v1133 = vsel %vm1046, %v1013, %v1130
        %v1134 = vsel %vm1046, 0, %v1132
        %v1135 = vcosq.f32.pop %v1133
        %v1136 = vsinq.f32.pop %v1133
        %vm1137 = vweird.f32 %v1013
        %v1138 = vadd.s32 %v1134, 3
        %v1139 = vand.u32 %v1138, 3
        %vm1140 = vcmp.lt.s32.totalorder %v1139, 2
        %vm1141 = vcmp.eq.s32.totalorder %v1139, 0
        %v1142 = vxor.u32 %v1136, 2147483648
        %v1143 = vsel %vm1141, %v1135, %v1142
        %vm1144 = vcmp.eq.s32.totalorder %v1139, 2
        %v1145 = vxor.u32 %v1135, 2147483648
        %v1146 = vsel %vm1144, %v1145, %v1136
        %v1147 = vsel %vm1140, %v1143, %v1146
        %v1148 = vsel %vm1137, nan, %v1147
        %v1149 = vand.u32 2147483647, %v1014
        %vm1150 = vcmp.le.f32.partialorder %v1149, 0.7853982
        %vm1151 = vcmp.lt.s32.totalorder %v1014, 0
        %v1152 = vand.u32 %v1014, 2139095040
        %v1153 = vshrl.u32 %v1152, 23
        %v1154 = vsub.s32 %v1153, 127
        %v1155 = vand.u32 2147483647, %v1014
        %v1156 = vand.u32 %v1155, 8388607
        %v1157 = vor.u32 %v1156, 8388608
        %v1158 = vsub.s32 0, %v1157
        %v1159 = vadd.s32 %v1154, 1
        %vm1160 = vcmp.gt.s32.totalorder %v1159, 0
        %v1161 = vsel %vm1160, %v1159, 0
        %v1162 = vshrl.u32 %v1161, 5
        %v1163 = vand.u32 %v1161, 31
        %v1164 = vsub.s32 32, %v1163
        %v1165 = vshrl.u32 683565275, %v1164
        %v1166 = vshll.u32 683565275, %v1163
        %v1167 = vshrl.u32 2475754826, %v1164
        %v1168 = vor.u32 %v1166, %v1167
        %v1169 = vshll.u32 2475754826, %v1163
        %v1170 = vshrl.u32 2131351028, %v1164
        %v1171 = vor.u32 %v1169, %v1170
        %v1172 = vshll.u32 2131351028, %v1163
        %v1173 = vshrl.u32 2102212464, %v1164
        %v1174 = vor.u32 %v1172, %v1173
        %v1175 = vshll.u32 2102212464, %v1163
        %v1176 = vshrl.u32 920167782, %v1164
        %v1177 = vor.u32 %v1175, %v1176
        %v1178 = vshll.u32 920167782, %v1163
        %v1179 = vshrl.u32 1326507024, %v1164
        %v1180 = vor.u32 %v1178, %v1179
        %vm1181 = vcmp.lt.s32.totalorder %v1162, 1
        %vm1182 = vcmp.lt.s32.totalorder %v1162, 2
        %vm1183 = vcmp.lt.s32.totalorder %v1162, 3
        %vm1184 = vcmp.lt.s32.totalorder %v1162, 4
        %v1185 = vsel %vm1181, %v1165, %v1168
        %v1186 = vsel %vm1184, %v1174, 2102212464
        %v1187 = vsel %vm1183, %v1171, %v1186
        %v1188 = vsel %vm1182, %v1185, %v1187
        %v1189 = vsel %vm1181, %v1168, %v1171
        %v1190 = vsel %vm1184, %v1177, 920167782
        %v1191 = vsel %vm1183, %v1174, %v1190
        %v1192 = vsel %vm1182, %v1189, %v1191
        %v1193 = vsel %vm1181, %v1171, %v1174
        %v1194 = vsel %vm1184, %v1180, 1326507024
        %v1195 = vsel %vm1183, %v1177, %v1194
        %v1196 = vsel %vm1182, %v1193, %v1195
        %v1197 = vshll.u32 %v1157, 8
        %v1198 = vmul.u32.u64.compose %v1197, %v1196
        %v1199 = vextract.low.u32 %v1198
        %v1200 = vextract.high.u32 %v1198
        %v1201 = vmul.u32.u64.compose %v1197, %v1192
        %v1202 = vextract.low.u32 %v1201
        %v1203 = vextract.high.u32 %v1201
        %v1204 = vmul.u32 %v1197, %v1188
        %v1205 = vadd.s32 %v1200, %v1202
        %vm1206 = vc.u32 %v1200, %v1202
        %v1207 = vadd.s32 %v1203, 1
        %v1208 = vsel %vm1206, %v1207, %v1203
        %v1209 = vadd.s32 %v1204, %v1208
        %v1210 = vadd.s32 %v1209, 536870912
        %v1211 = vshrl.u32 %v1210, 30
        %v1212 = vshll.u32 %v1211, 30
        %v1213 = vsub.s32 %v1209, %v1212
        %vm1214 = vcmp.lt.s32.totalorder %v1213, 0
        %v1215 = vsub.s32 0, %v1213
        %v1216 = vsel %vm1214, %v1215, %v1213
        %v1217 = vclz %v1216
        %v1218 = vsub.s32 %v1217, 2
        %vm1219 = vcmp.gt.s32.totalorder 0, %v1218
        %v1220 = vsel %vm1219, 0, %v1218
        %v1221 = vsub.s32 32, %v1220
        %v1222 = vshll.u32 %v1213, %v1220
        %v1223 = vshrl.u32 %v1205, %v1221
        %v1224 = vor.u32 %v1222, %v1223
        %v1225 = vsub.s32 4294967266, %v1220
        %v1226 = vadd.s32 %v1225, 127
        %v1227 = vshll.u32 %v1226, 23
        %v1228 = vor.u32 4788187, %v1227
        %v1229 = vand.u32 2147483647, %v1228
        %v1231 = vcvt.s32.f32 %v1224
        %v1232 = vmul.f32 %v1231, %v1229
        %v1233 = vxor.u32 %v1232, 2147483648
        %v1234 = vsel %vm1151, %v1233, %v1232
        %v1235 = vsub.s32 4, %v1211
        %v1236 = vsel %vm1151, %v1235, %v1211
        %v1237 = vsel %vm1150, %v1014, %v1234
        %v1238 = vsel %vm1150, 0, %v1236
        %v1239 = vcosq.f32.pop %v1237
        %v1240 = vsinq.f32.pop %v1237
        %vm1241 = vweird.f32 %v1014
        %v1242 = vadd.s32 %v1238, 3
        %v1243 = vand.u32 %v1242, 3
        %vm1244 = vcmp.lt.s32.totalorder %v1243, 2
        %vm1245 = vcmp.eq.s32.totalorder %v1243, 0
        %v1246 = vxor.u32 %v1240, 2147483648
        %v1247 = vsel %vm1245, %v1239, %v1246
        %vm1248 = vcmp.eq.s32.totalorder %v1243, 2
        %v1249 = vxor.u32 %v1239, 2147483648
        %v1250 = vsel %vm1248, %v1249, %v1240
        %v1251 = vsel %vm1244, %v1247, %v1250
        %v1252 = vsel %vm1241, nan, %v1251
        %v1253 = vand.u32 2147483647, %v1015
        %vm1254 = vcmp.le.f32.partialorder %v1253, 0.7853982
        %vm1255 = vcmp.lt.s32.totalorder %v1015, 0
        %v1256 = vand.u32 %v1015, 2139095040
        %v1257 = vshrl.u32 %v1256, 23
        %v1258 = vsub.s32 %v1257, 127
        %v1259 = vand.u32 2147483647, %v1015
        %v1260 = vand.u32 %v1259, 8388607
        %v1261 = vor.u32 %v1260, 8388608
        %v1262 = vsub.s32 0, %v1261
        %v1263 = vadd.s32 %v1258, 1
        %vm1264 = vcmp.gt.s32.totalorder %v1263, 0
        %v1265 = vsel %vm1264, %v1263, 0
        %v1266 = vshrl.u32 %v1265, 5
        %v1267 = vand.u32 %v1265, 31
        %v1268 = vsub.s32 32, %v1267
        %v1269 = vshrl.u32 683565275, %v1268
        %v1270 = vshll.u32 683565275, %v1267
        %v1271 = vshrl.u32 2475754826, %v1268
        %v1272 = vor.u32 %v1270, %v1271
        %v1273 = vshll.u32 2475754826, %v1267
        %v1274 = vshrl.u32 2131351028, %v1268
        %v1275 = vor.u32 %v1273, %v1274
        %v1276 = vshll.u32 2131351028, %v1267
        %v1277 = vshrl.u32 2102212464, %v1268
        %v1278 = vor.u32 %v1276, %v1277
        %v1279 = vshll.u32 2102212464, %v1267
        %v1280 = vshrl.u32 920167782, %v1268
        %v1281 = vor.u32 %v1279, %v1280
        %v1282 = vshll.u32 920167782, %v1267
        %v1283 = vshrl.u32 1326507024, %v1268
        %v1284 = vor.u32 %v1282, %v1283
        %vm1285 = vcmp.lt.s32.totalorder %v1266, 1
        %vm1286 = vcmp.lt.s32.totalorder %v1266, 2
        %vm1287 = vcmp.lt.s32.totalorder %v1266, 3
        %vm1288 = vcmp.lt.s32.totalorder %v1266, 4
        %v1289 = vsel %vm1285, %v1269, %v1272
        %v1290 = vsel %vm1288, %v1278, 2102212464
        %v1291 = vsel %vm1287, %v1275, %v1290
        %v1292 = vsel %vm1286, %v1289, %v1291
        %v1293 = vsel %vm1285, %v1272, %v1275
        %v1294 = vsel %vm1288, %v1281, 920167782
        %v1295 = vsel %vm1287, %v1278, %v1294
        %v1296 = vsel %vm1286, %v1293, %v1295
        %v1297 = vsel %vm1285, %v1275, %v1278
        %v1298 = vsel %vm1288, %v1284, 1326507024
        %v1299 = vsel %vm1287, %v1281, %v1298
        %v1300 = vsel %vm1286, %v1297, %v1299
        %v1301 = vshll.u32 %v1261, 8
        %v1302 = vmul.u32.u64.compose %v1301, %v1300
        %v1303 = vextract.low.u32 %v1302
        %v1304 = vextract.high.u32 %v1302
        %v1305 = vmul.u32.u64.compose %v1301, %v1296
        %v1306 = vextract.low.u32 %v1305
        %v1307 = vextract.high.u32 %v1305
        %v1308 = vmul.u32 %v1301, %v1292
        %v1309 = vadd.s32 %v1304, %v1306
        %vm1310 = vc.u32 %v1304, %v1306
        %v1311 = vadd.s32 %v1307, 1
        %v1312 = vsel %vm1310, %v1311, %v1307
        %v1313 = vadd.s32 %v1308, %v1312
        %v1314 = vadd.s32 %v1313, 536870912
        %v1315 = vshrl.u32 %v1314, 30
        %v1316 = vshll.u32 %v1315, 30
        %v1317 = vsub.s32 %v1313, %v1316
        %vm1318 = vcmp.lt.s32.totalorder %v1317, 0
        %v1319 = vsub.s32 0, %v1317
        %v1320 = vsel %vm1318, %v1319, %v1317
        %v1321 = vclz %v1320
        %v1322 = vsub.s32 %v1321, 2
        %vm1323 = vcmp.gt.s32.totalorder 0, %v1322
        %v1324 = vsel %vm1323, 0, %v1322
        %v1325 = vsub.s32 32, %v1324
        %v1326 = vshll.u32 %v1317, %v1324
        %v1327 = vshrl.u32 %v1309, %v1325
        %v1328 = vor.u32 %v1326, %v1327
        %v1329 = vsub.s32 4294967266, %v1324
        %v1330 = vadd.s32 %v1329, 127
        %v1331 = vshll.u32 %v1330, 23
        %v1332 = vor.u32 4788187, %v1331
        %v1333 = vand.u32 2147483647, %v1332
        %v1335 = vcvt.s32.f32 %v1328
        %v1336 = vmul.f32 %v1335, %v1333
        %v1337 = vxor.u32 %v1336, 2147483648
        %v1338 = vsel %vm1255, %v1337, %v1336
        %v1339 = vsub.s32 4, %v1315
        %v1340 = vsel %vm1255, %v1339, %v1315
        %v1341 = vsel %vm1254, %v1015, %v1338
        %v1342 = vsel %vm1254, 0, %v1340
        %v1343 = vcosq.f32.pop %v1341
        %v1344 = vsinq.f32.pop %v1341
        %vm1345 = vweird.f32 %v1015
        %v1346 = vadd.s32 %v1342, 3
        %v1347 = vand.u32 %v1346, 3
        %vm1348 = vcmp.lt.s32.totalorder %v1347, 2
        %vm1349 = vcmp.eq.s32.totalorder %v1347, 0
        %v1350 = vxor.u32 %v1344, 2147483648
        %v1351 = vsel %vm1349, %v1343, %v1350
        %vm1352 = vcmp.eq.s32.totalorder %v1347, 2
        %v1353 = vxor.u32 %v1343, 2147483648
        %v1354 = vsel %vm1352, %v1353, %v1344
        %v1355 = vsel %vm1348, %v1351, %v1354
        %v1356 = vsel %vm1345, nan, %v1355
        %v1357 = vand.u32 2147483647, %v1016
        %vm1358 = vcmp.le.f32.partialorder %v1357, 0.7853982
        %vm1359 = vcmp.lt.s32.totalorder %v1016, 0
        %v1360 = vand.u32 %v1016, 2139095040
        %v1361 = vshrl.u32 %v1360, 23
        %v1362 = vsub.s32 %v1361, 127
        %v1363 = vand.u32 2147483647, %v1016
        %v1364 = vand.u32 %v1363, 8388607
        %v1365 = vor.u32 %v1364, 8388608
        %v1366 = vsub.s32 0, %v1365
        %v1367 = vadd.s32 %v1362, 1
        %vm1368 = vcmp.gt.s32.totalorder %v1367, 0
        %v1369 = vsel %vm1368, %v1367, 0
        %v1370 = vshrl.u32 %v1369, 5
        %v1371 = vand.u32 %v1369, 31
        %v1372 = vsub.s32 32, %v1371
        %v1373 = vshrl.u32 683565275, %v1372
        %v1374 = vshll.u32 683565275, %v1371
        %v1375 = vshrl.u32 2475754826, %v1372
        %v1376 = vor.u32 %v1374, %v1375
        %v1377 = vshll.u32 2475754826, %v1371
        %v1378 = vshrl.u32 2131351028, %v1372
        %v1379 = vor.u32 %v1377, %v1378
        %v1380 = vshll.u32 2131351028, %v1371
        %v1381 = vshrl.u32 2102212464, %v1372
        %v1382 = vor.u32 %v1380, %v1381
        %v1383 = vshll.u32 2102212464, %v1371
        %v1384 = vshrl.u32 920167782, %v1372
        %v1385 = vor.u32 %v1383, %v1384
        %v1386 = vshll.u32 920167782, %v1371
        %v1387 = vshrl.u32 1326507024, %v1372
        %v1388 = vor.u32 %v1386, %v1387
        %vm1389 = vcmp.lt.s32.totalorder %v1370, 1
        %vm1390 = vcmp.lt.s32.totalorder %v1370, 2
        %vm1391 = vcmp.lt.s32.totalorder %v1370, 3
        %vm1392 = vcmp.lt.s32.totalorder %v1370, 4
        %v1393 = vsel %vm1389, %v1373, %v1376
        %v1394 = vsel %vm1392, %v1382, 2102212464
        %v1395 = vsel %vm1391, %v1379, %v1394
        %v1396 = vsel %vm1390, %v1393, %v1395
        %v1397 = vsel %vm1389, %v1376, %v1379
        %v1398 = vsel %vm1392, %v1385, 920167782
        %v1399 = vsel %vm1391, %v1382, %v1398
        %v1400 = vsel %vm1390, %v1397, %v1399
        %v1401 = vsel %vm1389, %v1379, %v1382
        %v1402 = vsel %vm1392, %v1388, 1326507024
        %v1403 = vsel %vm1391, %v1385, %v1402
        %v1404 = vsel %vm1390, %v1401, %v1403
        %v1405 = vshll.u32 %v1365, 8
        %v1406 = vmul.u32.u64.compose %v1405, %v1404
        %v1407 = vextract.low.u32 %v1406
        %v1408 = vextract.high.u32 %v1406
        %v1409 = vmul.u32.u64.compose %v1405, %v1400
        %v1410 = vextract.low.u32 %v1409
        %v1411 = vextract.high.u32 %v1409
        %v1412 = vmul.u32 %v1405, %v1396
        %v1413 = vadd.s32 %v1408, %v1410
        %vm1414 = vc.u32 %v1408, %v1410
        %v1415 = vadd.s32 %v1411, 1
        %v1416 = vsel %vm1414, %v1415, %v1411
        %v1417 = vadd.s32 %v1412, %v1416
        %v1418 = vadd.s32 %v1417, 536870912
        %v1419 = vshrl.u32 %v1418, 30
        %v1420 = vshll.u32 %v1419, 30
        %v1421 = vsub.s32 %v1417, %v1420
        %vm1422 = vcmp.lt.s32.totalorder %v1421, 0
        %v1423 = vsub.s32 0, %v1421
        %v1424 = vsel %vm1422, %v1423, %v1421
        %v1425 = vclz %v1424
        %v1426 = vsub.s32 %v1425, 2
        %vm1427 = vcmp.gt.s32.totalorder 0, %v1426
        %v1428 = vsel %vm1427, 0, %v1426
        %v1429 = vsub.s32 32, %v1428
        %v1430 = vshll.u32 %v1421, %v1428
        %v1431 = vshrl.u32 %v1413, %v1429
        %v1432 = vor.u32 %v1430, %v1431
        %v1433 = vsub.s32 4294967266, %v1428
        %v1434 = vadd.s32 %v1433, 127
        %v1435 = vshll.u32 %v1434, 23
        %v1436 = vor.u32 4788187, %v1435
        %v1437 = vand.u32 2147483647, %v1436
        %v1439 = vcvt.s32.f32 %v1432
        %v1440 = vmul.f32 %v1439, %v1437
        %v1441 = vxor.u32 %v1440, 2147483648
        %v1442 = vsel %vm1359, %v1441, %v1440
        %v1443 = vsub.s32 4, %v1419
        %v1444 = vsel %vm1359, %v1443, %v1419
        %v1445 = vsel %vm1358, %v1016, %v1442
        %v1446 = vsel %vm1358, 0, %v1444
        %v1447 = vcosq.f32.pop %v1445
        %v1448 = vsinq.f32.pop %v1445
        %vm1449 = vweird.f32 %v1016
        %v1450 = vadd.s32 %v1446, 3
        %v1451 = vand.u32 %v1450, 3
        %vm1452 = vcmp.lt.s32.totalorder %v1451, 2
        %vm1453 = vcmp.eq.s32.totalorder %v1451, 0
        %v1454 = vxor.u32 %v1448, 2147483648
        %v1455 = vsel %vm1453, %v1447, %v1454
        %vm1456 = vcmp.eq.s32.totalorder %v1451, 2
        %v1457 = vxor.u32 %v1447, 2147483648
        %v1458 = vsel %vm1456, %v1457, %v1448
        %v1459 = vsel %vm1452, %v1455, %v1458
        %v1460 = vsel %vm1449, nan, %v1459
        %v1461 = vand.u32 2147483647, %v1017
        %vm1462 = vcmp.le.f32.partialorder %v1461, 0.7853982
        %vm1463 = vcmp.lt.s32.totalorder %v1017, 0
        %v1464 = vand.u32 %v1017, 2139095040
        %v1465 = vshrl.u32 %v1464, 23
        %v1466 = vsub.s32 %v1465, 127
        %v1467 = vand.u32 2147483647, %v1017
        %v1468 = vand.u32 %v1467, 8388607
        %v1469 = vor.u32 %v1468, 8388608
        %v1470 = vsub.s32 0, %v1469
        %v1471 = vadd.s32 %v1466, 1
        %vm1472 = vcmp.gt.s32.totalorder %v1471, 0
        %v1473 = vsel %vm1472, %v1471, 0
        %v1474 = vshrl.u32 %v1473, 5
        %v1475 = vand.u32 %v1473, 31
        %v1476 = vsub.s32 32, %v1475
        %v1477 = vshrl.u32 683565275, %v1476
        %v1478 = vshll.u32 683565275, %v1475
        %v1479 = vshrl.u32 2475754826, %v1476
        %v1480 = vor.u32 %v1478, %v1479
        %v1481 = vshll.u32 2475754826, %v1475
        %v1482 = vshrl.u32 2131351028, %v1476
        %v1483 = vor.u32 %v1481, %v1482
        %v1484 = vshll.u32 2131351028, %v1475
        %v1485 = vshrl.u32 2102212464, %v1476
        %v1486 = vor.u32 %v1484, %v1485
        %v1487 = vshll.u32 2102212464, %v1475
        %v1488 = vshrl.u32 920167782, %v1476
        %v1489 = vor.u32 %v1487, %v1488
        %v1490 = vshll.u32 920167782, %v1475
        %v1491 = vshrl.u32 1326507024, %v1476
        %v1492 = vor.u32 %v1490, %v1491
        %vm1493 = vcmp.lt.s32.totalorder %v1474, 1
        %vm1494 = vcmp.lt.s32.totalorder %v1474, 2
        %vm1495 = vcmp.lt.s32.totalorder %v1474, 3
        %vm1496 = vcmp.lt.s32.totalorder %v1474, 4
        %v1497 = vsel %vm1493, %v1477, %v1480
        %v1498 = vsel %vm1496, %v1486, 2102212464
        %v1499 = vsel %vm1495, %v1483, %v1498
        %v1500 = vsel %vm1494, %v1497, %v1499
        %v1501 = vsel %vm1493, %v1480, %v1483
        %v1502 = vsel %vm1496, %v1489, 920167782
        %v1503 = vsel %vm1495, %v1486, %v1502
        %v1504 = vsel %vm1494, %v1501, %v1503
        %v1505 = vsel %vm1493, %v1483, %v1486
        %v1506 = vsel %vm1496, %v1492, 1326507024
        %v1507 = vsel %vm1495, %v1489, %v1506
        %v1508 = vsel %vm1494, %v1505, %v1507
        %v1509 = vshll.u32 %v1469, 8
        %v1510 = vmul.u32.u64.compose %v1509, %v1508
        %v1511 = vextract.low.u32 %v1510
        %v1512 = vextract.high.u32 %v1510
        %v1513 = vmul.u32.u64.compose %v1509, %v1504
        %v1514 = vextract.low.u32 %v1513
        %v1515 = vextract.high.u32 %v1513
        %v1516 = vmul.u32 %v1509, %v1500
        %v1517 = vadd.s32 %v1512, %v1514
        %vm1518 = vc.u32 %v1512, %v1514
        %v1519 = vadd.s32 %v1515, 1
        %v1520 = vsel %vm1518, %v1519, %v1515
        %v1521 = vadd.s32 %v1516, %v1520
        %v1522 = vadd.s32 %v1521, 536870912
        %v1523 = vshrl.u32 %v1522, 30
        %v1524 = vshll.u32 %v1523, 30
        %v1525 = vsub.s32 %v1521, %v1524
        %vm1526 = vcmp.lt.s32.totalorder %v1525, 0
        %v1527 = vsub.s32 0, %v1525
        %v1528 = vsel %vm1526, %v1527, %v1525
        %v1529 = vclz %v1528
        %v1530 = vsub.s32 %v1529, 2
        %vm1531 = vcmp.gt.s32.totalorder 0, %v1530
        %v1532 = vsel %vm1531, 0, %v1530
        %v1533 = vsub.s32 32, %v1532
        %v1534 = vshll.u32 %v1525, %v1532
        %v1535 = vshrl.u32 %v1517, %v1533
        %v1536 = vor.u32 %v1534, %v1535
        %v1537 = vsub.s32 4294967266, %v1532
        %v1538 = vadd.s32 %v1537, 127
        %v1539 = vshll.u32 %v1538, 23
        %v1540 = vor.u32 4788187, %v1539
        %v1541 = vand.u32 2147483647, %v1540
        %v1543 = vcvt.s32.f32 %v1536
        %v1544 = vmul.f32 %v1543, %v1541
        %v1545 = vxor.u32 %v1544, 2147483648
        %v1546 = vsel %vm1463, %v1545, %v1544
        %v1547 = vsub.s32 4, %v1523
        %v1548 = vsel %vm1463, %v1547, %v1523
        %v1549 = vsel %vm1462, %v1017, %v1546
        %v1550 = vsel %vm1462, 0, %v1548
        %v1551 = vcosq.f32.pop %v1549
        %v1552 = vsinq.f32.pop %v1549
        %vm1553 = vweird.f32 %v1017
        %v1554 = vadd.s32 %v1550, 3
        %v1555 = vand.u32 %v1554, 3
        %vm1556 = vcmp.lt.s32.totalorder %v1555, 2
        %vm1557 = vcmp.eq.s32.totalorder %v1555, 0
        %v1558 = vxor.u32 %v1552, 2147483648
        %v1559 = vsel %vm1557, %v1551, %v1558
        %vm1560 = vcmp.eq.s32.totalorder %v1555, 2
        %v1561 = vxor.u32 %v1551, 2147483648
        %v1562 = vsel %vm1560, %v1561, %v1552
        %v1563 = vsel %vm1556, %v1559, %v1562
        %v1564 = vsel %vm1553, nan, %v1563
        %v1565 = vand.u32 2147483647, %v1018
        %vm1566 = vcmp.le.f32.partialorder %v1565, 0.7853982
        %vm1567 = vcmp.lt.s32.totalorder %v1018, 0
        %v1568 = vand.u32 %v1018, 2139095040
        %v1569 = vshrl.u32 %v1568, 23
        %v1570 = vsub.s32 %v1569, 127
        %v1571 = vand.u32 2147483647, %v1018
        %v1572 = vand.u32 %v1571, 8388607
        %v1573 = vor.u32 %v1572, 8388608
        %v1574 = vsub.s32 0, %v1573
        %v1575 = vadd.s32 %v1570, 1
        %vm1576 = vcmp.gt.s32.totalorder %v1575, 0
        %v1577 = vsel %vm1576, %v1575, 0
        %v1578 = vshrl.u32 %v1577, 5
        %v1579 = vand.u32 %v1577, 31
        %v1580 = vsub.s32 32, %v1579
        %v1581 = vshrl.u32 683565275, %v1580
        %v1582 = vshll.u32 683565275, %v1579
        %v1583 = vshrl.u32 2475754826, %v1580
        %v1584 = vor.u32 %v1582, %v1583
        %v1585 = vshll.u32 2475754826, %v1579
        %v1586 = vshrl.u32 2131351028, %v1580
        %v1587 = vor.u32 %v1585, %v1586
        %v1588 = vshll.u32 2131351028, %v1579
        %v1589 = vshrl.u32 2102212464, %v1580
        %v1590 = vor.u32 %v1588, %v1589
        %v1591 = vshll.u32 2102212464, %v1579
        %v1592 = vshrl.u32 920167782, %v1580
        %v1593 = vor.u32 %v1591, %v1592
        %v1594 = vshll.u32 920167782, %v1579
        %v1595 = vshrl.u32 1326507024, %v1580
        %v1596 = vor.u32 %v1594, %v1595
        %vm1597 = vcmp.lt.s32.totalorder %v1578, 1
        %vm1598 = vcmp.lt.s32.totalorder %v1578, 2
        %vm1599 = vcmp.lt.s32.totalorder %v1578, 3
        %vm1600 = vcmp.lt.s32.totalorder %v1578, 4
        %v1601 = vsel %vm1597, %v1581, %v1584
        %v1602 = vsel %vm1600, %v1590, 2102212464
        %v1603 = vsel %vm1599, %v1587, %v1602
        %v1604 = vsel %vm1598, %v1601, %v1603
        %v1605 = vsel %vm1597, %v1584, %v1587
        %v1606 = vsel %vm1600, %v1593, 920167782
        %v1607 = vsel %vm1599, %v1590, %v1606
        %v1608 = vsel %vm1598, %v1605, %v1607
        %v1609 = vsel %vm1597, %v1587, %v1590
        %v1610 = vsel %vm1600, %v1596, 1326507024
        %v1611 = vsel %vm1599, %v1593, %v1610
        %v1612 = vsel %vm1598, %v1609, %v1611
        %v1613 = vshll.u32 %v1573, 8
        %v1614 = vmul.u32.u64.compose %v1613, %v1612
        %v1615 = vextract.low.u32 %v1614
        %v1616 = vextract.high.u32 %v1614
        %v1617 = vmul.u32.u64.compose %v1613, %v1608
        %v1618 = vextract.low.u32 %v1617
        %v1619 = vextract.high.u32 %v1617
        %v1620 = vmul.u32 %v1613, %v1604
        %v1621 = vadd.s32 %v1616, %v1618
        %vm1622 = vc.u32 %v1616, %v1618
        %v1623 = vadd.s32 %v1619, 1
        %v1624 = vsel %vm1622, %v1623, %v1619
        %v1625 = vadd.s32 %v1620, %v1624
        %v1626 = vadd.s32 %v1625, 536870912
        %v1627 = vshrl.u32 %v1626, 30
        %v1628 = vshll.u32 %v1627, 30
        %v1629 = vsub.s32 %v1625, %v1628
        %vm1630 = vcmp.lt.s32.totalorder %v1629, 0
        %v1631 = vsub.s32 0, %v1629
        %v1632 = vsel %vm1630, %v1631, %v1629
        %v1633 = vclz %v1632
        %v1634 = vsub.s32 %v1633, 2
        %vm1635 = vcmp.gt.s32.totalorder 0, %v1634
        %v1636 = vsel %vm1635, 0, %v1634
        %v1637 = vsub.s32 32, %v1636
        %v1638 = vshll.u32 %v1629, %v1636
        %v1639 = vshrl.u32 %v1621, %v1637
        %v1640 = vor.u32 %v1638, %v1639
        %v1641 = vsub.s32 4294967266, %v1636
        %v1642 = vadd.s32 %v1641, 127
        %v1643 = vshll.u32 %v1642, 23
        %v1644 = vor.u32 4788187, %v1643
        %v1645 = vand.u32 2147483647, %v1644
        %v1647 = vcvt.s32.f32 %v1640
        %v1648 = vmul.f32 %v1647, %v1645
        %v1649 = vxor.u32 %v1648, 2147483648
        %v1650 = vsel %vm1567, %v1649, %v1648
        %v1651 = vsub.s32 4, %v1627
        %v1652 = vsel %vm1567, %v1651, %v1627
        %v1653 = vsel %vm1566, %v1018, %v1650
        %v1654 = vsel %vm1566, 0, %v1652
        %v1655 = vcosq.f32.pop %v1653
        %v1656 = vsinq.f32.pop %v1653
        %vm1657 = vweird.f32 %v1018
        %v1658 = vadd.s32 %v1654, 3
        %v1659 = vand.u32 %v1658, 3
        %vm1660 = vcmp.lt.s32.totalorder %v1659, 2
        %vm1661 = vcmp.eq.s32.totalorder %v1659, 0
        %v1662 = vxor.u32 %v1656, 2147483648
        %v1663 = vsel %vm1661, %v1655, %v1662
        %vm1664 = vcmp.eq.s32.totalorder %v1659, 2
        %v1665 = vxor.u32 %v1655, 2147483648
        %v1666 = vsel %vm1664, %v1665, %v1656
        %v1667 = vsel %vm1660, %v1663, %v1666
        %v1668 = vsel %vm1657, nan, %v1667
        %v1669 = vand.u32 2147483647, %v1019
        %vm1670 = vcmp.le.f32.partialorder %v1669, 0.7853982
        %vm1671 = vcmp.lt.s32.totalorder %v1019, 0
        %v1672 = vand.u32 %v1019, 2139095040
        %v1673 = vshrl.u32 %v1672, 23
        %v1674 = vsub.s32 %v1673, 127
        %v1675 = vand.u32 2147483647, %v1019
        %v1676 = vand.u32 %v1675, 8388607
        %v1677 = vor.u32 %v1676, 8388608
        %v1678 = vsub.s32 0, %v1677
        %v1679 = vadd.s32 %v1674, 1
        %vm1680 = vcmp.gt.s32.totalorder %v1679, 0
        %v1681 = vsel %vm1680, %v1679, 0
        %v1682 = vshrl.u32 %v1681, 5
        %v1683 = vand.u32 %v1681, 31
        %v1684 = vsub.s32 32, %v1683
        %v1685 = vshrl.u32 683565275, %v1684
        %v1686 = vshll.u32 683565275, %v1683
        %v1687 = vshrl.u32 2475754826, %v1684
        %v1688 = vor.u32 %v1686, %v1687
        %v1689 = vshll.u32 2475754826, %v1683
        %v1690 = vshrl.u32 2131351028, %v1684
        %v1691 = vor.u32 %v1689, %v1690
        %v1692 = vshll.u32 2131351028, %v1683
        %v1693 = vshrl.u32 2102212464, %v1684
        %v1694 = vor.u32 %v1692, %v1693
        %v1695 = vshll.u32 2102212464, %v1683
        %v1696 = vshrl.u32 920167782, %v1684
        %v1697 = vor.u32 %v1695, %v1696
        %v1698 = vshll.u32 920167782, %v1683
        %v1699 = vshrl.u32 1326507024, %v1684
        %v1700 = vor.u32 %v1698, %v1699
        %vm1701 = vcmp.lt.s32.totalorder %v1682, 1
        %vm1702 = vcmp.lt.s32.totalorder %v1682, 2
        %vm1703 = vcmp.lt.s32.totalorder %v1682, 3
        %vm1704 = vcmp.lt.s32.totalorder %v1682, 4
        %v1705 = vsel %vm1701, %v1685, %v1688
        %v1706 = vsel %vm1704, %v1694, 2102212464
        %v1707 = vsel %vm1703, %v1691, %v1706
        %v1708 = vsel %vm1702, %v1705, %v1707
        %v1709 = vsel %vm1701, %v1688, %v1691
        %v1710 = vsel %vm1704, %v1697, 920167782
        %v1711 = vsel %vm1703, %v1694, %v1710
        %v1712 = vsel %vm1702, %v1709, %v1711
        %v1713 = vsel %vm1701, %v1691, %v1694
        %v1714 = vsel %vm1704, %v1700, 1326507024
        %v1715 = vsel %vm1703, %v1697, %v1714
        %v1716 = vsel %vm1702, %v1713, %v1715
        %v1717 = vshll.u32 %v1677, 8
        %v1718 = vmul.u32.u64.compose %v1717, %v1716
        %v1719 = vextract.low.u32 %v1718
        %v1720 = vextract.high.u32 %v1718
        %v1721 = vmul.u32.u64.compose %v1717, %v1712
        %v1722 = vextract.low.u32 %v1721
        %v1723 = vextract.high.u32 %v1721
        %v1724 = vmul.u32 %v1717, %v1708
        %v1725 = vadd.s32 %v1720, %v1722
        %vm1726 = vc.u32 %v1720, %v1722
        %v1727 = vadd.s32 %v1723, 1
        %v1728 = vsel %vm1726, %v1727, %v1723
        %v1729 = vadd.s32 %v1724, %v1728
        %v1730 = vadd.s32 %v1729, 536870912
        %v1731 = vshrl.u32 %v1730, 30
        %v1732 = vshll.u32 %v1731, 30
        %v1733 = vsub.s32 %v1729, %v1732
        %vm1734 = vcmp.lt.s32.totalorder %v1733, 0
        %v1735 = vsub.s32 0, %v1733
        %v1736 = vsel %vm1734, %v1735, %v1733
        %v1737 = vclz %v1736
        %v1738 = vsub.s32 %v1737, 2
        %vm1739 = vcmp.gt.s32.totalorder 0, %v1738
        %v1740 = vsel %vm1739, 0, %v1738
        %v1741 = vsub.s32 32, %v1740
        %v1742 = vshll.u32 %v1733, %v1740
        %v1743 = vshrl.u32 %v1725, %v1741
        %v1744 = vor.u32 %v1742, %v1743
        %v1745 = vsub.s32 4294967266, %v1740
        %v1746 = vadd.s32 %v1745, 127
        %v1747 = vshll.u32 %v1746, 23
        %v1748 = vor.u32 4788187, %v1747
        %v1749 = vand.u32 2147483647, %v1748
        %v1751 = vcvt.s32.f32 %v1744
        %v1752 = vmul.f32 %v1751, %v1749
        %v1753 = vxor.u32 %v1752, 2147483648
        %v1754 = vsel %vm1671, %v1753, %v1752
        %v1755 = vsub.s32 4, %v1731
        %v1756 = vsel %vm1671, %v1755, %v1731
        %v1757 = vsel %vm1670, %v1019, %v1754
        %v1758 = vsel %vm1670, 0, %v1756
        %v1759 = vcosq.f32.pop %v1757
        %v1760 = vsinq.f32.pop %v1757
        %vm1761 = vweird.f32 %v1019
        %v1762 = vadd.s32 %v1758, 3
        %v1763 = vand.u32 %v1762, 3
        %vm1764 = vcmp.lt.s32.totalorder %v1763, 2
        %vm1765 = vcmp.eq.s32.totalorder %v1763, 0
        %v1766 = vxor.u32 %v1760, 2147483648
        %v1767 = vsel %vm1765, %v1759, %v1766
        %vm1768 = vcmp.eq.s32.totalorder %v1763, 2
        %v1769 = vxor.u32 %v1759, 2147483648
        %v1770 = vsel %vm1768, %v1769, %v1760
        %v1771 = vsel %vm1764, %v1767, %v1770
        %v1772 = vsel %vm1761, nan, %v1771
        %v1773 = vand.u32 2147483647, %v1020
        %vm1774 = vcmp.le.f32.partialorder %v1773, 0.7853982
        %vm1775 = vcmp.lt.s32.totalorder %v1020, 0
        %v1776 = vand.u32 %v1020, 2139095040
        %v1777 = vshrl.u32 %v1776, 23
        %v1778 = vsub.s32 %v1777, 127
        %v1779 = vand.u32 2147483647, %v1020
        %v1780 = vand.u32 %v1779, 8388607
        %v1781 = vor.u32 %v1780, 8388608
        %v1782 = vsub.s32 0, %v1781
        %v1783 = vadd.s32 %v1778, 1
        %vm1784 = vcmp.gt.s32.totalorder %v1783, 0
        %v1785 = vsel %vm1784, %v1783, 0
        %v1786 = vshrl.u32 %v1785, 5
        %v1787 = vand.u32 %v1785, 31
        %v1788 = vsub.s32 32, %v1787
        %v1789 = vshrl.u32 683565275, %v1788
        %v1790 = vshll.u32 683565275, %v1787
        %v1791 = vshrl.u32 2475754826, %v1788
        %v1792 = vor.u32 %v1790, %v1791
        %v1793 = vshll.u32 2475754826, %v1787
        %v1794 = vshrl.u32 2131351028, %v1788
        %v1795 = vor.u32 %v1793, %v1794
        %v1796 = vshll.u32 2131351028, %v1787
        %v1797 = vshrl.u32 2102212464, %v1788
        %v1798 = vor.u32 %v1796, %v1797
        %v1799 = vshll.u32 2102212464, %v1787
        %v1800 = vshrl.u32 920167782, %v1788
        %v1801 = vor.u32 %v1799, %v1800
        %v1802 = vshll.u32 920167782, %v1787
        %v1803 = vshrl.u32 1326507024, %v1788
        %v1804 = vor.u32 %v1802, %v1803
        %vm1805 = vcmp.lt.s32.totalorder %v1786, 1
        %vm1806 = vcmp.lt.s32.totalorder %v1786, 2
        %vm1807 = vcmp.lt.s32.totalorder %v1786, 3
        %vm1808 = vcmp.lt.s32.totalorder %v1786, 4
        %v1809 = vsel %vm1805, %v1789, %v1792
        %v1810 = vsel %vm1808, %v1798, 2102212464
        %v1811 = vsel %vm1807, %v1795, %v1810
        %v1812 = vsel %vm1806, %v1809, %v1811
        %v1813 = vsel %vm1805, %v1792, %v1795
        %v1814 = vsel %vm1808, %v1801, 920167782
        %v1815 = vsel %vm1807, %v1798, %v1814
        %v1816 = vsel %vm1806, %v1813, %v1815
        %v1817 = vsel %vm1805, %v1795, %v1798
        %v1818 = vsel %vm1808, %v1804, 1326507024
        %v1819 = vsel %vm1807, %v1801, %v1818
        %v1820 = vsel %vm1806, %v1817, %v1819
        %v1821 = vshll.u32 %v1781, 8
        %v1822 = vmul.u32.u64.compose %v1821, %v1820
        %v1823 = vextract.low.u32 %v1822
        %v1824 = vextract.high.u32 %v1822
        %v1825 = vmul.u32.u64.compose %v1821, %v1816
        %v1826 = vextract.low.u32 %v1825
        %v1827 = vextract.high.u32 %v1825
        %v1828 = vmul.u32 %v1821, %v1812
        %v1829 = vadd.s32 %v1824, %v1826
        %vm1830 = vc.u32 %v1824, %v1826
        %v1831 = vadd.s32 %v1827, 1
        %v1832 = vsel %vm1830, %v1831, %v1827
        %v1833 = vadd.s32 %v1828, %v1832
        %v1834 = vadd.s32 %v1833, 536870912
        %v1835 = vshrl.u32 %v1834, 30
        %v1836 = vshll.u32 %v1835, 30
        %v1837 = vsub.s32 %v1833, %v1836
        %vm1838 = vcmp.lt.s32.totalorder %v1837, 0
        %v1839 = vsub.s32 0, %v1837
        %v1840 = vsel %vm1838, %v1839, %v1837
        %v1841 = vclz %v1840
        %v1842 = vsub.s32 %v1841, 2
        %vm1843 = vcmp.gt.s32.totalorder 0, %v1842
        %v1844 = vsel %vm1843, 0, %v1842
        %v1845 = vsub.s32 32, %v1844
        %v1846 = vshll.u32 %v1837, %v1844
        %v1847 = vshrl.u32 %v1829, %v1845
        %v1848 = vor.u32 %v1846, %v1847
        %v1849 = vsub.s32 4294967266, %v1844
        %v1850 = vadd.s32 %v1849, 127
        %v1851 = vshll.u32 %v1850, 23
        %v1852 = vor.u32 4788187, %v1851
        %v1853 = vand.u32 2147483647, %v1852
        %v1855 = vcvt.s32.f32 %v1848
        %v1856 = vmul.f32 %v1855, %v1853
        %v1857 = vxor.u32 %v1856, 2147483648
        %v1858 = vsel %vm1775, %v1857, %v1856
        %v1859 = vsub.s32 4, %v1835
        %v1860 = vsel %vm1775, %v1859, %v1835
        %v1861 = vsel %vm1774, %v1020, %v1858
        %v1862 = vsel %vm1774, 0, %v1860
        %v1863 = vcosq.f32.pop %v1861
        %v1864 = vsinq.f32.pop %v1861
        %vm1865 = vweird.f32 %v1020
        %v1866 = vadd.s32 %v1862, 3
        %v1867 = vand.u32 %v1866, 3
        %vm1868 = vcmp.lt.s32.totalorder %v1867, 2
        %vm1869 = vcmp.eq.s32.totalorder %v1867, 0
        %v1870 = vxor.u32 %v1864, 2147483648
        %v1871 = vsel %vm1869, %v1863, %v1870
        %vm1872 = vcmp.eq.s32.totalorder %v1867, 2
        %v1873 = vxor.u32 %v1863, 2147483648
        %v1874 = vsel %vm1872, %v1873, %v1864
        %v1875 = vsel %vm1868, %v1871, %v1874
        %v1876 = vsel %vm1865, nan, %v1875
        %v1877 = vand.u32 2147483647, %v1021
        %vm1878 = vcmp.le.f32.partialorder %v1877, 0.7853982
        %vm1879 = vcmp.lt.s32.totalorder %v1021, 0
        %v1880 = vand.u32 %v1021, 2139095040
        %v1881 = vshrl.u32 %v1880, 23
        %v1882 = vsub.s32 %v1881, 127
        %v1883 = vand.u32 2147483647, %v1021
        %v1884 = vand.u32 %v1883, 8388607
        %v1885 = vor.u32 %v1884, 8388608
        %v1886 = vsub.s32 0, %v1885
        %v1887 = vadd.s32 %v1882, 1
        %vm1888 = vcmp.gt.s32.totalorder %v1887, 0
        %v1889 = vsel %vm1888, %v1887, 0
        %v1890 = vshrl.u32 %v1889, 5
        %v1891 = vand.u32 %v1889, 31
        %v1892 = vsub.s32 32, %v1891
        %v1893 = vshrl.u32 683565275, %v1892
        %v1894 = vshll.u32 683565275, %v1891
        %v1895 = vshrl.u32 2475754826, %v1892
        %v1896 = vor.u32 %v1894, %v1895
        %v1897 = vshll.u32 2475754826, %v1891
        %v1898 = vshrl.u32 2131351028, %v1892
        %v1899 = vor.u32 %v1897, %v1898
        %v1900 = vshll.u32 2131351028, %v1891
        %v1901 = vshrl.u32 2102212464, %v1892
        %v1902 = vor.u32 %v1900, %v1901
        %v1903 = vshll.u32 2102212464, %v1891
        %v1904 = vshrl.u32 920167782, %v1892
        %v1905 = vor.u32 %v1903, %v1904
        %v1906 = vshll.u32 920167782, %v1891
        %v1907 = vshrl.u32 1326507024, %v1892
        %v1908 = vor.u32 %v1906, %v1907
        %vm1909 = vcmp.lt.s32.totalorder %v1890, 1
        %vm1910 = vcmp.lt.s32.totalorder %v1890, 2
        %vm1911 = vcmp.lt.s32.totalorder %v1890, 3
        %vm1912 = vcmp.lt.s32.totalorder %v1890, 4
        %v1913 = vsel %vm1909, %v1893, %v1896
        %v1914 = vsel %vm1912, %v1902, 2102212464
        %v1915 = vsel %vm1911, %v1899, %v1914
        %v1916 = vsel %vm1910, %v1913, %v1915
        %v1917 = vsel %vm1909, %v1896, %v1899
        %v1918 = vsel %vm1912, %v1905, 920167782
        %v1919 = vsel %vm1911, %v1902, %v1918
        %v1920 = vsel %vm1910, %v1917, %v1919
        %v1921 = vsel %vm1909, %v1899, %v1902
        %v1922 = vsel %vm1912, %v1908, 1326507024
        %v1923 = vsel %vm1911, %v1905, %v1922
        %v1924 = vsel %vm1910, %v1921, %v1923
        %v1925 = vshll.u32 %v1885, 8
        %v1926 = vmul.u32.u64.compose %v1925, %v1924
        %v1927 = vextract.low.u32 %v1926
        %v1928 = vextract.high.u32 %v1926
        %v1929 = vmul.u32.u64.compose %v1925, %v1920
        %v1930 = vextract.low.u32 %v1929
        %v1931 = vextract.high.u32 %v1929
        %v1932 = vmul.u32 %v1925, %v1916
        %v1933 = vadd.s32 %v1928, %v1930
        %vm1934 = vc.u32 %v1928, %v1930
        %v1935 = vadd.s32 %v1931, 1
        %v1936 = vsel %vm1934, %v1935, %v1931
        %v1937 = vadd.s32 %v1932, %v1936
        %v1938 = vadd.s32 %v1937, 536870912
        %v1939 = vshrl.u32 %v1938, 30
        %v1940 = vshll.u32 %v1939, 30
        %v1941 = vsub.s32 %v1937, %v1940
        %vm1942 = vcmp.lt.s32.totalorder %v1941, 0
        %v1943 = vsub.s32 0, %v1941
        %v1944 = vsel %vm1942, %v1943, %v1941
        %v1945 = vclz %v1944
        %v1946 = vsub.s32 %v1945, 2
        %vm1947 = vcmp.gt.s32.totalorder 0, %v1946
        %v1948 = vsel %vm1947, 0, %v1946
        %v1949 = vsub.s32 32, %v1948
        %v1950 = vshll.u32 %v1941, %v1948
        %v1951 = vshrl.u32 %v1933, %v1949
        %v1952 = vor.u32 %v1950, %v1951
        %v1953 = vsub.s32 4294967266, %v1948
        %v1954 = vadd.s32 %v1953, 127
        %v1955 = vshll.u32 %v1954, 23
        %v1956 = vor.u32 4788187, %v1955
        %v1957 = vand.u32 2147483647, %v1956
        %v1959 = vcvt.s32.f32 %v1952
        %v1960 = vmul.f32 %v1959, %v1957
        %v1961 = vxor.u32 %v1960, 2147483648
        %v1962 = vsel %vm1879, %v1961, %v1960
        %v1963 = vsub.s32 4, %v1939
        %v1964 = vsel %vm1879, %v1963, %v1939
        %v1965 = vsel %vm1878, %v1021, %v1962
        %v1966 = vsel %vm1878, 0, %v1964
        %v1967 = vcosq.f32.pop %v1965
        %v1968 = vsinq.f32.pop %v1965
        %vm1969 = vweird.f32 %v1021
        %v1970 = vadd.s32 %v1966, 3
        %v1971 = vand.u32 %v1970, 3
        %vm1972 = vcmp.lt.s32.totalorder %v1971, 2
        %vm1973 = vcmp.eq.s32.totalorder %v1971, 0
        %v1974 = vxor.u32 %v1968, 2147483648
        %v1975 = vsel %vm1973, %v1967, %v1974
        %vm1976 = vcmp.eq.s32.totalorder %v1971, 2
        %v1977 = vxor.u32 %v1967, 2147483648
        %v1978 = vsel %vm1976, %v1977, %v1968
        %v1979 = vsel %vm1972, %v1975, %v1978
        %v1980 = vsel %vm1969, nan, %v1979
        %v1981 = vand.u32 2147483647, %v1022
        %vm1982 = vcmp.le.f32.partialorder %v1981, 0.7853982
        %vm1983 = vcmp.lt.s32.totalorder %v1022, 0
        %v1984 = vand.u32 %v1022, 2139095040
        %v1985 = vshrl.u32 %v1984, 23
        %v1986 = vsub.s32 %v1985, 127
        %v1987 = vand.u32 2147483647, %v1022
        %v1988 = vand.u32 %v1987, 8388607
        %v1989 = vor.u32 %v1988, 8388608
        %v1990 = vsub.s32 0, %v1989
        %v1991 = vadd.s32 %v1986, 1
        %vm1992 = vcmp.gt.s32.totalorder %v1991, 0
        %v1993 = vsel %vm1992, %v1991, 0
        %v1994 = vshrl.u32 %v1993, 5
        %v1995 = vand.u32 %v1993, 31
        %v1996 = vsub.s32 32, %v1995
        %v1997 = vshrl.u32 683565275, %v1996
        %v1998 = vshll.u32 683565275, %v1995
        %v1999 = vshrl.u32 2475754826, %v1996
        %v2000 = vor.u32 %v1998, %v1999
        %v2001 = vshll.u32 2475754826, %v1995
        %v2002 = vshrl.u32 2131351028, %v1996
        %v2003 = vor.u32 %v2001, %v2002
        %v2004 = vshll.u32 2131351028, %v1995
        %v2005 = vshrl.u32 2102212464, %v1996
        %v2006 = vor.u32 %v2004, %v2005
        %v2007 = vshll.u32 2102212464, %v1995
        %v2008 = vshrl.u32 920167782, %v1996
        %v2009 = vor.u32 %v2007, %v2008
        %v2010 = vshll.u32 920167782, %v1995
        %v2011 = vshrl.u32 1326507024, %v1996
        %v2012 = vor.u32 %v2010, %v2011
        %vm2013 = vcmp.lt.s32.totalorder %v1994, 1
        %vm2014 = vcmp.lt.s32.totalorder %v1994, 2
        %vm2015 = vcmp.lt.s32.totalorder %v1994, 3
        %vm2016 = vcmp.lt.s32.totalorder %v1994, 4
        %v2017 = vsel %vm2013, %v1997, %v2000
        %v2018 = vsel %vm2016, %v2006, 2102212464
        %v2019 = vsel %vm2015, %v2003, %v2018
        %v2020 = vsel %vm2014, %v2017, %v2019
        %v2021 = vsel %vm2013, %v2000, %v2003
        %v2022 = vsel %vm2016, %v2009, 920167782
        %v2023 = vsel %vm2015, %v2006, %v2022
        %v2024 = vsel %vm2014, %v2021, %v2023
        %v2025 = vsel %vm2013, %v2003, %v2006
        %v2026 = vsel %vm2016, %v2012, 1326507024
        %v2027 = vsel %vm2015, %v2009, %v2026
        %v2028 = vsel %vm2014, %v2025, %v2027
        %v2029 = vshll.u32 %v1989, 8
        %v2030 = vmul.u32.u64.compose %v2029, %v2028
        %v2031 = vextract.low.u32 %v2030
        %v2032 = vextract.high.u32 %v2030
        %v2033 = vmul.u32.u64.compose %v2029, %v2024
        %v2034 = vextract.low.u32 %v2033
        %v2035 = vextract.high.u32 %v2033
        %v2036 = vmul.u32 %v2029, %v2020
        %v2037 = vadd.s32 %v2032, %v2034
        %vm2038 = vc.u32 %v2032, %v2034
        %v2039 = vadd.s32 %v2035, 1
        %v2040 = vsel %vm2038, %v2039, %v2035
        %v2041 = vadd.s32 %v2036, %v2040
        %v2042 = vadd.s32 %v2041, 536870912
        %v2043 = vshrl.u32 %v2042, 30
        %v2044 = vshll.u32 %v2043, 30
        %v2045 = vsub.s32 %v2041, %v2044
        %vm2046 = vcmp.lt.s32.totalorder %v2045, 0
        %v2047 = vsub.s32 0, %v2045
        %v2048 = vsel %vm2046, %v2047, %v2045
        %v2049 = vclz %v2048
        %v2050 = vsub.s32 %v2049, 2
        %vm2051 = vcmp.gt.s32.totalorder 0, %v2050
        %v2052 = vsel %vm2051, 0, %v2050
        %v2053 = vsub.s32 32, %v2052
        %v2054 = vshll.u32 %v2045, %v2052
        %v2055 = vshrl.u32 %v2037, %v2053
        %v2056 = vor.u32 %v2054, %v2055
        %v2057 = vsub.s32 4294967266, %v2052
        %v2058 = vadd.s32 %v2057, 127
        %v2059 = vshll.u32 %v2058, 23
        %v2060 = vor.u32 4788187, %v2059
        %v2061 = vand.u32 2147483647, %v2060
        %v2063 = vcvt.s32.f32 %v2056
        %v2064 = vmul.f32 %v2063, %v2061
        %v2065 = vxor.u32 %v2064, 2147483648
        %v2066 = vsel %vm1983, %v2065, %v2064
        %v2067 = vsub.s32 4, %v2043
        %v2068 = vsel %vm1983, %v2067, %v2043
        %v2069 = vsel %vm1982, %v1022, %v2066
        %v2070 = vsel %vm1982, 0, %v2068
        %v2071 = vcosq.f32.pop %v2069
        %v2072 = vsinq.f32.pop %v2069
        %vm2073 = vweird.f32 %v1022
        %v2074 = vadd.s32 %v2070, 3
        %v2075 = vand.u32 %v2074, 3
        %vm2076 = vcmp.lt.s32.totalorder %v2075, 2
        %vm2077 = vcmp.eq.s32.totalorder %v2075, 0
        %v2078 = vxor.u32 %v2072, 2147483648
        %v2079 = vsel %vm2077, %v2071, %v2078
        %vm2080 = vcmp.eq.s32.totalorder %v2075, 2
        %v2081 = vxor.u32 %v2071, 2147483648
        %v2082 = vsel %vm2080, %v2081, %v2072
        %v2083 = vsel %vm2076, %v2079, %v2082
        %v2084 = vsel %vm2073, nan, %v2083
        %v2085 = vand.u32 2147483647, %v1023
        %vm2086 = vcmp.le.f32.partialorder %v2085, 0.7853982
        %vm2087 = vcmp.lt.s32.totalorder %v1023, 0
        %v2088 = vand.u32 %v1023, 2139095040
        %v2089 = vshrl.u32 %v2088, 23
        %v2090 = vsub.s32 %v2089, 127
        %v2091 = vand.u32 2147483647, %v1023
        %v2092 = vand.u32 %v2091, 8388607
        %v2093 = vor.u32 %v2092, 8388608
        %v2094 = vsub.s32 0, %v2093
        %v2095 = vadd.s32 %v2090, 1
        %vm2096 = vcmp.gt.s32.totalorder %v2095, 0
        %v2097 = vsel %vm2096, %v2095, 0
        %v2098 = vshrl.u32 %v2097, 5
        %v2099 = vand.u32 %v2097, 31
        %v2100 = vsub.s32 32, %v2099
        %v2101 = vshrl.u32 683565275, %v2100
        %v2102 = vshll.u32 683565275, %v2099
        %v2103 = vshrl.u32 2475754826, %v2100
        %v2104 = vor.u32 %v2102, %v2103
        %v2105 = vshll.u32 2475754826, %v2099
        %v2106 = vshrl.u32 2131351028, %v2100
        %v2107 = vor.u32 %v2105, %v2106
        %v2108 = vshll.u32 2131351028, %v2099
        %v2109 = vshrl.u32 2102212464, %v2100
        %v2110 = vor.u32 %v2108, %v2109
        %v2111 = vshll.u32 2102212464, %v2099
        %v2112 = vshrl.u32 920167782, %v2100
        %v2113 = vor.u32 %v2111, %v2112
        %v2114 = vshll.u32 920167782, %v2099
        %v2115 = vshrl.u32 1326507024, %v2100
        %v2116 = vor.u32 %v2114, %v2115
        %vm2117 = vcmp.lt.s32.totalorder %v2098, 1
        %vm2118 = vcmp.lt.s32.totalorder %v2098, 2
        %vm2119 = vcmp.lt.s32.totalorder %v2098, 3
        %vm2120 = vcmp.lt.s32.totalorder %v2098, 4
        %v2121 = vsel %vm2117, %v2101, %v2104
        %v2122 = vsel %vm2120, %v2110, 2102212464
        %v2123 = vsel %vm2119, %v2107, %v2122
        %v2124 = vsel %vm2118, %v2121, %v2123
        %v2125 = vsel %vm2117, %v2104, %v2107
        %v2126 = vsel %vm2120, %v2113, 920167782
        %v2127 = vsel %vm2119, %v2110, %v2126
        %v2128 = vsel %vm2118, %v2125, %v2127
        %v2129 = vsel %vm2117, %v2107, %v2110
        %v2130 = vsel %vm2120, %v2116, 1326507024
        %v2131 = vsel %vm2119, %v2113, %v2130
        %v2132 = vsel %vm2118, %v2129, %v2131
        %v2133 = vshll.u32 %v2093, 8
        %v2134 = vmul.u32.u64.compose %v2133, %v2132
        %v2135 = vextract.low.u32 %v2134
        %v2136 = vextract.high.u32 %v2134
        %v2137 = vmul.u32.u64.compose %v2133, %v2128
        %v2138 = vextract.low.u32 %v2137
        %v2139 = vextract.high.u32 %v2137
        %v2140 = vmul.u32 %v2133, %v2124
        %v2141 = vadd.s32 %v2136, %v2138
        %vm2142 = vc.u32 %v2136, %v2138
        %v2143 = vadd.s32 %v2139, 1
        %v2144 = vsel %vm2142, %v2143, %v2139
        %v2145 = vadd.s32 %v2140, %v2144
        %v2146 = vadd.s32 %v2145, 536870912
        %v2147 = vshrl.u32 %v2146, 30
        %v2148 = vshll.u32 %v2147, 30
        %v2149 = vsub.s32 %v2145, %v2148
        %vm2150 = vcmp.lt.s32.totalorder %v2149, 0
        %v2151 = vsub.s32 0, %v2149
        %v2152 = vsel %vm2150, %v2151, %v2149
        %v2153 = vclz %v2152
        %v2154 = vsub.s32 %v2153, 2
        %vm2155 = vcmp.gt.s32.totalorder 0, %v2154
        %v2156 = vsel %vm2155, 0, %v2154
        %v2157 = vsub.s32 32, %v2156
        %v2158 = vshll.u32 %v2149, %v2156
        %v2159 = vshrl.u32 %v2141, %v2157
        %v2160 = vor.u32 %v2158, %v2159
        %v2161 = vsub.s32 4294967266, %v2156
        %v2162 = vadd.s32 %v2161, 127
        %v2163 = vshll.u32 %v2162, 23
        %v2164 = vor.u32 4788187, %v2163
        %v2165 = vand.u32 2147483647, %v2164
        %v2167 = vcvt.s32.f32 %v2160
        %v2168 = vmul.f32 %v2167, %v2165
        %v2169 = vxor.u32 %v2168, 2147483648
        %v2170 = vsel %vm2087, %v2169, %v2168
        %v2171 = vsub.s32 4, %v2147
        %v2172 = vsel %vm2087, %v2171, %v2147
        %v2173 = vsel %vm2086, %v1023, %v2170
        %v2174 = vsel %vm2086, 0, %v2172
        %v2175 = vcosq.f32.pop %v2173
        %v2176 = vsinq.f32.pop %v2173
        %vm2177 = vweird.f32 %v1023
        %v2178 = vadd.s32 %v2174, 3
        %v2179 = vand.u32 %v2178, 3
        %vm2180 = vcmp.lt.s32.totalorder %v2179, 2
        %vm2181 = vcmp.eq.s32.totalorder %v2179, 0
        %v2182 = vxor.u32 %v2176, 2147483648
        %v2183 = vsel %vm2181, %v2175, %v2182
        %vm2184 = vcmp.eq.s32.totalorder %v2179, 2
        %v2185 = vxor.u32 %v2175, 2147483648
        %v2186 = vsel %vm2184, %v2185, %v2176
        %v2187 = vsel %vm2180, %v2183, %v2186
        %v2188 = vsel %vm2177, nan, %v2187
        %v2189 = vand.u32 2147483647, %v1024
        %vm2190 = vcmp.le.f32.partialorder %v2189, 0.7853982
        %vm2191 = vcmp.lt.s32.totalorder %v1024, 0
        %v2192 = vand.u32 %v1024, 2139095040
        %v2193 = vshrl.u32 %v2192, 23
        %v2194 = vsub.s32 %v2193, 127
        %v2195 = vand.u32 2147483647, %v1024
        %v2196 = vand.u32 %v2195, 8388607
        %v2197 = vor.u32 %v2196, 8388608
        %v2198 = vsub.s32 0, %v2197
        %v2199 = vadd.s32 %v2194, 1
        %vm2200 = vcmp.gt.s32.totalorder %v2199, 0
        %v2201 = vsel %vm2200, %v2199, 0
        %v2202 = vshrl.u32 %v2201, 5
        %v2203 = vand.u32 %v2201, 31
        %v2204 = vsub.s32 32, %v2203
        %v2205 = vshrl.u32 683565275, %v2204
        %v2206 = vshll.u32 683565275, %v2203
        %v2207 = vshrl.u32 2475754826, %v2204
        %v2208 = vor.u32 %v2206, %v2207
        %v2209 = vshll.u32 2475754826, %v2203
        %v2210 = vshrl.u32 2131351028, %v2204
        %v2211 = vor.u32 %v2209, %v2210
        %v2212 = vshll.u32 2131351028, %v2203
        %v2213 = vshrl.u32 2102212464, %v2204
        %v2214 = vor.u32 %v2212, %v2213
        %v2215 = vshll.u32 2102212464, %v2203
        %v2216 = vshrl.u32 920167782, %v2204
        %v2217 = vor.u32 %v2215, %v2216
        %v2218 = vshll.u32 920167782, %v2203
        %v2219 = vshrl.u32 1326507024, %v2204
        %v2220 = vor.u32 %v2218, %v2219
        %vm2221 = vcmp.lt.s32.totalorder %v2202, 1
        %vm2222 = vcmp.lt.s32.totalorder %v2202, 2
        %vm2223 = vcmp.lt.s32.totalorder %v2202, 3
        %vm2224 = vcmp.lt.s32.totalorder %v2202, 4
        %v2225 = vsel %vm2221, %v2205, %v2208
        %v2226 = vsel %vm2224, %v2214, 2102212464
        %v2227 = vsel %vm2223, %v2211, %v2226
        %v2228 = vsel %vm2222, %v2225, %v2227
        %v2229 = vsel %vm2221, %v2208, %v2211
        %v2230 = vsel %vm2224, %v2217, 920167782
        %v2231 = vsel %vm2223, %v2214, %v2230
        %v2232 = vsel %vm2222, %v2229, %v2231
        %v2233 = vsel %vm2221, %v2211, %v2214
        %v2234 = vsel %vm2224, %v2220, 1326507024
        %v2235 = vsel %vm2223, %v2217, %v2234
        %v2236 = vsel %vm2222, %v2233, %v2235
        %v2237 = vshll.u32 %v2197, 8
        %v2238 = vmul.u32.u64.compose %v2237, %v2236
        %v2239 = vextract.low.u32 %v2238
        %v2240 = vextract.high.u32 %v2238
        %v2241 = vmul.u32.u64.compose %v2237, %v2232
        %v2242 = vextract.low.u32 %v2241
        %v2243 = vextract.high.u32 %v2241
        %v2244 = vmul.u32 %v2237, %v2228
        %v2245 = vadd.s32 %v2240, %v2242
        %vm2246 = vc.u32 %v2240, %v2242
        %v2247 = vadd.s32 %v2243, 1
        %v2248 = vsel %vm2246, %v2247, %v2243
        %v2249 = vadd.s32 %v2244, %v2248
        %v2250 = vadd.s32 %v2249, 536870912
        %v2251 = vshrl.u32 %v2250, 30
        %v2252 = vshll.u32 %v2251, 30
        %v2253 = vsub.s32 %v2249, %v2252
        %vm2254 = vcmp.lt.s32.totalorder %v2253, 0
        %v2255 = vsub.s32 0, %v2253
        %v2256 = vsel %vm2254, %v2255, %v2253
        %v2257 = vclz %v2256
        %v2258 = vsub.s32 %v2257, 2
        %vm2259 = vcmp.gt.s32.totalorder 0, %v2258
        %v2260 = vsel %vm2259, 0, %v2258
        %v2261 = vsub.s32 32, %v2260
        %v2262 = vshll.u32 %v2253, %v2260
        %v2263 = vshrl.u32 %v2245, %v2261
        %v2264 = vor.u32 %v2262, %v2263
        %v2265 = vsub.s32 4294967266, %v2260
        %v2266 = vadd.s32 %v2265, 127
        %v2267 = vshll.u32 %v2266, 23
        %v2268 = vor.u32 4788187, %v2267
        %v2269 = vand.u32 2147483647, %v2268
        %v2271 = vcvt.s32.f32 %v2264
        %v2272 = vmul.f32 %v2271, %v2269
        %v2273 = vxor.u32 %v2272, 2147483648
        %v2274 = vsel %vm2191, %v2273, %v2272
        %v2275 = vsub.s32 4, %v2251
        %v2276 = vsel %vm2191, %v2275, %v2251
        %v2277 = vsel %vm2190, %v1024, %v2274
        %v2278 = vsel %vm2190, 0, %v2276
        %v2279 = vcosq.f32.pop %v2277
        %v2280 = vsinq.f32.pop %v2277
        %vm2281 = vweird.f32 %v1024
        %v2282 = vadd.s32 %v2278, 3
        %v2283 = vand.u32 %v2282, 3
        %vm2284 = vcmp.lt.s32.totalorder %v2283, 2
        %vm2285 = vcmp.eq.s32.totalorder %v2283, 0
        %v2286 = vxor.u32 %v2280, 2147483648
        %v2287 = vsel %vm2285, %v2279, %v2286
        %vm2288 = vcmp.eq.s32.totalorder %v2283, 2
        %v2289 = vxor.u32 %v2279, 2147483648
        %v2290 = vsel %vm2288, %v2289, %v2280
        %v2291 = vsel %vm2284, %v2287, %v2290
        %v2292 = vsel %vm2281, nan, %v2291
        %v2293 = vand.u32 2147483647, %v1025
        %vm2294 = vcmp.le.f32.partialorder %v2293, 0.7853982
        %vm2295 = vcmp.lt.s32.totalorder %v1025, 0
        %v2296 = vand.u32 %v1025, 2139095040
        %v2297 = vshrl.u32 %v2296, 23
        %v2298 = vsub.s32 %v2297, 127
        %v2299 = vand.u32 2147483647, %v1025
        %v2300 = vand.u32 %v2299, 8388607
        %v2301 = vor.u32 %v2300, 8388608
        %v2302 = vsub.s32 0, %v2301
        %v2303 = vadd.s32 %v2298, 1
        %vm2304 = vcmp.gt.s32.totalorder %v2303, 0
        %v2305 = vsel %vm2304, %v2303, 0
        %v2306 = vshrl.u32 %v2305, 5
        %v2307 = vand.u32 %v2305, 31
        %v2308 = vsub.s32 32, %v2307
        %v2309 = vshrl.u32 683565275, %v2308
        %v2310 = vshll.u32 683565275, %v2307
        %v2311 = vshrl.u32 2475754826, %v2308
        %v2312 = vor.u32 %v2310, %v2311
        %v2313 = vshll.u32 2475754826, %v2307
        %v2314 = vshrl.u32 2131351028, %v2308
        %v2315 = vor.u32 %v2313, %v2314
        %v2316 = vshll.u32 2131351028, %v2307
        %v2317 = vshrl.u32 2102212464, %v2308
        %v2318 = vor.u32 %v2316, %v2317
        %v2319 = vshll.u32 2102212464, %v2307
        %v2320 = vshrl.u32 920167782, %v2308
        %v2321 = vor.u32 %v2319, %v2320
        %v2322 = vshll.u32 920167782, %v2307
        %v2323 = vshrl.u32 1326507024, %v2308
        %v2324 = vor.u32 %v2322, %v2323
        %vm2325 = vcmp.lt.s32.totalorder %v2306, 1
        %vm2326 = vcmp.lt.s32.totalorder %v2306, 2
        %vm2327 = vcmp.lt.s32.totalorder %v2306, 3
        %vm2328 = vcmp.lt.s32.totalorder %v2306, 4
        %v2329 = vsel %vm2325, %v2309, %v2312
        %v2330 = vsel %vm2328, %v2318, 2102212464
        %v2331 = vsel %vm2327, %v2315, %v2330
        %v2332 = vsel %vm2326, %v2329, %v2331
        %v2333 = vsel %vm2325, %v2312, %v2315
        %v2334 = vsel %vm2328, %v2321, 920167782
        %v2335 = vsel %vm2327, %v2318, %v2334
        %v2336 = vsel %vm2326, %v2333, %v2335
        %v2337 = vsel %vm2325, %v2315, %v2318
        %v2338 = vsel %vm2328, %v2324, 1326507024
        %v2339 = vsel %vm2327, %v2321, %v2338
        %v2340 = vsel %vm2326, %v2337, %v2339
        %v2341 = vshll.u32 %v2301, 8
        %v2342 = vmul.u32.u64.compose %v2341, %v2340
        %v2343 = vextract.low.u32 %v2342
        %v2344 = vextract.high.u32 %v2342
        %v2345 = vmul.u32.u64.compose %v2341, %v2336
        %v2346 = vextract.low.u32 %v2345
        %v2347 = vextract.high.u32 %v2345
        %v2348 = vmul.u32 %v2341, %v2332
        %v2349 = vadd.s32 %v2344, %v2346
        %vm2350 = vc.u32 %v2344, %v2346
        %v2351 = vadd.s32 %v2347, 1
        %v2352 = vsel %vm2350, %v2351, %v2347
        %v2353 = vadd.s32 %v2348, %v2352
        %v2354 = vadd.s32 %v2353, 536870912
        %v2355 = vshrl.u32 %v2354, 30
        %v2356 = vshll.u32 %v2355, 30
        %v2357 = vsub.s32 %v2353, %v2356
        %vm2358 = vcmp.lt.s32.totalorder %v2357, 0
        %v2359 = vsub.s32 0, %v2357
        %v2360 = vsel %vm2358, %v2359, %v2357
        %v2361 = vclz %v2360
        %v2362 = vsub.s32 %v2361, 2
        %vm2363 = vcmp.gt.s32.totalorder 0, %v2362
        %v2364 = vsel %vm2363, 0, %v2362
        %v2365 = vsub.s32 32, %v2364
        %v2366 = vshll.u32 %v2357, %v2364
        %v2367 = vshrl.u32 %v2349, %v2365
        %v2368 = vor.u32 %v2366, %v2367
        %v2369 = vsub.s32 4294967266, %v2364
        %v2370 = vadd.s32 %v2369, 127
        %v2371 = vshll.u32 %v2370, 23
        %v2372 = vor.u32 4788187, %v2371
        %v2373 = vand.u32 2147483647, %v2372
        %v2375 = vcvt.s32.f32 %v2368
        %v2376 = vmul.f32 %v2375, %v2373
        %v2377 = vxor.u32 %v2376, 2147483648
        %v2378 = vsel %vm2295, %v2377, %v2376
        %v2379 = vsub.s32 4, %v2355
        %v2380 = vsel %vm2295, %v2379, %v2355
        %v2381 = vsel %vm2294, %v1025, %v2378
        %v2382 = vsel %vm2294, 0, %v2380
        %v2383 = vcosq.f32.pop %v2381
        %v2384 = vsinq.f32.pop %v2381
        %vm2385 = vweird.f32 %v1025
        %v2386 = vadd.s32 %v2382, 3
        %v2387 = vand.u32 %v2386, 3
        %vm2388 = vcmp.lt.s32.totalorder %v2387, 2
        %vm2389 = vcmp.eq.s32.totalorder %v2387, 0
        %v2390 = vxor.u32 %v2384, 2147483648
        %v2391 = vsel %vm2389, %v2383, %v2390
        %vm2392 = vcmp.eq.s32.totalorder %v2387, 2
        %v2393 = vxor.u32 %v2383, 2147483648
        %v2394 = vsel %vm2392, %v2393, %v2384
        %v2395 = vsel %vm2388, %v2391, %v2394
        %v2396 = vsel %vm2385, nan, %v2395
        %v2397 = vand.u32 2147483647, %v1026
        %vm2398 = vcmp.le.f32.partialorder %v2397, 0.7853982
        %vm2399 = vcmp.lt.s32.totalorder %v1026, 0
        %v2400 = vand.u32 %v1026, 2139095040
        %v2401 = vshrl.u32 %v2400, 23
        %v2402 = vsub.s32 %v2401, 127
        %v2403 = vand.u32 2147483647, %v1026
        %v2404 = vand.u32 %v2403, 8388607
        %v2405 = vor.u32 %v2404, 8388608
        %v2406 = vsub.s32 0, %v2405
        %v2407 = vadd.s32 %v2402, 1
        %vm2408 = vcmp.gt.s32.totalorder %v2407, 0
        %v2409 = vsel %vm2408, %v2407, 0
        %v2410 = vshrl.u32 %v2409, 5
        %v2411 = vand.u32 %v2409, 31
        %v2412 = vsub.s32 32, %v2411
        %v2413 = vshrl.u32 683565275, %v2412
        %v2414 = vshll.u32 683565275, %v2411
        %v2415 = vshrl.u32 2475754826, %v2412
        %v2416 = vor.u32 %v2414, %v2415
        %v2417 = vshll.u32 2475754826, %v2411
        %v2418 = vshrl.u32 2131351028, %v2412
        %v2419 = vor.u32 %v2417, %v2418
        %v2420 = vshll.u32 2131351028, %v2411
        %v2421 = vshrl.u32 2102212464, %v2412
        %v2422 = vor.u32 %v2420, %v2421
        %v2423 = vshll.u32 2102212464, %v2411
        %v2424 = vshrl.u32 920167782, %v2412
        %v2425 = vor.u32 %v2423, %v2424
        %v2426 = vshll.u32 920167782, %v2411
        %v2427 = vshrl.u32 1326507024, %v2412
        %v2428 = vor.u32 %v2426, %v2427
        %vm2429 = vcmp.lt.s32.totalorder %v2410, 1
        %vm2430 = vcmp.lt.s32.totalorder %v2410, 2
        %vm2431 = vcmp.lt.s32.totalorder %v2410, 3
        %vm2432 = vcmp.lt.s32.totalorder %v2410, 4
        %v2433 = vsel %vm2429, %v2413, %v2416
        %v2434 = vsel %vm2432, %v2422, 2102212464
        %v2435 = vsel %vm2431, %v2419, %v2434
        %v2436 = vsel %vm2430, %v2433, %v2435
        %v2437 = vsel %vm2429, %v2416, %v2419
        %v2438 = vsel %vm2432, %v2425, 920167782
        %v2439 = vsel %vm2431, %v2422, %v2438
        %v2440 = vsel %vm2430, %v2437, %v2439
        %v2441 = vsel %vm2429, %v2419, %v2422
        %v2442 = vsel %vm2432, %v2428, 1326507024
        %v2443 = vsel %vm2431, %v2425, %v2442
        %v2444 = vsel %vm2430, %v2441, %v2443
        %v2445 = vshll.u32 %v2405, 8
        %v2446 = vmul.u32.u64.compose %v2445, %v2444
        %v2447 = vextract.low.u32 %v2446
        %v2448 = vextract.high.u32 %v2446
        %v2449 = vmul.u32.u64.compose %v2445, %v2440
        %v2450 = vextract.low.u32 %v2449
        %v2451 = vextract.high.u32 %v2449
        %v2452 = vmul.u32 %v2445, %v2436
        %v2453 = vadd.s32 %v2448, %v2450
        %vm2454 = vc.u32 %v2448, %v2450
        %v2455 = vadd.s32 %v2451, 1
        %v2456 = vsel %vm2454, %v2455, %v2451
        %v2457 = vadd.s32 %v2452, %v2456
        %v2458 = vadd.s32 %v2457, 536870912
        %v2459 = vshrl.u32 %v2458, 30
        %v2460 = vshll.u32 %v2459, 30
        %v2461 = vsub.s32 %v2457, %v2460
        %vm2462 = vcmp.lt.s32.totalorder %v2461, 0
        %v2463 = vsub.s32 0, %v2461
        %v2464 = vsel %vm2462, %v2463, %v2461
        %v2465 = vclz %v2464
        %v2466 = vsub.s32 %v2465, 2
        %vm2467 = vcmp.gt.s32.totalorder 0, %v2466
        %v2468 = vsel %vm2467, 0, %v2466
        %v2469 = vsub.s32 32, %v2468
        %v2470 = vshll.u32 %v2461, %v2468
        %v2471 = vshrl.u32 %v2453, %v2469
        %v2472 = vor.u32 %v2470, %v2471
        %v2473 = vsub.s32 4294967266, %v2468
        %v2474 = vadd.s32 %v2473, 127
        %v2475 = vshll.u32 %v2474, 23
        %v2476 = vor.u32 4788187, %v2475
        %v2477 = vand.u32 2147483647, %v2476
        %v2479 = vcvt.s32.f32 %v2472
        %v2480 = vmul.f32 %v2479, %v2477
        %v2481 = vxor.u32 %v2480, 2147483648
        %v2482 = vsel %vm2399, %v2481, %v2480
        %v2483 = vsub.s32 4, %v2459
        %v2484 = vsel %vm2399, %v2483, %v2459
        %v2485 = vsel %vm2398, %v1026, %v2482
        %v2486 = vsel %vm2398, 0, %v2484
        %v2487 = vcosq.f32.pop %v2485
        %v2488 = vsinq.f32.pop %v2485
        %vm2489 = vweird.f32 %v1026
        %v2490 = vadd.s32 %v2486, 3
        %v2491 = vand.u32 %v2490, 3
        %vm2492 = vcmp.lt.s32.totalorder %v2491, 2
        %vm2493 = vcmp.eq.s32.totalorder %v2491, 0
        %v2494 = vxor.u32 %v2488, 2147483648
        %v2495 = vsel %vm2493, %v2487, %v2494
        %vm2496 = vcmp.eq.s32.totalorder %v2491, 2
        %v2497 = vxor.u32 %v2487, 2147483648
        %v2498 = vsel %vm2496, %v2497, %v2488
        %v2499 = vsel %vm2492, %v2495, %v2498
        %v2500 = vsel %vm2489, nan, %v2499
        %v2501 = vand.u32 2147483647, %v1027
        %vm2502 = vcmp.le.f32.partialorder %v2501, 0.7853982
        %vm2503 = vcmp.lt.s32.totalorder %v1027, 0
        %v2504 = vand.u32 %v1027, 2139095040
        %v2505 = vshrl.u32 %v2504, 23
        %v2506 = vsub.s32 %v2505, 127
        %v2507 = vand.u32 2147483647, %v1027
        %v2508 = vand.u32 %v2507, 8388607
        %v2509 = vor.u32 %v2508, 8388608
        %v2510 = vsub.s32 0, %v2509
        %v2511 = vadd.s32 %v2506, 1
        %vm2512 = vcmp.gt.s32.totalorder %v2511, 0
        %v2513 = vsel %vm2512, %v2511, 0
        %v2514 = vshrl.u32 %v2513, 5
        %v2515 = vand.u32 %v2513, 31
        %v2516 = vsub.s32 32, %v2515
        %v2517 = vshrl.u32 683565275, %v2516
        %v2518 = vshll.u32 683565275, %v2515
        %v2519 = vshrl.u32 2475754826, %v2516
        %v2520 = vor.u32 %v2518, %v2519
        %v2521 = vshll.u32 2475754826, %v2515
        %v2522 = vshrl.u32 2131351028, %v2516
        %v2523 = vor.u32 %v2521, %v2522
        %v2524 = vshll.u32 2131351028, %v2515
        %v2525 = vshrl.u32 2102212464, %v2516
        %v2526 = vor.u32 %v2524, %v2525
        %v2527 = vshll.u32 2102212464, %v2515
        %v2528 = vshrl.u32 920167782, %v2516
        %v2529 = vor.u32 %v2527, %v2528
        %v2530 = vshll.u32 920167782, %v2515
        %v2531 = vshrl.u32 1326507024, %v2516
        %v2532 = vor.u32 %v2530, %v2531
        %vm2533 = vcmp.lt.s32.totalorder %v2514, 1
        %vm2534 = vcmp.lt.s32.totalorder %v2514, 2
        %vm2535 = vcmp.lt.s32.totalorder %v2514, 3
        %vm2536 = vcmp.lt.s32.totalorder %v2514, 4
        %v2537 = vsel %vm2533, %v2517, %v2520
        %v2538 = vsel %vm2536, %v2526, 2102212464
        %v2539 = vsel %vm2535, %v2523, %v2538
        %v2540 = vsel %vm2534, %v2537, %v2539
        %v2541 = vsel %vm2533, %v2520, %v2523
        %v2542 = vsel %vm2536, %v2529, 920167782
        %v2543 = vsel %vm2535, %v2526, %v2542
        %v2544 = vsel %vm2534, %v2541, %v2543
        %v2545 = vsel %vm2533, %v2523, %v2526
        %v2546 = vsel %vm2536, %v2532, 1326507024
        %v2547 = vsel %vm2535, %v2529, %v2546
        %v2548 = vsel %vm2534, %v2545, %v2547
        %v2549 = vshll.u32 %v2509, 8
        %v2550 = vmul.u32.u64.compose %v2549, %v2548
        %v2551 = vextract.low.u32 %v2550
        %v2552 = vextract.high.u32 %v2550
        %v2553 = vmul.u32.u64.compose %v2549, %v2544
        %v2554 = vextract.low.u32 %v2553
        %v2555 = vextract.high.u32 %v2553
        %v2556 = vmul.u32 %v2549, %v2540
        %v2557 = vadd.s32 %v2552, %v2554
        %vm2558 = vc.u32 %v2552, %v2554
        %v2559 = vadd.s32 %v2555, 1
        %v2560 = vsel %vm2558, %v2559, %v2555
        %v2561 = vadd.s32 %v2556, %v2560
        %v2562 = vadd.s32 %v2561, 536870912
        %v2563 = vshrl.u32 %v2562, 30
        %v2564 = vshll.u32 %v2563, 30
        %v2565 = vsub.s32 %v2561, %v2564
        %vm2566 = vcmp.lt.s32.totalorder %v2565, 0
        %v2567 = vsub.s32 0, %v2565
        %v2568 = vsel %vm2566, %v2567, %v2565
        %v2569 = vclz %v2568
        %v2570 = vsub.s32 %v2569, 2
        %vm2571 = vcmp.gt.s32.totalorder 0, %v2570
        %v2572 = vsel %vm2571, 0, %v2570
        %v2573 = vsub.s32 32, %v2572
        %v2574 = vshll.u32 %v2565, %v2572
        %v2575 = vshrl.u32 %v2557, %v2573
        %v2576 = vor.u32 %v2574, %v2575
        %v2577 = vsub.s32 4294967266, %v2572
        %v2578 = vadd.s32 %v2577, 127
        %v2579 = vshll.u32 %v2578, 23
        %v2580 = vor.u32 4788187, %v2579
        %v2581 = vand.u32 2147483647, %v2580
        %v2583 = vcvt.s32.f32 %v2576
        %v2584 = vmul.f32 %v2583, %v2581
        %v2585 = vxor.u32 %v2584, 2147483648
        %v2586 = vsel %vm2503, %v2585, %v2584
        %v2587 = vsub.s32 4, %v2563
        %v2588 = vsel %vm2503, %v2587, %v2563
        %v2589 = vsel %vm2502, %v1027, %v2586
        %v2590 = vsel %vm2502, 0, %v2588
        %v2591 = vcosq.f32.pop %v2589
        %v2592 = vsinq.f32.pop %v2589
        %vm2593 = vweird.f32 %v1027
        %v2594 = vadd.s32 %v2590, 3
        %v2595 = vand.u32 %v2594, 3
        %vm2596 = vcmp.lt.s32.totalorder %v2595, 2
        %vm2597 = vcmp.eq.s32.totalorder %v2595, 0
        %v2598 = vxor.u32 %v2592, 2147483648
        %v2599 = vsel %vm2597, %v2591, %v2598
        %vm2600 = vcmp.eq.s32.totalorder %v2595, 2
        %v2601 = vxor.u32 %v2591, 2147483648
        %v2602 = vsel %vm2600, %v2601, %v2592
        %v2603 = vsel %vm2596, %v2599, %v2602
        %v2604 = vsel %vm2593, nan, %v2603
        %v2605 = vand.u32 2147483647, %v1028
        %vm2606 = vcmp.le.f32.partialorder %v2605, 0.7853982
        %vm2607 = vcmp.lt.s32.totalorder %v1028, 0
        %v2608 = vand.u32 %v1028, 2139095040
        %v2609 = vshrl.u32 %v2608, 23
        %v2610 = vsub.s32 %v2609, 127
        %v2611 = vand.u32 2147483647, %v1028
        %v2612 = vand.u32 %v2611, 8388607
        %v2613 = vor.u32 %v2612, 8388608
        %v2614 = vsub.s32 0, %v2613
        %v2615 = vadd.s32 %v2610, 1
        %vm2616 = vcmp.gt.s32.totalorder %v2615, 0
        %v2617 = vsel %vm2616, %v2615, 0
        %v2618 = vshrl.u32 %v2617, 5
        %v2619 = vand.u32 %v2617, 31
        %v2620 = vsub.s32 32, %v2619
        %v2621 = vshrl.u32 683565275, %v2620
        %v2622 = vshll.u32 683565275, %v2619
        %v2623 = vshrl.u32 2475754826, %v2620
        %v2624 = vor.u32 %v2622, %v2623
        %v2625 = vshll.u32 2475754826, %v2619
        %v2626 = vshrl.u32 2131351028, %v2620
        %v2627 = vor.u32 %v2625, %v2626
        %v2628 = vshll.u32 2131351028, %v2619
        %v2629 = vshrl.u32 2102212464, %v2620
        %v2630 = vor.u32 %v2628, %v2629
        %v2631 = vshll.u32 2102212464, %v2619
        %v2632 = vshrl.u32 920167782, %v2620
        %v2633 = vor.u32 %v2631, %v2632
        %v2634 = vshll.u32 920167782, %v2619
        %v2635 = vshrl.u32 1326507024, %v2620
        %v2636 = vor.u32 %v2634, %v2635
        %vm2637 = vcmp.lt.s32.totalorder %v2618, 1
        %vm2638 = vcmp.lt.s32.totalorder %v2618, 2
        %vm2639 = vcmp.lt.s32.totalorder %v2618, 3
        %vm2640 = vcmp.lt.s32.totalorder %v2618, 4
        %v2641 = vsel %vm2637, %v2621, %v2624
        %v2642 = vsel %vm2640, %v2630, 2102212464
        %v2643 = vsel %vm2639, %v2627, %v2642
        %v2644 = vsel %vm2638, %v2641, %v2643
        %v2645 = vsel %vm2637, %v2624, %v2627
        %v2646 = vsel %vm2640, %v2633, 920167782
        %v2647 = vsel %vm2639, %v2630, %v2646
        %v2648 = vsel %vm2638, %v2645, %v2647
        %v2649 = vsel %vm2637, %v2627, %v2630
        %v2650 = vsel %vm2640, %v2636, 1326507024
        %v2651 = vsel %vm2639, %v2633, %v2650
        %v2652 = vsel %vm2638, %v2649, %v2651
        %v2653 = vshll.u32 %v2613, 8
        %v2654 = vmul.u32.u64.compose %v2653, %v2652
        %v2655 = vextract.low.u32 %v2654
        %v2656 = vextract.high.u32 %v2654
        %v2657 = vmul.u32.u64.compose %v2653, %v2648
        %v2658 = vextract.low.u32 %v2657
        %v2659 = vextract.high.u32 %v2657
        %v2660 = vmul.u32 %v2653, %v2644
        %v2661 = vadd.s32 %v2656, %v2658
        %vm2662 = vc.u32 %v2656, %v2658
        %v2663 = vadd.s32 %v2659, 1
        %v2664 = vsel %vm2662, %v2663, %v2659
        %v2665 = vadd.s32 %v2660, %v2664
        %v2666 = vadd.s32 %v2665, 536870912
        %v2667 = vshrl.u32 %v2666, 30
        %v2668 = vshll.u32 %v2667, 30
        %v2669 = vsub.s32 %v2665, %v2668
        %vm2670 = vcmp.lt.s32.totalorder %v2669, 0
        %v2671 = vsub.s32 0, %v2669
        %v2672 = vsel %vm2670, %v2671, %v2669
        %v2673 = vclz %v2672
        %v2674 = vsub.s32 %v2673, 2
        %vm2675 = vcmp.gt.s32.totalorder 0, %v2674
        %v2676 = vsel %vm2675, 0, %v2674
        %v2677 = vsub.s32 32, %v2676
        %v2678 = vshll.u32 %v2669, %v2676
        %v2679 = vshrl.u32 %v2661, %v2677
        %v2680 = vor.u32 %v2678, %v2679
        %v2681 = vsub.s32 4294967266, %v2676
        %v2682 = vadd.s32 %v2681, 127
        %v2683 = vshll.u32 %v2682, 23
        %v2684 = vor.u32 4788187, %v2683
        %v2685 = vand.u32 2147483647, %v2684
        %v2687 = vcvt.s32.f32 %v2680
        %v2688 = vmul.f32 %v2687, %v2685
        %v2689 = vxor.u32 %v2688, 2147483648
        %v2690 = vsel %vm2607, %v2689, %v2688
        %v2691 = vsub.s32 4, %v2667
        %v2692 = vsel %vm2607, %v2691, %v2667
        %v2693 = vsel %vm2606, %v1028, %v2690
        %v2694 = vsel %vm2606, 0, %v2692
        %v2695 = vcosq.f32.pop %v2693
        %v2696 = vsinq.f32.pop %v2693
        %vm2697 = vweird.f32 %v1028
        %v2698 = vadd.s32 %v2694, 3
        %v2699 = vand.u32 %v2698, 3
        %vm2700 = vcmp.lt.s32.totalorder %v2699, 2
        %vm2701 = vcmp.eq.s32.totalorder %v2699, 0
        %v2702 = vxor.u32 %v2696, 2147483648
        %v2703 = vsel %vm2701, %v2695, %v2702
        %vm2704 = vcmp.eq.s32.totalorder %v2699, 2
        %v2705 = vxor.u32 %v2695, 2147483648
        %v2706 = vsel %vm2704, %v2705, %v2696
        %v2707 = vsel %vm2700, %v2703, %v2706
        %v2708 = vsel %vm2697, nan, %v2707
        %v2709 = vand.u32 2147483647, %v1029
        %vm2710 = vcmp.le.f32.partialorder %v2709, 0.7853982
        %vm2711 = vcmp.lt.s32.totalorder %v1029, 0
        %v2712 = vand.u32 %v1029, 2139095040
        %v2713 = vshrl.u32 %v2712, 23
        %v2714 = vsub.s32 %v2713, 127
        %v2715 = vand.u32 2147483647, %v1029
        %v2716 = vand.u32 %v2715, 8388607
        %v2717 = vor.u32 %v2716, 8388608
        %v2718 = vsub.s32 0, %v2717
        %v2719 = vadd.s32 %v2714, 1
        %vm2720 = vcmp.gt.s32.totalorder %v2719, 0
        %v2721 = vsel %vm2720, %v2719, 0
        %v2722 = vshrl.u32 %v2721, 5
        %v2723 = vand.u32 %v2721, 31
        %v2724 = vsub.s32 32, %v2723
        %v2725 = vshrl.u32 683565275, %v2724
        %v2726 = vshll.u32 683565275, %v2723
        %v2727 = vshrl.u32 2475754826, %v2724
        %v2728 = vor.u32 %v2726, %v2727
        %v2729 = vshll.u32 2475754826, %v2723
        %v2730 = vshrl.u32 2131351028, %v2724
        %v2731 = vor.u32 %v2729, %v2730
        %v2732 = vshll.u32 2131351028, %v2723
        %v2733 = vshrl.u32 2102212464, %v2724
        %v2734 = vor.u32 %v2732, %v2733
        %v2735 = vshll.u32 2102212464, %v2723
        %v2736 = vshrl.u32 920167782, %v2724
        %v2737 = vor.u32 %v2735, %v2736
        %v2738 = vshll.u32 920167782, %v2723
        %v2739 = vshrl.u32 1326507024, %v2724
        %v2740 = vor.u32 %v2738, %v2739
        %vm2741 = vcmp.lt.s32.totalorder %v2722, 1
        %vm2742 = vcmp.lt.s32.totalorder %v2722, 2
        %vm2743 = vcmp.lt.s32.totalorder %v2722, 3
        %vm2744 = vcmp.lt.s32.totalorder %v2722, 4
        %v2745 = vsel %vm2741, %v2725, %v2728
        %v2746 = vsel %vm2744, %v2734, 2102212464
        %v2747 = vsel %vm2743, %v2731, %v2746
        %v2748 = vsel %vm2742, %v2745, %v2747
        %v2749 = vsel %vm2741, %v2728, %v2731
        %v2750 = vsel %vm2744, %v2737, 920167782
        %v2751 = vsel %vm2743, %v2734, %v2750
        %v2752 = vsel %vm2742, %v2749, %v2751
        %v2753 = vsel %vm2741, %v2731, %v2734
        %v2754 = vsel %vm2744, %v2740, 1326507024
        %v2755 = vsel %vm2743, %v2737, %v2754
        %v2756 = vsel %vm2742, %v2753, %v2755
        %v2757 = vshll.u32 %v2717, 8
        %v2758 = vmul.u32.u64.compose %v2757, %v2756
        %v2759 = vextract.low.u32 %v2758
        %v2760 = vextract.high.u32 %v2758
        %v2761 = vmul.u32.u64.compose %v2757, %v2752
        %v2762 = vextract.low.u32 %v2761
        %v2763 = vextract.high.u32 %v2761
        %v2764 = vmul.u32 %v2757, %v2748
        %v2765 = vadd.s32 %v2760, %v2762
        %vm2766 = vc.u32 %v2760, %v2762
        %v2767 = vadd.s32 %v2763, 1
        %v2768 = vsel %vm2766, %v2767, %v2763
        %v2769 = vadd.s32 %v2764, %v2768
        %v2770 = vadd.s32 %v2769, 536870912
        %v2771 = vshrl.u32 %v2770, 30
        %v2772 = vshll.u32 %v2771, 30
        %v2773 = vsub.s32 %v2769, %v2772
        %vm2774 = vcmp.lt.s32.totalorder %v2773, 0
        %v2775 = vsub.s32 0, %v2773
        %v2776 = vsel %vm2774, %v2775, %v2773
        %v2777 = vclz %v2776
        %v2778 = vsub.s32 %v2777, 2
        %vm2779 = vcmp.gt.s32.totalorder 0, %v2778
        %v2780 = vsel %vm2779, 0, %v2778
        %v2781 = vsub.s32 32, %v2780
        %v2782 = vshll.u32 %v2773, %v2780
        %v2783 = vshrl.u32 %v2765, %v2781
        %v2784 = vor.u32 %v2782, %v2783
        %v2785 = vsub.s32 4294967266, %v2780
        %v2786 = vadd.s32 %v2785, 127
        %v2787 = vshll.u32 %v2786, 23
        %v2788 = vor.u32 4788187, %v2787
        %v2789 = vand.u32 2147483647, %v2788
        %v2791 = vcvt.s32.f32 %v2784
        %v2792 = vmul.f32 %v2791, %v2789
        %v2793 = vxor.u32 %v2792, 2147483648
        %v2794 = vsel %vm2711, %v2793, %v2792
        %v2795 = vsub.s32 4, %v2771
        %v2796 = vsel %vm2711, %v2795, %v2771
        %v2797 = vsel %vm2710, %v1029, %v2794
        %v2798 = vsel %vm2710, 0, %v2796
        %v2799 = vcosq.f32.pop %v2797
        %v2800 = vsinq.f32.pop %v2797
        %vm2801 = vweird.f32 %v1029
        %v2802 = vadd.s32 %v2798, 3
        %v2803 = vand.u32 %v2802, 3
        %vm2804 = vcmp.lt.s32.totalorder %v2803, 2
        %vm2805 = vcmp.eq.s32.totalorder %v2803, 0
        %v2806 = vxor.u32 %v2800, 2147483648
        %v2807 = vsel %vm2805, %v2799, %v2806
        %vm2808 = vcmp.eq.s32.totalorder %v2803, 2
        %v2809 = vxor.u32 %v2799, 2147483648
        %v2810 = vsel %vm2808, %v2809, %v2800
        %v2811 = vsel %vm2804, %v2807, %v2810
        %v2812 = vsel %vm2801, nan, %v2811
        %v2813 = vand.u32 2147483647, %v1030
        %vm2814 = vcmp.le.f32.partialorder %v2813, 0.7853982
        %vm2815 = vcmp.lt.s32.totalorder %v1030, 0
        %v2816 = vand.u32 %v1030, 2139095040
        %v2817 = vshrl.u32 %v2816, 23
        %v2818 = vsub.s32 %v2817, 127
        %v2819 = vand.u32 2147483647, %v1030
        %v2820 = vand.u32 %v2819, 8388607
        %v2821 = vor.u32 %v2820, 8388608
        %v2822 = vsub.s32 0, %v2821
        %v2823 = vadd.s32 %v2818, 1
        %vm2824 = vcmp.gt.s32.totalorder %v2823, 0
        %v2825 = vsel %vm2824, %v2823, 0
        %v2826 = vshrl.u32 %v2825, 5
        %v2827 = vand.u32 %v2825, 31
        %v2828 = vsub.s32 32, %v2827
        %v2829 = vshrl.u32 683565275, %v2828
        %v2830 = vshll.u32 683565275, %v2827
        %v2831 = vshrl.u32 2475754826, %v2828
        %v2832 = vor.u32 %v2830, %v2831
        %v2833 = vshll.u32 2475754826, %v2827
        %v2834 = vshrl.u32 2131351028, %v2828
        %v2835 = vor.u32 %v2833, %v2834
        %v2836 = vshll.u32 2131351028, %v2827
        %v2837 = vshrl.u32 2102212464, %v2828
        %v2838 = vor.u32 %v2836, %v2837
        %v2839 = vshll.u32 2102212464, %v2827
        %v2840 = vshrl.u32 920167782, %v2828
        %v2841 = vor.u32 %v2839, %v2840
        %v2842 = vshll.u32 920167782, %v2827
        %v2843 = vshrl.u32 1326507024, %v2828
        %v2844 = vor.u32 %v2842, %v2843
        %vm2845 = vcmp.lt.s32.totalorder %v2826, 1
        %vm2846 = vcmp.lt.s32.totalorder %v2826, 2
        %vm2847 = vcmp.lt.s32.totalorder %v2826, 3
        %vm2848 = vcmp.lt.s32.totalorder %v2826, 4
        %v2849 = vsel %vm2845, %v2829, %v2832
        %v2850 = vsel %vm2848, %v2838, 2102212464
        %v2851 = vsel %vm2847, %v2835, %v2850
        %v2852 = vsel %vm2846, %v2849, %v2851
        %v2853 = vsel %vm2845, %v2832, %v2835
        %v2854 = vsel %vm2848, %v2841, 920167782
        %v2855 = vsel %vm2847, %v2838, %v2854
        %v2856 = vsel %vm2846, %v2853, %v2855
        %v2857 = vsel %vm2845, %v2835, %v2838
        %v2858 = vsel %vm2848, %v2844, 1326507024
        %v2859 = vsel %vm2847, %v2841, %v2858
        %v2860 = vsel %vm2846, %v2857, %v2859
        %v2861 = vshll.u32 %v2821, 8
        %v2862 = vmul.u32.u64.compose %v2861, %v2860
        %v2863 = vextract.low.u32 %v2862
        %v2864 = vextract.high.u32 %v2862
        %v2865 = vmul.u32.u64.compose %v2861, %v2856
        %v2866 = vextract.low.u32 %v2865
        %v2867 = vextract.high.u32 %v2865
        %v2868 = vmul.u32 %v2861, %v2852
        %v2869 = vadd.s32 %v2864, %v2866
        %vm2870 = vc.u32 %v2864, %v2866
        %v2871 = vadd.s32 %v2867, 1
        %v2872 = vsel %vm2870, %v2871, %v2867
        %v2873 = vadd.s32 %v2868, %v2872
        %v2874 = vadd.s32 %v2873, 536870912
        %v2875 = vshrl.u32 %v2874, 30
        %v2876 = vshll.u32 %v2875, 30
        %v2877 = vsub.s32 %v2873, %v2876
        %vm2878 = vcmp.lt.s32.totalorder %v2877, 0
        %v2879 = vsub.s32 0, %v2877
        %v2880 = vsel %vm2878, %v2879, %v2877
        %v2881 = vclz %v2880
        %v2882 = vsub.s32 %v2881, 2
        %vm2883 = vcmp.gt.s32.totalorder 0, %v2882
        %v2884 = vsel %vm2883, 0, %v2882
        %v2885 = vsub.s32 32, %v2884
        %v2886 = vshll.u32 %v2877, %v2884
        %v2887 = vshrl.u32 %v2869, %v2885
        %v2888 = vor.u32 %v2886, %v2887
        %v2889 = vsub.s32 4294967266, %v2884
        %v2890 = vadd.s32 %v2889, 127
        %v2891 = vshll.u32 %v2890, 23
        %v2892 = vor.u32 4788187, %v2891
        %v2893 = vand.u32 2147483647, %v2892
        %v2895 = vcvt.s32.f32 %v2888
        %v2896 = vmul.f32 %v2895, %v2893
        %v2897 = vxor.u32 %v2896, 2147483648
        %v2898 = vsel %vm2815, %v2897, %v2896
        %v2899 = vsub.s32 4, %v2875
        %v2900 = vsel %vm2815, %v2899, %v2875
        %v2901 = vsel %vm2814, %v1030, %v2898
        %v2902 = vsel %vm2814, 0, %v2900
        %v2903 = vcosq.f32.pop %v2901
        %v2904 = vsinq.f32.pop %v2901
        %vm2905 = vweird.f32 %v1030
        %v2906 = vadd.s32 %v2902, 3
        %v2907 = vand.u32 %v2906, 3
        %vm2908 = vcmp.lt.s32.totalorder %v2907, 2
        %vm2909 = vcmp.eq.s32.totalorder %v2907, 0
        %v2910 = vxor.u32 %v2904, 2147483648
        %v2911 = vsel %vm2909, %v2903, %v2910
        %vm2912 = vcmp.eq.s32.totalorder %v2907, 2
        %v2913 = vxor.u32 %v2903, 2147483648
        %v2914 = vsel %vm2912, %v2913, %v2904
        %v2915 = vsel %vm2908, %v2911, %v2914
        %v2916 = vsel %vm2905, nan, %v2915
        %v2917 = vand.u32 2147483647, %v1031
        %vm2918 = vcmp.le.f32.partialorder %v2917, 0.7853982
        %vm2919 = vcmp.lt.s32.totalorder %v1031, 0
        %v2920 = vand.u32 %v1031, 2139095040
        %v2921 = vshrl.u32 %v2920, 23
        %v2922 = vsub.s32 %v2921, 127
        %v2923 = vand.u32 2147483647, %v1031
        %v2924 = vand.u32 %v2923, 8388607
        %v2925 = vor.u32 %v2924, 8388608
        %v2926 = vsub.s32 0, %v2925
        %v2927 = vadd.s32 %v2922, 1
        %vm2928 = vcmp.gt.s32.totalorder %v2927, 0
        %v2929 = vsel %vm2928, %v2927, 0
        %v2930 = vshrl.u32 %v2929, 5
        %v2931 = vand.u32 %v2929, 31
        %v2932 = vsub.s32 32, %v2931
        %v2933 = vshrl.u32 683565275, %v2932
        %v2934 = vshll.u32 683565275, %v2931
        %v2935 = vshrl.u32 2475754826, %v2932
        %v2936 = vor.u32 %v2934, %v2935
        %v2937 = vshll.u32 2475754826, %v2931
        %v2938 = vshrl.u32 2131351028, %v2932
        %v2939 = vor.u32 %v2937, %v2938
        %v2940 = vshll.u32 2131351028, %v2931
        %v2941 = vshrl.u32 2102212464, %v2932
        %v2942 = vor.u32 %v2940, %v2941
        %v2943 = vshll.u32 2102212464, %v2931
        %v2944 = vshrl.u32 920167782, %v2932
        %v2945 = vor.u32 %v2943, %v2944
        %v2946 = vshll.u32 920167782, %v2931
        %v2947 = vshrl.u32 1326507024, %v2932
        %v2948 = vor.u32 %v2946, %v2947
        %vm2949 = vcmp.lt.s32.totalorder %v2930, 1
        %vm2950 = vcmp.lt.s32.totalorder %v2930, 2
        %vm2951 = vcmp.lt.s32.totalorder %v2930, 3
        %vm2952 = vcmp.lt.s32.totalorder %v2930, 4
        %v2953 = vsel %vm2949, %v2933, %v2936
        %v2954 = vsel %vm2952, %v2942, 2102212464
        %v2955 = vsel %vm2951, %v2939, %v2954
        %v2956 = vsel %vm2950, %v2953, %v2955
        %v2957 = vsel %vm2949, %v2936, %v2939
        %v2958 = vsel %vm2952, %v2945, 920167782
        %v2959 = vsel %vm2951, %v2942, %v2958
        %v2960 = vsel %vm2950, %v2957, %v2959
        %v2961 = vsel %vm2949, %v2939, %v2942
        %v2962 = vsel %vm2952, %v2948, 1326507024
        %v2963 = vsel %vm2951, %v2945, %v2962
        %v2964 = vsel %vm2950, %v2961, %v2963
        %v2965 = vshll.u32 %v2925, 8
        %v2966 = vmul.u32.u64.compose %v2965, %v2964
        %v2967 = vextract.low.u32 %v2966
        %v2968 = vextract.high.u32 %v2966
        %v2969 = vmul.u32.u64.compose %v2965, %v2960
        %v2970 = vextract.low.u32 %v2969
        %v2971 = vextract.high.u32 %v2969
        %v2972 = vmul.u32 %v2965, %v2956
        %v2973 = vadd.s32 %v2968, %v2970
        %vm2974 = vc.u32 %v2968, %v2970
        %v2975 = vadd.s32 %v2971, 1
        %v2976 = vsel %vm2974, %v2975, %v2971
        %v2977 = vadd.s32 %v2972, %v2976
        %v2978 = vadd.s32 %v2977, 536870912
        %v2979 = vshrl.u32 %v2978, 30
        %v2980 = vshll.u32 %v2979, 30
        %v2981 = vsub.s32 %v2977, %v2980
        %vm2982 = vcmp.lt.s32.totalorder %v2981, 0
        %v2983 = vsub.s32 0, %v2981
        %v2984 = vsel %vm2982, %v2983, %v2981
        %v2985 = vclz %v2984
        %v2986 = vsub.s32 %v2985, 2
        %vm2987 = vcmp.gt.s32.totalorder 0, %v2986
        %v2988 = vsel %vm2987, 0, %v2986
        %v2989 = vsub.s32 32, %v2988
        %v2990 = vshll.u32 %v2981, %v2988
        %v2991 = vshrl.u32 %v2973, %v2989
        %v2992 = vor.u32 %v2990, %v2991
        %v2993 = vsub.s32 4294967266, %v2988
        %v2994 = vadd.s32 %v2993, 127
        %v2995 = vshll.u32 %v2994, 23
        %v2996 = vor.u32 4788187, %v2995
        %v2997 = vand.u32 2147483647, %v2996
        %v2999 = vcvt.s32.f32 %v2992
        %v3000 = vmul.f32 %v2999, %v2997
        %v3001 = vxor.u32 %v3000, 2147483648
        %v3002 = vsel %vm2919, %v3001, %v3000
        %v3003 = vsub.s32 4, %v2979
        %v3004 = vsel %vm2919, %v3003, %v2979
        %v3005 = vsel %vm2918, %v1031, %v3002
        %v3006 = vsel %vm2918, 0, %v3004
        %v3007 = vcosq.f32.pop %v3005
        %v3008 = vsinq.f32.pop %v3005
        %vm3009 = vweird.f32 %v1031
        %v3010 = vadd.s32 %v3006, 3
        %v3011 = vand.u32 %v3010, 3
        %vm3012 = vcmp.lt.s32.totalorder %v3011, 2
        %vm3013 = vcmp.eq.s32.totalorder %v3011, 0
        %v3014 = vxor.u32 %v3008, 2147483648
        %v3015 = vsel %vm3013, %v3007, %v3014
        %vm3016 = vcmp.eq.s32.totalorder %v3011, 2
        %v3017 = vxor.u32 %v3007, 2147483648
        %v3018 = vsel %vm3016, %v3017, %v3008
        %v3019 = vsel %vm3012, %v3015, %v3018
        %v3020 = vsel %vm3009, nan, %v3019
        %v3021 = vand.u32 2147483647, %v1032
        %vm3022 = vcmp.le.f32.partialorder %v3021, 0.7853982
        %vm3023 = vcmp.lt.s32.totalorder %v1032, 0
        %v3024 = vand.u32 %v1032, 2139095040
        %v3025 = vshrl.u32 %v3024, 23
        %v3026 = vsub.s32 %v3025, 127
        %v3027 = vand.u32 2147483647, %v1032
        %v3028 = vand.u32 %v3027, 8388607
        %v3029 = vor.u32 %v3028, 8388608
        %v3030 = vsub.s32 0, %v3029
        %v3031 = vadd.s32 %v3026, 1
        %vm3032 = vcmp.gt.s32.totalorder %v3031, 0
        %v3033 = vsel %vm3032, %v3031, 0
        %v3034 = vshrl.u32 %v3033, 5
        %v3035 = vand.u32 %v3033, 31
        %v3036 = vsub.s32 32, %v3035
        %v3037 = vshrl.u32 683565275, %v3036
        %v3038 = vshll.u32 683565275, %v3035
        %v3039 = vshrl.u32 2475754826, %v3036
        %v3040 = vor.u32 %v3038, %v3039
        %v3041 = vshll.u32 2475754826, %v3035
        %v3042 = vshrl.u32 2131351028, %v3036
        %v3043 = vor.u32 %v3041, %v3042
        %v3044 = vshll.u32 2131351028, %v3035
        %v3045 = vshrl.u32 2102212464, %v3036
        %v3046 = vor.u32 %v3044, %v3045
        %v3047 = vshll.u32 2102212464, %v3035
        %v3048 = vshrl.u32 920167782, %v3036
        %v3049 = vor.u32 %v3047, %v3048
        %v3050 = vshll.u32 920167782, %v3035
        %v3051 = vshrl.u32 1326507024, %v3036
        %v3052 = vor.u32 %v3050, %v3051
        %vm3053 = vcmp.lt.s32.totalorder %v3034, 1
        %vm3054 = vcmp.lt.s32.totalorder %v3034, 2
        %vm3055 = vcmp.lt.s32.totalorder %v3034, 3
        %vm3056 = vcmp.lt.s32.totalorder %v3034, 4
        %v3057 = vsel %vm3053, %v3037, %v3040
        %v3058 = vsel %vm3056, %v3046, 2102212464
        %v3059 = vsel %vm3055, %v3043, %v3058
        %v3060 = vsel %vm3054, %v3057, %v3059
        %v3061 = vsel %vm3053, %v3040, %v3043
        %v3062 = vsel %vm3056, %v3049, 920167782
        %v3063 = vsel %vm3055, %v3046, %v3062
        %v3064 = vsel %vm3054, %v3061, %v3063
        %v3065 = vsel %vm3053, %v3043, %v3046
        %v3066 = vsel %vm3056, %v3052, 1326507024
        %v3067 = vsel %vm3055, %v3049, %v3066
        %v3068 = vsel %vm3054, %v3065, %v3067
        %v3069 = vshll.u32 %v3029, 8
        %v3070 = vmul.u32.u64.compose %v3069, %v3068
        %v3071 = vextract.low.u32 %v3070
        %v3072 = vextract.high.u32 %v3070
        %v3073 = vmul.u32.u64.compose %v3069, %v3064
        %v3074 = vextract.low.u32 %v3073
        %v3075 = vextract.high.u32 %v3073
        %v3076 = vmul.u32 %v3069, %v3060
        %v3077 = vadd.s32 %v3072, %v3074
        %vm3078 = vc.u32 %v3072, %v3074
        %v3079 = vadd.s32 %v3075, 1
        %v3080 = vsel %vm3078, %v3079, %v3075
        %v3081 = vadd.s32 %v3076, %v3080
        %v3082 = vadd.s32 %v3081, 536870912
        %v3083 = vshrl.u32 %v3082, 30
        %v3084 = vshll.u32 %v3083, 30
        %v3085 = vsub.s32 %v3081, %v3084
        %vm3086 = vcmp.lt.s32.totalorder %v3085, 0
        %v3087 = vsub.s32 0, %v3085
        %v3088 = vsel %vm3086, %v3087, %v3085
        %v3089 = vclz %v3088
        %v3090 = vsub.s32 %v3089, 2
        %vm3091 = vcmp.gt.s32.totalorder 0, %v3090
        %v3092 = vsel %vm3091, 0, %v3090
        %v3093 = vsub.s32 32, %v3092
        %v3094 = vshll.u32 %v3085, %v3092
        %v3095 = vshrl.u32 %v3077, %v3093
        %v3096 = vor.u32 %v3094, %v3095
        %v3097 = vsub.s32 4294967266, %v3092
        %v3098 = vadd.s32 %v3097, 127
        %v3099 = vshll.u32 %v3098, 23
        %v3100 = vor.u32 4788187, %v3099
        %v3101 = vand.u32 2147483647, %v3100
        %v3103 = vcvt.s32.f32 %v3096
        %v3104 = vmul.f32 %v3103, %v3101
        %v3105 = vxor.u32 %v3104, 2147483648
        %v3106 = vsel %vm3023, %v3105, %v3104
        %v3107 = vsub.s32 4, %v3083
        %v3108 = vsel %vm3023, %v3107, %v3083
        %v3109 = vsel %vm3022, %v1032, %v3106
        %v3110 = vsel %vm3022, 0, %v3108
        %v3111 = vcosq.f32.pop %v3109
        %v3112 = vsinq.f32.pop %v3109
        %vm3113 = vweird.f32 %v1032
        %v3114 = vadd.s32 %v3110, 3
        %v3115 = vand.u32 %v3114, 3
        %vm3116 = vcmp.lt.s32.totalorder %v3115, 2
        %vm3117 = vcmp.eq.s32.totalorder %v3115, 0
        %v3118 = vxor.u32 %v3112, 2147483648
        %v3119 = vsel %vm3117, %v3111, %v3118
        %vm3120 = vcmp.eq.s32.totalorder %v3115, 2
        %v3121 = vxor.u32 %v3111, 2147483648
        %v3122 = vsel %vm3120, %v3121, %v3112
        %v3123 = vsel %vm3116, %v3119, %v3122
        %v3124 = vsel %vm3113, nan, %v3123
        %v3125 = vand.u32 2147483647, %v1033
        %vm3126 = vcmp.le.f32.partialorder %v3125, 0.7853982
        %vm3127 = vcmp.lt.s32.totalorder %v1033, 0
        %v3128 = vand.u32 %v1033, 2139095040
        %v3129 = vshrl.u32 %v3128, 23
        %v3130 = vsub.s32 %v3129, 127
        %v3131 = vand.u32 2147483647, %v1033
        %v3132 = vand.u32 %v3131, 8388607
        %v3133 = vor.u32 %v3132, 8388608
        %v3134 = vsub.s32 0, %v3133
        %v3135 = vadd.s32 %v3130, 1
        %vm3136 = vcmp.gt.s32.totalorder %v3135, 0
        %v3137 = vsel %vm3136, %v3135, 0
        %v3138 = vshrl.u32 %v3137, 5
        %v3139 = vand.u32 %v3137, 31
        %v3140 = vsub.s32 32, %v3139
        %v3141 = vshrl.u32 683565275, %v3140
        %v3142 = vshll.u32 683565275, %v3139
        %v3143 = vshrl.u32 2475754826, %v3140
        %v3144 = vor.u32 %v3142, %v3143
        %v3145 = vshll.u32 2475754826, %v3139
        %v3146 = vshrl.u32 2131351028, %v3140
        %v3147 = vor.u32 %v3145, %v3146
        %v3148 = vshll.u32 2131351028, %v3139
        %v3149 = vshrl.u32 2102212464, %v3140
        %v3150 = vor.u32 %v3148, %v3149
        %v3151 = vshll.u32 2102212464, %v3139
        %v3152 = vshrl.u32 920167782, %v3140
        %v3153 = vor.u32 %v3151, %v3152
        %v3154 = vshll.u32 920167782, %v3139
        %v3155 = vshrl.u32 1326507024, %v3140
        %v3156 = vor.u32 %v3154, %v3155
        %vm3157 = vcmp.lt.s32.totalorder %v3138, 1
        %vm3158 = vcmp.lt.s32.totalorder %v3138, 2
        %vm3159 = vcmp.lt.s32.totalorder %v3138, 3
        %vm3160 = vcmp.lt.s32.totalorder %v3138, 4
        %v3161 = vsel %vm3157, %v3141, %v3144
        %v3162 = vsel %vm3160, %v3150, 2102212464
        %v3163 = vsel %vm3159, %v3147, %v3162
        %v3164 = vsel %vm3158, %v3161, %v3163
        %v3165 = vsel %vm3157, %v3144, %v3147
        %v3166 = vsel %vm3160, %v3153, 920167782
        %v3167 = vsel %vm3159, %v3150, %v3166
        %v3168 = vsel %vm3158, %v3165, %v3167
        %v3169 = vsel %vm3157, %v3147, %v3150
        %v3170 = vsel %vm3160, %v3156, 1326507024
        %v3171 = vsel %vm3159, %v3153, %v3170
        %v3172 = vsel %vm3158, %v3169, %v3171
        %v3173 = vshll.u32 %v3133, 8
        %v3174 = vmul.u32.u64.compose %v3173, %v3172
        %v3175 = vextract.low.u32 %v3174
        %v3176 = vextract.high.u32 %v3174
        %v3177 = vmul.u32.u64.compose %v3173, %v3168
        %v3178 = vextract.low.u32 %v3177
        %v3179 = vextract.high.u32 %v3177
        %v3180 = vmul.u32 %v3173, %v3164
        %v3181 = vadd.s32 %v3176, %v3178
        %vm3182 = vc.u32 %v3176, %v3178
        %v3183 = vadd.s32 %v3179, 1
        %v3184 = vsel %vm3182, %v3183, %v3179
        %v3185 = vadd.s32 %v3180, %v3184
        %v3186 = vadd.s32 %v3185, 536870912
        %v3187 = vshrl.u32 %v3186, 30
        %v3188 = vshll.u32 %v3187, 30
        %v3189 = vsub.s32 %v3185, %v3188
        %vm3190 = vcmp.lt.s32.totalorder %v3189, 0
        %v3191 = vsub.s32 0, %v3189
        %v3192 = vsel %vm3190, %v3191, %v3189
        %v3193 = vclz %v3192
        %v3194 = vsub.s32 %v3193, 2
        %vm3195 = vcmp.gt.s32.totalorder 0, %v3194
        %v3196 = vsel %vm3195, 0, %v3194
        %v3197 = vsub.s32 32, %v3196
        %v3198 = vshll.u32 %v3189, %v3196
        %v3199 = vshrl.u32 %v3181, %v3197
        %v3200 = vor.u32 %v3198, %v3199
        %v3201 = vsub.s32 4294967266, %v3196
        %v3202 = vadd.s32 %v3201, 127
        %v3203 = vshll.u32 %v3202, 23
        %v3204 = vor.u32 4788187, %v3203
        %v3205 = vand.u32 2147483647, %v3204
        %v3207 = vcvt.s32.f32 %v3200
        %v3208 = vmul.f32 %v3207, %v3205
        %v3209 = vxor.u32 %v3208, 2147483648
        %v3210 = vsel %vm3127, %v3209, %v3208
        %v3211 = vsub.s32 4, %v3187
        %v3212 = vsel %vm3127, %v3211, %v3187
        %v3213 = vsel %vm3126, %v1033, %v3210
        %v3214 = vsel %vm3126, 0, %v3212
        %v3215 = vcosq.f32.pop %v3213
        %v3216 = vsinq.f32.pop %v3213
        %vm3217 = vweird.f32 %v1033
        %v3218 = vadd.s32 %v3214, 3
        %v3219 = vand.u32 %v3218, 3
        %vm3220 = vcmp.lt.s32.totalorder %v3219, 2
        %vm3221 = vcmp.eq.s32.totalorder %v3219, 0
        %v3222 = vxor.u32 %v3216, 2147483648
        %v3223 = vsel %vm3221, %v3215, %v3222
        %vm3224 = vcmp.eq.s32.totalorder %v3219, 2
        %v3225 = vxor.u32 %v3215, 2147483648
        %v3226 = vsel %vm3224, %v3225, %v3216
        %v3227 = vsel %vm3220, %v3223, %v3226
        %v3228 = vsel %vm3217, nan, %v3227
        %v3229 = vand.u32 2147483647, %v1034
        %vm3230 = vcmp.le.f32.partialorder %v3229, 0.7853982
        %vm3231 = vcmp.lt.s32.totalorder %v1034, 0
        %v3232 = vand.u32 %v1034, 2139095040
        %v3233 = vshrl.u32 %v3232, 23
        %v3234 = vsub.s32 %v3233, 127
        %v3235 = vand.u32 2147483647, %v1034
        %v3236 = vand.u32 %v3235, 8388607
        %v3237 = vor.u32 %v3236, 8388608
        %v3238 = vsub.s32 0, %v3237
        %v3239 = vadd.s32 %v3234, 1
        %vm3240 = vcmp.gt.s32.totalorder %v3239, 0
        %v3241 = vsel %vm3240, %v3239, 0
        %v3242 = vshrl.u32 %v3241, 5
        %v3243 = vand.u32 %v3241, 31
        %v3244 = vsub.s32 32, %v3243
        %v3245 = vshrl.u32 683565275, %v3244
        %v3246 = vshll.u32 683565275, %v3243
        %v3247 = vshrl.u32 2475754826, %v3244
        %v3248 = vor.u32 %v3246, %v3247
        %v3249 = vshll.u32 2475754826, %v3243
        %v3250 = vshrl.u32 2131351028, %v3244
        %v3251 = vor.u32 %v3249, %v3250
        %v3252 = vshll.u32 2131351028, %v3243
        %v3253 = vshrl.u32 2102212464, %v3244
        %v3254 = vor.u32 %v3252, %v3253
        %v3255 = vshll.u32 2102212464, %v3243
        %v3256 = vshrl.u32 920167782, %v3244
        %v3257 = vor.u32 %v3255, %v3256
        %v3258 = vshll.u32 920167782, %v3243
        %v3259 = vshrl.u32 1326507024, %v3244
        %v3260 = vor.u32 %v3258, %v3259
        %vm3261 = vcmp.lt.s32.totalorder %v3242, 1
        %vm3262 = vcmp.lt.s32.totalorder %v3242, 2
        %vm3263 = vcmp.lt.s32.totalorder %v3242, 3
        %vm3264 = vcmp.lt.s32.totalorder %v3242, 4
        %v3265 = vsel %vm3261, %v3245, %v3248
        %v3266 = vsel %vm3264, %v3254, 2102212464
        %v3267 = vsel %vm3263, %v3251, %v3266
        %v3268 = vsel %vm3262, %v3265, %v3267
        %v3269 = vsel %vm3261, %v3248, %v3251
        %v3270 = vsel %vm3264, %v3257, 920167782
        %v3271 = vsel %vm3263, %v3254, %v3270
        %v3272 = vsel %vm3262, %v3269, %v3271
        %v3273 = vsel %vm3261, %v3251, %v3254
        %v3274 = vsel %vm3264, %v3260, 1326507024
        %v3275 = vsel %vm3263, %v3257, %v3274
        %v3276 = vsel %vm3262, %v3273, %v3275
        %v3277 = vshll.u32 %v3237, 8
        %v3278 = vmul.u32.u64.compose %v3277, %v3276
        %v3279 = vextract.low.u32 %v3278
        %v3280 = vextract.high.u32 %v3278
        %v3281 = vmul.u32.u64.compose %v3277, %v3272
        %v3282 = vextract.low.u32 %v3281
        %v3283 = vextract.high.u32 %v3281
        %v3284 = vmul.u32 %v3277, %v3268
        %v3285 = vadd.s32 %v3280, %v3282
        %vm3286 = vc.u32 %v3280, %v3282
        %v3287 = vadd.s32 %v3283, 1
        %v3288 = vsel %vm3286, %v3287, %v3283
        %v3289 = vadd.s32 %v3284, %v3288
        %v3290 = vadd.s32 %v3289, 536870912
        %v3291 = vshrl.u32 %v3290, 30
        %v3292 = vshll.u32 %v3291, 30
        %v3293 = vsub.s32 %v3289, %v3292
        %vm3294 = vcmp.lt.s32.totalorder %v3293, 0
        %v3295 = vsub.s32 0, %v3293
        %v3296 = vsel %vm3294, %v3295, %v3293
        %v3297 = vclz %v3296
        %v3298 = vsub.s32 %v3297, 2
        %vm3299 = vcmp.gt.s32.totalorder 0, %v3298
        %v3300 = vsel %vm3299, 0, %v3298
        %v3301 = vsub.s32 32, %v3300
        %v3302 = vshll.u32 %v3293, %v3300
        %v3303 = vshrl.u32 %v3285, %v3301
        %v3304 = vor.u32 %v3302, %v3303
        %v3305 = vsub.s32 4294967266, %v3300
        %v3306 = vadd.s32 %v3305, 127
        %v3307 = vshll.u32 %v3306, 23
        %v3308 = vor.u32 4788187, %v3307
        %v3309 = vand.u32 2147483647, %v3308
        %v3311 = vcvt.s32.f32 %v3304
        %v3312 = vmul.f32 %v3311, %v3309
        %v3313 = vxor.u32 %v3312, 2147483648
        %v3314 = vsel %vm3231, %v3313, %v3312
        %v3315 = vsub.s32 4, %v3291
        %v3316 = vsel %vm3231, %v3315, %v3291
        %v3317 = vsel %vm3230, %v1034, %v3314
        %v3318 = vsel %vm3230, 0, %v3316
        %v3319 = vcosq.f32.pop %v3317
        %v3320 = vsinq.f32.pop %v3317
        %vm3321 = vweird.f32 %v1034
        %v3322 = vadd.s32 %v3318, 3
        %v3323 = vand.u32 %v3322, 3
        %vm3324 = vcmp.lt.s32.totalorder %v3323, 2
        %vm3325 = vcmp.eq.s32.totalorder %v3323, 0
        %v3326 = vxor.u32 %v3320, 2147483648
        %v3327 = vsel %vm3325, %v3319, %v3326
        %vm3328 = vcmp.eq.s32.totalorder %v3323, 2
        %v3329 = vxor.u32 %v3319, 2147483648
        %v3330 = vsel %vm3328, %v3329, %v3320
        %v3331 = vsel %vm3324, %v3327, %v3330
        %v3332 = vsel %vm3321, nan, %v3331
        %v3333 = vand.u32 2147483647, %v1035
        %vm3334 = vcmp.le.f32.partialorder %v3333, 0.7853982
        %vm3335 = vcmp.lt.s32.totalorder %v1035, 0
        %v3336 = vand.u32 %v1035, 2139095040
        %v3337 = vshrl.u32 %v3336, 23
        %v3338 = vsub.s32 %v3337, 127
        %v3339 = vand.u32 2147483647, %v1035
        %v3340 = vand.u32 %v3339, 8388607
        %v3341 = vor.u32 %v3340, 8388608
        %v3342 = vsub.s32 0, %v3341
        %v3343 = vadd.s32 %v3338, 1
        %vm3344 = vcmp.gt.s32.totalorder %v3343, 0
        %v3345 = vsel %vm3344, %v3343, 0
        %v3346 = vshrl.u32 %v3345, 5
        %v3347 = vand.u32 %v3345, 31
        %v3348 = vsub.s32 32, %v3347
        %v3349 = vshrl.u32 683565275, %v3348
        %v3350 = vshll.u32 683565275, %v3347
        %v3351 = vshrl.u32 2475754826, %v3348
        %v3352 = vor.u32 %v3350, %v3351
        %v3353 = vshll.u32 2475754826, %v3347
        %v3354 = vshrl.u32 2131351028, %v3348
        %v3355 = vor.u32 %v3353, %v3354
        %v3356 = vshll.u32 2131351028, %v3347
        %v3357 = vshrl.u32 2102212464, %v3348
        %v3358 = vor.u32 %v3356, %v3357
        %v3359 = vshll.u32 2102212464, %v3347
        %v3360 = vshrl.u32 920167782, %v3348
        %v3361 = vor.u32 %v3359, %v3360
        %v3362 = vshll.u32 920167782, %v3347
        %v3363 = vshrl.u32 1326507024, %v3348
        %v3364 = vor.u32 %v3362, %v3363
        %vm3365 = vcmp.lt.s32.totalorder %v3346, 1
        %vm3366 = vcmp.lt.s32.totalorder %v3346, 2
        %vm3367 = vcmp.lt.s32.totalorder %v3346, 3
        %vm3368 = vcmp.lt.s32.totalorder %v3346, 4
        %v3369 = vsel %vm3365, %v3349, %v3352
        %v3370 = vsel %vm3368, %v3358, 2102212464
        %v3371 = vsel %vm3367, %v3355, %v3370
        %v3372 = vsel %vm3366, %v3369, %v3371
        %v3373 = vsel %vm3365, %v3352, %v3355
        %v3374 = vsel %vm3368, %v3361, 920167782
        %v3375 = vsel %vm3367, %v3358, %v3374
        %v3376 = vsel %vm3366, %v3373, %v3375
        %v3377 = vsel %vm3365, %v3355, %v3358
        %v3378 = vsel %vm3368, %v3364, 1326507024
        %v3379 = vsel %vm3367, %v3361, %v3378
        %v3380 = vsel %vm3366, %v3377, %v3379
        %v3381 = vshll.u32 %v3341, 8
        %v3382 = vmul.u32.u64.compose %v3381, %v3380
        %v3383 = vextract.low.u32 %v3382
        %v3384 = vextract.high.u32 %v3382
        %v3385 = vmul.u32.u64.compose %v3381, %v3376
        %v3386 = vextract.low.u32 %v3385
        %v3387 = vextract.high.u32 %v3385
        %v3388 = vmul.u32 %v3381, %v3372
        %v3389 = vadd.s32 %v3384, %v3386
        %vm3390 = vc.u32 %v3384, %v3386
        %v3391 = vadd.s32 %v3387, 1
        %v3392 = vsel %vm3390, %v3391, %v3387
        %v3393 = vadd.s32 %v3388, %v3392
        %v3394 = vadd.s32 %v3393, 536870912
        %v3395 = vshrl.u32 %v3394, 30
        %v3396 = vshll.u32 %v3395, 30
        %v3397 = vsub.s32 %v3393, %v3396
        %vm3398 = vcmp.lt.s32.totalorder %v3397, 0
        %v3399 = vsub.s32 0, %v3397
        %v3400 = vsel %vm3398, %v3399, %v3397
        %v3401 = vclz %v3400
        %v3402 = vsub.s32 %v3401, 2
        %vm3403 = vcmp.gt.s32.totalorder 0, %v3402
        %v3404 = vsel %vm3403, 0, %v3402
        %v3405 = vsub.s32 32, %v3404
        %v3406 = vshll.u32 %v3397, %v3404
        %v3407 = vshrl.u32 %v3389, %v3405
        %v3408 = vor.u32 %v3406, %v3407
        %v3409 = vsub.s32 4294967266, %v3404
        %v3410 = vadd.s32 %v3409, 127
        %v3411 = vshll.u32 %v3410, 23
        %v3412 = vor.u32 4788187, %v3411
        %v3413 = vand.u32 2147483647, %v3412
        %v3415 = vcvt.s32.f32 %v3408
        %v3416 = vmul.f32 %v3415, %v3413
        %v3417 = vxor.u32 %v3416, 2147483648
        %v3418 = vsel %vm3335, %v3417, %v3416
        %v3419 = vsub.s32 4, %v3395
        %v3420 = vsel %vm3335, %v3419, %v3395
        %v3421 = vsel %vm3334, %v1035, %v3418
        %v3422 = vsel %vm3334, 0, %v3420
        %v3423 = vcosq.f32.pop %v3421
        %v3424 = vsinq.f32.pop %v3421
        %vm3425 = vweird.f32 %v1035
        %v3426 = vadd.s32 %v3422, 3
        %v3427 = vand.u32 %v3426, 3
        %vm3428 = vcmp.lt.s32.totalorder %v3427, 2
        %vm3429 = vcmp.eq.s32.totalorder %v3427, 0
        %v3430 = vxor.u32 %v3424, 2147483648
        %v3431 = vsel %vm3429, %v3423, %v3430
        %vm3432 = vcmp.eq.s32.totalorder %v3427, 2
        %v3433 = vxor.u32 %v3423, 2147483648
        %v3434 = vsel %vm3432, %v3433, %v3424
        %v3435 = vsel %vm3428, %v3431, %v3434
        %v3436 = vsel %vm3425, nan, %v3435
        %v3437 = vand.u32 2147483647, %v1036
        %vm3438 = vcmp.le.f32.partialorder %v3437, 0.7853982
        %vm3439 = vcmp.lt.s32.totalorder %v1036, 0
        %v3440 = vand.u32 %v1036, 2139095040
        %v3441 = vshrl.u32 %v3440, 23
        %v3442 = vsub.s32 %v3441, 127
        %v3443 = vand.u32 2147483647, %v1036
        %v3444 = vand.u32 %v3443, 8388607
        %v3445 = vor.u32 %v3444, 8388608
        %v3446 = vsub.s32 0, %v3445
        %v3447 = vadd.s32 %v3442, 1
        %vm3448 = vcmp.gt.s32.totalorder %v3447, 0
        %v3449 = vsel %vm3448, %v3447, 0
        %v3450 = vshrl.u32 %v3449, 5
        %v3451 = vand.u32 %v3449, 31
        %v3452 = vsub.s32 32, %v3451
        %v3453 = vshrl.u32 683565275, %v3452
        %v3454 = vshll.u32 683565275, %v3451
        %v3455 = vshrl.u32 2475754826, %v3452
        %v3456 = vor.u32 %v3454, %v3455
        %v3457 = vshll.u32 2475754826, %v3451
        %v3458 = vshrl.u32 2131351028, %v3452
        %v3459 = vor.u32 %v3457, %v3458
        %v3460 = vshll.u32 2131351028, %v3451
        %v3461 = vshrl.u32 2102212464, %v3452
        %v3462 = vor.u32 %v3460, %v3461
        %v3463 = vshll.u32 2102212464, %v3451
        %v3464 = vshrl.u32 920167782, %v3452
        %v3465 = vor.u32 %v3463, %v3464
        %v3466 = vshll.u32 920167782, %v3451
        %v3467 = vshrl.u32 1326507024, %v3452
        %v3468 = vor.u32 %v3466, %v3467
        %vm3469 = vcmp.lt.s32.totalorder %v3450, 1
        %vm3470 = vcmp.lt.s32.totalorder %v3450, 2
        %vm3471 = vcmp.lt.s32.totalorder %v3450, 3
        %vm3472 = vcmp.lt.s32.totalorder %v3450, 4
        %v3473 = vsel %vm3469, %v3453, %v3456
        %v3474 = vsel %vm3472, %v3462, 2102212464
        %v3475 = vsel %vm3471, %v3459, %v3474
        %v3476 = vsel %vm3470, %v3473, %v3475
        %v3477 = vsel %vm3469, %v3456, %v3459
        %v3478 = vsel %vm3472, %v3465, 920167782
        %v3479 = vsel %vm3471, %v3462, %v3478
        %v3480 = vsel %vm3470, %v3477, %v3479
        %v3481 = vsel %vm3469, %v3459, %v3462
        %v3482 = vsel %vm3472, %v3468, 1326507024
        %v3483 = vsel %vm3471, %v3465, %v3482
        %v3484 = vsel %vm3470, %v3481, %v3483
        %v3485 = vshll.u32 %v3445, 8
        %v3486 = vmul.u32.u64.compose %v3485, %v3484
        %v3487 = vextract.low.u32 %v3486
        %v3488 = vextract.high.u32 %v3486
        %v3489 = vmul.u32.u64.compose %v3485, %v3480
        %v3490 = vextract.low.u32 %v3489
        %v3491 = vextract.high.u32 %v3489
        %v3492 = vmul.u32 %v3485, %v3476
        %v3493 = vadd.s32 %v3488, %v3490
        %vm3494 = vc.u32 %v3488, %v3490
        %v3495 = vadd.s32 %v3491, 1
        %v3496 = vsel %vm3494, %v3495, %v3491
        %v3497 = vadd.s32 %v3492, %v3496
        %v3498 = vadd.s32 %v3497, 536870912
        %v3499 = vshrl.u32 %v3498, 30
        %v3500 = vshll.u32 %v3499, 30
        %v3501 = vsub.s32 %v3497, %v3500
        %vm3502 = vcmp.lt.s32.totalorder %v3501, 0
        %v3503 = vsub.s32 0, %v3501
        %v3504 = vsel %vm3502, %v3503, %v3501
        %v3505 = vclz %v3504
        %v3506 = vsub.s32 %v3505, 2
        %vm3507 = vcmp.gt.s32.totalorder 0, %v3506
        %v3508 = vsel %vm3507, 0, %v3506
        %v3509 = vsub.s32 32, %v3508
        %v3510 = vshll.u32 %v3501, %v3508
        %v3511 = vshrl.u32 %v3493, %v3509
        %v3512 = vor.u32 %v3510, %v3511
        %v3513 = vsub.s32 4294967266, %v3508
        %v3514 = vadd.s32 %v3513, 127
        %v3515 = vshll.u32 %v3514, 23
        %v3516 = vor.u32 4788187, %v3515
        %v3517 = vand.u32 2147483647, %v3516
        %v3519 = vcvt.s32.f32 %v3512
        %v3520 = vmul.f32 %v3519, %v3517
        %v3521 = vxor.u32 %v3520, 2147483648
        %v3522 = vsel %vm3439, %v3521, %v3520
        %v3523 = vsub.s32 4, %v3499
        %v3524 = vsel %vm3439, %v3523, %v3499
        %v3525 = vsel %vm3438, %v1036, %v3522
        %v3526 = vsel %vm3438, 0, %v3524
        %v3527 = vcosq.f32.pop %v3525
        %v3528 = vsinq.f32.pop %v3525
        %vm3529 = vweird.f32 %v1036
        %v3530 = vadd.s32 %v3526, 3
        %v3531 = vand.u32 %v3530, 3
        %vm3532 = vcmp.lt.s32.totalorder %v3531, 2
        %vm3533 = vcmp.eq.s32.totalorder %v3531, 0
        %v3534 = vxor.u32 %v3528, 2147483648
        %v3535 = vsel %vm3533, %v3527, %v3534
        %vm3536 = vcmp.eq.s32.totalorder %v3531, 2
        %v3537 = vxor.u32 %v3527, 2147483648
        %v3538 = vsel %vm3536, %v3537, %v3528
        %v3539 = vsel %vm3532, %v3535, %v3538
        %v3540 = vsel %vm3529, nan, %v3539
        %v3541 = vand.u32 2147483647, %v1037
        %vm3542 = vcmp.le.f32.partialorder %v3541, 0.7853982
        %vm3543 = vcmp.lt.s32.totalorder %v1037, 0
        %v3544 = vand.u32 %v1037, 2139095040
        %v3545 = vshrl.u32 %v3544, 23
        %v3546 = vsub.s32 %v3545, 127
        %v3547 = vand.u32 2147483647, %v1037
        %v3548 = vand.u32 %v3547, 8388607
        %v3549 = vor.u32 %v3548, 8388608
        %v3550 = vsub.s32 0, %v3549
        %v3551 = vadd.s32 %v3546, 1
        %vm3552 = vcmp.gt.s32.totalorder %v3551, 0
        %v3553 = vsel %vm3552, %v3551, 0
        %v3554 = vshrl.u32 %v3553, 5
        %v3555 = vand.u32 %v3553, 31
        %v3556 = vsub.s32 32, %v3555
        %v3557 = vshrl.u32 683565275, %v3556
        %v3558 = vshll.u32 683565275, %v3555
        %v3559 = vshrl.u32 2475754826, %v3556
        %v3560 = vor.u32 %v3558, %v3559
        %v3561 = vshll.u32 2475754826, %v3555
        %v3562 = vshrl.u32 2131351028, %v3556
        %v3563 = vor.u32 %v3561, %v3562
        %v3564 = vshll.u32 2131351028, %v3555
        %v3565 = vshrl.u32 2102212464, %v3556
        %v3566 = vor.u32 %v3564, %v3565
        %v3567 = vshll.u32 2102212464, %v3555
        %v3568 = vshrl.u32 920167782, %v3556
        %v3569 = vor.u32 %v3567, %v3568
        %v3570 = vshll.u32 920167782, %v3555
        %v3571 = vshrl.u32 1326507024, %v3556
        %v3572 = vor.u32 %v3570, %v3571
        %vm3573 = vcmp.lt.s32.totalorder %v3554, 1
        %vm3574 = vcmp.lt.s32.totalorder %v3554, 2
        %vm3575 = vcmp.lt.s32.totalorder %v3554, 3
        %vm3576 = vcmp.lt.s32.totalorder %v3554, 4
        %v3577 = vsel %vm3573, %v3557, %v3560
        %v3578 = vsel %vm3576, %v3566, 2102212464
        %v3579 = vsel %vm3575, %v3563, %v3578
        %v3580 = vsel %vm3574, %v3577, %v3579
        %v3581 = vsel %vm3573, %v3560, %v3563
        %v3582 = vsel %vm3576, %v3569, 920167782
        %v3583 = vsel %vm3575, %v3566, %v3582
        %v3584 = vsel %vm3574, %v3581, %v3583
        %v3585 = vsel %vm3573, %v3563, %v3566
        %v3586 = vsel %vm3576, %v3572, 1326507024
        %v3587 = vsel %vm3575, %v3569, %v3586
        %v3588 = vsel %vm3574, %v3585, %v3587
        %v3589 = vshll.u32 %v3549, 8
        %v3590 = vmul.u32.u64.compose %v3589, %v3588
        %v3591 = vextract.low.u32 %v3590
        %v3592 = vextract.high.u32 %v3590
        %v3593 = vmul.u32.u64.compose %v3589, %v3584
        %v3594 = vextract.low.u32 %v3593
        %v3595 = vextract.high.u32 %v3593
        %v3596 = vmul.u32 %v3589, %v3580
        %v3597 = vadd.s32 %v3592, %v3594
        %vm3598 = vc.u32 %v3592, %v3594
        %v3599 = vadd.s32 %v3595, 1
        %v3600 = vsel %vm3598, %v3599, %v3595
        %v3601 = vadd.s32 %v3596, %v3600
        %v3602 = vadd.s32 %v3601, 536870912
        %v3603 = vshrl.u32 %v3602, 30
        %v3604 = vshll.u32 %v3603, 30
        %v3605 = vsub.s32 %v3601, %v3604
        %vm3606 = vcmp.lt.s32.totalorder %v3605, 0
        %v3607 = vsub.s32 0, %v3605
        %v3608 = vsel %vm3606, %v3607, %v3605
        %v3609 = vclz %v3608
        %v3610 = vsub.s32 %v3609, 2
        %vm3611 = vcmp.gt.s32.totalorder 0, %v3610
        %v3612 = vsel %vm3611, 0, %v3610
        %v3613 = vsub.s32 32, %v3612
        %v3614 = vshll.u32 %v3605, %v3612
        %v3615 = vshrl.u32 %v3597, %v3613
        %v3616 = vor.u32 %v3614, %v3615
        %v3617 = vsub.s32 4294967266, %v3612
        %v3618 = vadd.s32 %v3617, 127
        %v3619 = vshll.u32 %v3618, 23
        %v3620 = vor.u32 4788187, %v3619
        %v3621 = vand.u32 2147483647, %v3620
        %v3623 = vcvt.s32.f32 %v3616
        %v3624 = vmul.f32 %v3623, %v3621
        %v3625 = vxor.u32 %v3624, 2147483648
        %v3626 = vsel %vm3543, %v3625, %v3624
        %v3627 = vsub.s32 4, %v3603
        %v3628 = vsel %vm3543, %v3627, %v3603
        %v3629 = vsel %vm3542, %v1037, %v3626
        %v3630 = vsel %vm3542, 0, %v3628
        %v3631 = vcosq.f32.pop %v3629
        %v3632 = vsinq.f32.pop %v3629
        %vm3633 = vweird.f32 %v1037
        %v3634 = vadd.s32 %v3630, 3
        %v3635 = vand.u32 %v3634, 3
        %vm3636 = vcmp.lt.s32.totalorder %v3635, 2
        %vm3637 = vcmp.eq.s32.totalorder %v3635, 0
        %v3638 = vxor.u32 %v3632, 2147483648
        %v3639 = vsel %vm3637, %v3631, %v3638
        %vm3640 = vcmp.eq.s32.totalorder %v3635, 2
        %v3641 = vxor.u32 %v3631, 2147483648
        %v3642 = vsel %vm3640, %v3641, %v3632
        %v3643 = vsel %vm3636, %v3639, %v3642
        %v3644 = vsel %vm3633, nan, %v3643
        %v3645 = vand.u32 2147483647, %v1038
        %vm3646 = vcmp.le.f32.partialorder %v3645, 0.7853982
        %vm3647 = vcmp.lt.s32.totalorder %v1038, 0
        %v3648 = vand.u32 %v1038, 2139095040
        %v3649 = vshrl.u32 %v3648, 23
        %v3650 = vsub.s32 %v3649, 127
        %v3651 = vand.u32 2147483647, %v1038
        %v3652 = vand.u32 %v3651, 8388607
        %v3653 = vor.u32 %v3652, 8388608
        %v3654 = vsub.s32 0, %v3653
        %v3655 = vadd.s32 %v3650, 1
        %vm3656 = vcmp.gt.s32.totalorder %v3655, 0
        %v3657 = vsel %vm3656, %v3655, 0
        %v3658 = vshrl.u32 %v3657, 5
        %v3659 = vand.u32 %v3657, 31
        %v3660 = vsub.s32 32, %v3659
        %v3661 = vshrl.u32 683565275, %v3660
        %v3662 = vshll.u32 683565275, %v3659
        %v3663 = vshrl.u32 2475754826, %v3660
        %v3664 = vor.u32 %v3662, %v3663
        %v3665 = vshll.u32 2475754826, %v3659
        %v3666 = vshrl.u32 2131351028, %v3660
        %v3667 = vor.u32 %v3665, %v3666
        %v3668 = vshll.u32 2131351028, %v3659
        %v3669 = vshrl.u32 2102212464, %v3660
        %v3670 = vor.u32 %v3668, %v3669
        %v3671 = vshll.u32 2102212464, %v3659
        %v3672 = vshrl.u32 920167782, %v3660
        %v3673 = vor.u32 %v3671, %v3672
        %v3674 = vshll.u32 920167782, %v3659
        %v3675 = vshrl.u32 1326507024, %v3660
        %v3676 = vor.u32 %v3674, %v3675
        %vm3677 = vcmp.lt.s32.totalorder %v3658, 1
        %vm3678 = vcmp.lt.s32.totalorder %v3658, 2
        %vm3679 = vcmp.lt.s32.totalorder %v3658, 3
        %vm3680 = vcmp.lt.s32.totalorder %v3658, 4
        %v3681 = vsel %vm3677, %v3661, %v3664
        %v3682 = vsel %vm3680, %v3670, 2102212464
        %v3683 = vsel %vm3679, %v3667, %v3682
        %v3684 = vsel %vm3678, %v3681, %v3683
        %v3685 = vsel %vm3677, %v3664, %v3667
        %v3686 = vsel %vm3680, %v3673, 920167782
        %v3687 = vsel %vm3679, %v3670, %v3686
        %v3688 = vsel %vm3678, %v3685, %v3687
        %v3689 = vsel %vm3677, %v3667, %v3670
        %v3690 = vsel %vm3680, %v3676, 1326507024
        %v3691 = vsel %vm3679, %v3673, %v3690
        %v3692 = vsel %vm3678, %v3689, %v3691
        %v3693 = vshll.u32 %v3653, 8
        %v3694 = vmul.u32.u64.compose %v3693, %v3692
        %v3695 = vextract.low.u32 %v3694
        %v3696 = vextract.high.u32 %v3694
        %v3697 = vmul.u32.u64.compose %v3693, %v3688
        %v3698 = vextract.low.u32 %v3697
        %v3699 = vextract.high.u32 %v3697
        %v3700 = vmul.u32 %v3693, %v3684
        %v3701 = vadd.s32 %v3696, %v3698
        %vm3702 = vc.u32 %v3696, %v3698
        %v3703 = vadd.s32 %v3699, 1
        %v3704 = vsel %vm3702, %v3703, %v3699
        %v3705 = vadd.s32 %v3700, %v3704
        %v3706 = vadd.s32 %v3705, 536870912
        %v3707 = vshrl.u32 %v3706, 30
        %v3708 = vshll.u32 %v3707, 30
        %v3709 = vsub.s32 %v3705, %v3708
        %vm3710 = vcmp.lt.s32.totalorder %v3709, 0
        %v3711 = vsub.s32 0, %v3709
        %v3712 = vsel %vm3710, %v3711, %v3709
        %v3713 = vclz %v3712
        %v3714 = vsub.s32 %v3713, 2
        %vm3715 = vcmp.gt.s32.totalorder 0, %v3714
        %v3716 = vsel %vm3715, 0, %v3714
        %v3717 = vsub.s32 32, %v3716
        %v3718 = vshll.u32 %v3709, %v3716
        %v3719 = vshrl.u32 %v3701, %v3717
        %v3720 = vor.u32 %v3718, %v3719
        %v3721 = vsub.s32 4294967266, %v3716
        %v3722 = vadd.s32 %v3721, 127
        %v3723 = vshll.u32 %v3722, 23
        %v3724 = vor.u32 4788187, %v3723
        %v3725 = vand.u32 2147483647, %v3724
        %v3727 = vcvt.s32.f32 %v3720
        %v3728 = vmul.f32 %v3727, %v3725
        %v3729 = vxor.u32 %v3728, 2147483648
        %v3730 = vsel %vm3647, %v3729, %v3728
        %v3731 = vsub.s32 4, %v3707
        %v3732 = vsel %vm3647, %v3731, %v3707
        %v3733 = vsel %vm3646, %v1038, %v3730
        %v3734 = vsel %vm3646, 0, %v3732
        %v3735 = vcosq.f32.pop %v3733
        %v3736 = vsinq.f32.pop %v3733
        %vm3737 = vweird.f32 %v1038
        %v3738 = vadd.s32 %v3734, 3
        %v3739 = vand.u32 %v3738, 3
        %vm3740 = vcmp.lt.s32.totalorder %v3739, 2
        %vm3741 = vcmp.eq.s32.totalorder %v3739, 0
        %v3742 = vxor.u32 %v3736, 2147483648
        %v3743 = vsel %vm3741, %v3735, %v3742
        %vm3744 = vcmp.eq.s32.totalorder %v3739, 2
        %v3745 = vxor.u32 %v3735, 2147483648
        %v3746 = vsel %vm3744, %v3745, %v3736
        %v3747 = vsel %vm3740, %v3743, %v3746
        %v3748 = vsel %vm3737, nan, %v3747
        %v3749 = vand.u32 2147483647, %v1039
        %vm3750 = vcmp.le.f32.partialorder %v3749, 0.7853982
        %vm3751 = vcmp.lt.s32.totalorder %v1039, 0
        %v3752 = vand.u32 %v1039, 2139095040
        %v3753 = vshrl.u32 %v3752, 23
        %v3754 = vsub.s32 %v3753, 127
        %v3755 = vand.u32 2147483647, %v1039
        %v3756 = vand.u32 %v3755, 8388607
        %v3757 = vor.u32 %v3756, 8388608
        %v3758 = vsub.s32 0, %v3757
        %v3759 = vadd.s32 %v3754, 1
        %vm3760 = vcmp.gt.s32.totalorder %v3759, 0
        %v3761 = vsel %vm3760, %v3759, 0
        %v3762 = vshrl.u32 %v3761, 5
        %v3763 = vand.u32 %v3761, 31
        %v3764 = vsub.s32 32, %v3763
        %v3765 = vshrl.u32 683565275, %v3764
        %v3766 = vshll.u32 683565275, %v3763
        %v3767 = vshrl.u32 2475754826, %v3764
        %v3768 = vor.u32 %v3766, %v3767
        %v3769 = vshll.u32 2475754826, %v3763
        %v3770 = vshrl.u32 2131351028, %v3764
        %v3771 = vor.u32 %v3769, %v3770
        %v3772 = vshll.u32 2131351028, %v3763
        %v3773 = vshrl.u32 2102212464, %v3764
        %v3774 = vor.u32 %v3772, %v3773
        %v3775 = vshll.u32 2102212464, %v3763
        %v3776 = vshrl.u32 920167782, %v3764
        %v3777 = vor.u32 %v3775, %v3776
        %v3778 = vshll.u32 920167782, %v3763
        %v3779 = vshrl.u32 1326507024, %v3764
        %v3780 = vor.u32 %v3778, %v3779
        %vm3781 = vcmp.lt.s32.totalorder %v3762, 1
        %vm3782 = vcmp.lt.s32.totalorder %v3762, 2
        %vm3783 = vcmp.lt.s32.totalorder %v3762, 3
        %vm3784 = vcmp.lt.s32.totalorder %v3762, 4
        %v3785 = vsel %vm3781, %v3765, %v3768
        %v3786 = vsel %vm3784, %v3774, 2102212464
        %v3787 = vsel %vm3783, %v3771, %v3786
        %v3788 = vsel %vm3782, %v3785, %v3787
        %v3789 = vsel %vm3781, %v3768, %v3771
        %v3790 = vsel %vm3784, %v3777, 920167782
        %v3791 = vsel %vm3783, %v3774, %v3790
        %v3792 = vsel %vm3782, %v3789, %v3791
        %v3793 = vsel %vm3781, %v3771, %v3774
        %v3794 = vsel %vm3784, %v3780, 1326507024
        %v3795 = vsel %vm3783, %v3777, %v3794
        %v3796 = vsel %vm3782, %v3793, %v3795
        %v3797 = vshll.u32 %v3757, 8
        %v3798 = vmul.u32.u64.compose %v3797, %v3796
        %v3799 = vextract.low.u32 %v3798
        %v3800 = vextract.high.u32 %v3798
        %v3801 = vmul.u32.u64.compose %v3797, %v3792
        %v3802 = vextract.low.u32 %v3801
        %v3803 = vextract.high.u32 %v3801
        %v3804 = vmul.u32 %v3797, %v3788
        %v3805 = vadd.s32 %v3800, %v3802
        %vm3806 = vc.u32 %v3800, %v3802
        %v3807 = vadd.s32 %v3803, 1
        %v3808 = vsel %vm3806, %v3807, %v3803
        %v3809 = vadd.s32 %v3804, %v3808
        %v3810 = vadd.s32 %v3809, 536870912
        %v3811 = vshrl.u32 %v3810, 30
        %v3812 = vshll.u32 %v3811, 30
        %v3813 = vsub.s32 %v3809, %v3812
        %vm3814 = vcmp.lt.s32.totalorder %v3813, 0
        %v3815 = vsub.s32 0, %v3813
        %v3816 = vsel %vm3814, %v3815, %v3813
        %v3817 = vclz %v3816
        %v3818 = vsub.s32 %v3817, 2
        %vm3819 = vcmp.gt.s32.totalorder 0, %v3818
        %v3820 = vsel %vm3819, 0, %v3818
        %v3821 = vsub.s32 32, %v3820
        %v3822 = vshll.u32 %v3813, %v3820
        %v3823 = vshrl.u32 %v3805, %v3821
        %v3824 = vor.u32 %v3822, %v3823
        %v3825 = vsub.s32 4294967266, %v3820
        %v3826 = vadd.s32 %v3825, 127
        %v3827 = vshll.u32 %v3826, 23
        %v3828 = vor.u32 4788187, %v3827
        %v3829 = vand.u32 2147483647, %v3828
        %v3831 = vcvt.s32.f32 %v3824
        %v3832 = vmul.f32 %v3831, %v3829
        %v3833 = vxor.u32 %v3832, 2147483648
        %v3834 = vsel %vm3751, %v3833, %v3832
        %v3835 = vsub.s32 4, %v3811
        %v3836 = vsel %vm3751, %v3835, %v3811
        %v3837 = vsel %vm3750, %v1039, %v3834
        %v3838 = vsel %vm3750, 0, %v3836
        %v3839 = vcosq.f32.pop %v3837
        %v3840 = vsinq.f32.pop %v3837
        %vm3841 = vweird.f32 %v1039
        %v3842 = vadd.s32 %v3838, 3
        %v3843 = vand.u32 %v3842, 3
        %vm3844 = vcmp.lt.s32.totalorder %v3843, 2
        %vm3845 = vcmp.eq.s32.totalorder %v3843, 0
        %v3846 = vxor.u32 %v3840, 2147483648
        %v3847 = vsel %vm3845, %v3839, %v3846
        %vm3848 = vcmp.eq.s32.totalorder %v3843, 2
        %v3849 = vxor.u32 %v3839, 2147483648
        %v3850 = vsel %vm3848, %v3849, %v3840
        %v3851 = vsel %vm3844, %v3847, %v3850
        %v3852 = vsel %vm3841, nan, %v3851
        %v3853 = vand.u32 2147483647, %v1040
        %vm3854 = vcmp.le.f32.partialorder %v3853, 0.7853982
        %vm3855 = vcmp.lt.s32.totalorder %v1040, 0
        %v3856 = vand.u32 %v1040, 2139095040
        %v3857 = vshrl.u32 %v3856, 23
        %v3858 = vsub.s32 %v3857, 127
        %v3859 = vand.u32 2147483647, %v1040
        %v3860 = vand.u32 %v3859, 8388607
        %v3861 = vor.u32 %v3860, 8388608
        %v3862 = vsub.s32 0, %v3861
        %v3863 = vadd.s32 %v3858, 1
        %vm3864 = vcmp.gt.s32.totalorder %v3863, 0
        %v3865 = vsel %vm3864, %v3863, 0
        %v3866 = vshrl.u32 %v3865, 5
        %v3867 = vand.u32 %v3865, 31
        %v3868 = vsub.s32 32, %v3867
        %v3869 = vshrl.u32 683565275, %v3868
        %v3870 = vshll.u32 683565275, %v3867
        %v3871 = vshrl.u32 2475754826, %v3868
        %v3872 = vor.u32 %v3870, %v3871
        %v3873 = vshll.u32 2475754826, %v3867
        %v3874 = vshrl.u32 2131351028, %v3868
        %v3875 = vor.u32 %v3873, %v3874
        %v3876 = vshll.u32 2131351028, %v3867
        %v3877 = vshrl.u32 2102212464, %v3868
        %v3878 = vor.u32 %v3876, %v3877
        %v3879 = vshll.u32 2102212464, %v3867
        %v3880 = vshrl.u32 920167782, %v3868
        %v3881 = vor.u32 %v3879, %v3880
        %v3882 = vshll.u32 920167782, %v3867
        %v3883 = vshrl.u32 1326507024, %v3868
        %v3884 = vor.u32 %v3882, %v3883
        %vm3885 = vcmp.lt.s32.totalorder %v3866, 1
        %vm3886 = vcmp.lt.s32.totalorder %v3866, 2
        %vm3887 = vcmp.lt.s32.totalorder %v3866, 3
        %vm3888 = vcmp.lt.s32.totalorder %v3866, 4
        %v3889 = vsel %vm3885, %v3869, %v3872
        %v3890 = vsel %vm3888, %v3878, 2102212464
        %v3891 = vsel %vm3887, %v3875, %v3890
        %v3892 = vsel %vm3886, %v3889, %v3891
        %v3893 = vsel %vm3885, %v3872, %v3875
        %v3894 = vsel %vm3888, %v3881, 920167782
        %v3895 = vsel %vm3887, %v3878, %v3894
        %v3896 = vsel %vm3886, %v3893, %v3895
        %v3897 = vsel %vm3885, %v3875, %v3878
        %v3898 = vsel %vm3888, %v3884, 1326507024
        %v3899 = vsel %vm3887, %v3881, %v3898
        %v3900 = vsel %vm3886, %v3897, %v3899
        %v3901 = vshll.u32 %v3861, 8
        %v3902 = vmul.u32.u64.compose %v3901, %v3900
        %v3903 = vextract.low.u32 %v3902
        %v3904 = vextract.high.u32 %v3902
        %v3905 = vmul.u32.u64.compose %v3901, %v3896
        %v3906 = vextract.low.u32 %v3905
        %v3907 = vextract.high.u32 %v3905
        %v3908 = vmul.u32 %v3901, %v3892
        %v3909 = vadd.s32 %v3904, %v3906
        %vm3910 = vc.u32 %v3904, %v3906
        %v3911 = vadd.s32 %v3907, 1
        %v3912 = vsel %vm3910, %v3911, %v3907
        %v3913 = vadd.s32 %v3908, %v3912
        %v3914 = vadd.s32 %v3913, 536870912
        %v3915 = vshrl.u32 %v3914, 30
        %v3916 = vshll.u32 %v3915, 30
        %v3917 = vsub.s32 %v3913, %v3916
        %vm3918 = vcmp.lt.s32.totalorder %v3917, 0
        %v3919 = vsub.s32 0, %v3917
        %v3920 = vsel %vm3918, %v3919, %v3917
        %v3921 = vclz %v3920
        %v3922 = vsub.s32 %v3921, 2
        %vm3923 = vcmp.gt.s32.totalorder 0, %v3922
        %v3924 = vsel %vm3923, 0, %v3922
        %v3925 = vsub.s32 32, %v3924
        %v3926 = vshll.u32 %v3917, %v3924
        %v3927 = vshrl.u32 %v3909, %v3925
        %v3928 = vor.u32 %v3926, %v3927
        %v3929 = vsub.s32 4294967266, %v3924
        %v3930 = vadd.s32 %v3929, 127
        %v3931 = vshll.u32 %v3930, 23
        %v3932 = vor.u32 4788187, %v3931
        %v3933 = vand.u32 2147483647, %v3932
        %v3935 = vcvt.s32.f32 %v3928
        %v3936 = vmul.f32 %v3935, %v3933
        %v3937 = vxor.u32 %v3936, 2147483648
        %v3938 = vsel %vm3855, %v3937, %v3936
        %v3939 = vsub.s32 4, %v3915
        %v3940 = vsel %vm3855, %v3939, %v3915
        %v3941 = vsel %vm3854, %v1040, %v3938
        %v3942 = vsel %vm3854, 0, %v3940
        %v3943 = vcosq.f32.pop %v3941
        %v3944 = vsinq.f32.pop %v3941
        %vm3945 = vweird.f32 %v1040
        %v3946 = vadd.s32 %v3942, 3
        %v3947 = vand.u32 %v3946, 3
        %vm3948 = vcmp.lt.s32.totalorder %v3947, 2
        %vm3949 = vcmp.eq.s32.totalorder %v3947, 0
        %v3950 = vxor.u32 %v3944, 2147483648
        %v3951 = vsel %vm3949, %v3943, %v3950
        %vm3952 = vcmp.eq.s32.totalorder %v3947, 2
        %v3953 = vxor.u32 %v3943, 2147483648
        %v3954 = vsel %vm3952, %v3953, %v3944
        %v3955 = vsel %vm3948, %v3951, %v3954
        %v3956 = vsel %vm3945, nan, %v3955
        %v3957 = vand.u32 2147483647, %v1041
        %vm3958 = vcmp.le.f32.partialorder %v3957, 0.7853982
        %vm3959 = vcmp.lt.s32.totalorder %v1041, 0
        %v3960 = vand.u32 %v1041, 2139095040
        %v3961 = vshrl.u32 %v3960, 23
        %v3962 = vsub.s32 %v3961, 127
        %v3963 = vand.u32 2147483647, %v1041
        %v3964 = vand.u32 %v3963, 8388607
        %v3965 = vor.u32 %v3964, 8388608
        %v3966 = vsub.s32 0, %v3965
        %v3967 = vadd.s32 %v3962, 1
        %vm3968 = vcmp.gt.s32.totalorder %v3967, 0
        %v3969 = vsel %vm3968, %v3967, 0
        %v3970 = vshrl.u32 %v3969, 5
        %v3971 = vand.u32 %v3969, 31
        %v3972 = vsub.s32 32, %v3971
        %v3973 = vshrl.u32 683565275, %v3972
        %v3974 = vshll.u32 683565275, %v3971
        %v3975 = vshrl.u32 2475754826, %v3972
        %v3976 = vor.u32 %v3974, %v3975
        %v3977 = vshll.u32 2475754826, %v3971
        %v3978 = vshrl.u32 2131351028, %v3972
        %v3979 = vor.u32 %v3977, %v3978
        %v3980 = vshll.u32 2131351028, %v3971
        %v3981 = vshrl.u32 2102212464, %v3972
        %v3982 = vor.u32 %v3980, %v3981
        %v3983 = vshll.u32 2102212464, %v3971
        %v3984 = vshrl.u32 920167782, %v3972
        %v3985 = vor.u32 %v3983, %v3984
        %v3986 = vshll.u32 920167782, %v3971
        %v3987 = vshrl.u32 1326507024, %v3972
        %v3988 = vor.u32 %v3986, %v3987
        %vm3989 = vcmp.lt.s32.totalorder %v3970, 1
        %vm3990 = vcmp.lt.s32.totalorder %v3970, 2
        %vm3991 = vcmp.lt.s32.totalorder %v3970, 3
        %vm3992 = vcmp.lt.s32.totalorder %v3970, 4
        %v3993 = vsel %vm3989, %v3973, %v3976
        %v3994 = vsel %vm3992, %v3982, 2102212464
        %v3995 = vsel %vm3991, %v3979, %v3994
        %v3996 = vsel %vm3990, %v3993, %v3995
        %v3997 = vsel %vm3989, %v3976, %v3979
        %v3998 = vsel %vm3992, %v3985, 920167782
        %v3999 = vsel %vm3991, %v3982, %v3998
        %v4000 = vsel %vm3990, %v3997, %v3999
        %v4001 = vsel %vm3989, %v3979, %v3982
        %v4002 = vsel %vm3992, %v3988, 1326507024
        %v4003 = vsel %vm3991, %v3985, %v4002
        %v4004 = vsel %vm3990, %v4001, %v4003
        %v4005 = vshll.u32 %v3965, 8
        %v4006 = vmul.u32.u64.compose %v4005, %v4004
        %v4007 = vextract.low.u32 %v4006
        %v4008 = vextract.high.u32 %v4006
        %v4009 = vmul.u32.u64.compose %v4005, %v4000
        %v4010 = vextract.low.u32 %v4009
        %v4011 = vextract.high.u32 %v4009
        %v4012 = vmul.u32 %v4005, %v3996
        %v4013 = vadd.s32 %v4008, %v4010
        %vm4014 = vc.u32 %v4008, %v4010
        %v4015 = vadd.s32 %v4011, 1
        %v4016 = vsel %vm4014, %v4015, %v4011
        %v4017 = vadd.s32 %v4012, %v4016
        %v4018 = vadd.s32 %v4017, 536870912
        %v4019 = vshrl.u32 %v4018, 30
        %v4020 = vshll.u32 %v4019, 30
        %v4021 = vsub.s32 %v4017, %v4020
        %vm4022 = vcmp.lt.s32.totalorder %v4021, 0
        %v4023 = vsub.s32 0, %v4021
        %v4024 = vsel %vm4022, %v4023, %v4021
        %v4025 = vclz %v4024
        %v4026 = vsub.s32 %v4025, 2
        %vm4027 = vcmp.gt.s32.totalorder 0, %v4026
        %v4028 = vsel %vm4027, 0, %v4026
        %v4029 = vsub.s32 32, %v4028
        %v4030 = vshll.u32 %v4021, %v4028
        %v4031 = vshrl.u32 %v4013, %v4029
        %v4032 = vor.u32 %v4030, %v4031
        %v4033 = vsub.s32 4294967266, %v4028
        %v4034 = vadd.s32 %v4033, 127
        %v4035 = vshll.u32 %v4034, 23
        %v4036 = vor.u32 4788187, %v4035
        %v4037 = vand.u32 2147483647, %v4036
        %v4039 = vcvt.s32.f32 %v4032
        %v4040 = vmul.f32 %v4039, %v4037
        %v4041 = vxor.u32 %v4040, 2147483648
        %v4042 = vsel %vm3959, %v4041, %v4040
        %v4043 = vsub.s32 4, %v4019
        %v4044 = vsel %vm3959, %v4043, %v4019
        %v4045 = vsel %vm3958, %v1041, %v4042
        %v4046 = vsel %vm3958, 0, %v4044
        %v4047 = vcosq.f32.pop %v4045
        %v4048 = vsinq.f32.pop %v4045
        %vm4049 = vweird.f32 %v1041
        %v4050 = vadd.s32 %v4046, 3
        %v4051 = vand.u32 %v4050, 3
        %vm4052 = vcmp.lt.s32.totalorder %v4051, 2
        %vm4053 = vcmp.eq.s32.totalorder %v4051, 0
        %v4054 = vxor.u32 %v4048, 2147483648
        %v4055 = vsel %vm4053, %v4047, %v4054
        %vm4056 = vcmp.eq.s32.totalorder %v4051, 2
        %v4057 = vxor.u32 %v4047, 2147483648
        %v4058 = vsel %vm4056, %v4057, %v4048
        %v4059 = vsel %vm4052, %v4055, %v4058
        %v4060 = vsel %vm4049, nan, %v4059
        %v4061 = vand.u32 2147483647, %v1042
        %vm4062 = vcmp.le.f32.partialorder %v4061, 0.7853982
        %vm4063 = vcmp.lt.s32.totalorder %v1042, 0
        %v4064 = vand.u32 %v1042, 2139095040
        %v4065 = vshrl.u32 %v4064, 23
        %v4066 = vsub.s32 %v4065, 127
        %v4067 = vand.u32 2147483647, %v1042
        %v4068 = vand.u32 %v4067, 8388607
        %v4069 = vor.u32 %v4068, 8388608
        %v4070 = vsub.s32 0, %v4069
        %v4071 = vadd.s32 %v4066, 1
        %vm4072 = vcmp.gt.s32.totalorder %v4071, 0
        %v4073 = vsel %vm4072, %v4071, 0
        %v4074 = vshrl.u32 %v4073, 5
        %v4075 = vand.u32 %v4073, 31
        %v4076 = vsub.s32 32, %v4075
        %v4077 = vshrl.u32 683565275, %v4076
        %v4078 = vshll.u32 683565275, %v4075
        %v4079 = vshrl.u32 2475754826, %v4076
        %v4080 = vor.u32 %v4078, %v4079
        %v4081 = vshll.u32 2475754826, %v4075
        %v4082 = vshrl.u32 2131351028, %v4076
        %v4083 = vor.u32 %v4081, %v4082
        %v4084 = vshll.u32 2131351028, %v4075
        %v4085 = vshrl.u32 2102212464, %v4076
        %v4086 = vor.u32 %v4084, %v4085
        %v4087 = vshll.u32 2102212464, %v4075
        %v4088 = vshrl.u32 920167782, %v4076
        %v4089 = vor.u32 %v4087, %v4088
        %v4090 = vshll.u32 920167782, %v4075
        %v4091 = vshrl.u32 1326507024, %v4076
        %v4092 = vor.u32 %v4090, %v4091
        %vm4093 = vcmp.lt.s32.totalorder %v4074, 1
        %vm4094 = vcmp.lt.s32.totalorder %v4074, 2
        %vm4095 = vcmp.lt.s32.totalorder %v4074, 3
        %vm4096 = vcmp.lt.s32.totalorder %v4074, 4
        %v4097 = vsel %vm4093, %v4077, %v4080
        %v4098 = vsel %vm4096, %v4086, 2102212464
        %v4099 = vsel %vm4095, %v4083, %v4098
        %v4100 = vsel %vm4094, %v4097, %v4099
        %v4101 = vsel %vm4093, %v4080, %v4083
        %v4102 = vsel %vm4096, %v4089, 920167782
        %v4103 = vsel %vm4095, %v4086, %v4102
        %v4104 = vsel %vm4094, %v4101, %v4103
        %v4105 = vsel %vm4093, %v4083, %v4086
        %v4106 = vsel %vm4096, %v4092, 1326507024
        %v4107 = vsel %vm4095, %v4089, %v4106
        %v4108 = vsel %vm4094, %v4105, %v4107
        %v4109 = vshll.u32 %v4069, 8
        %v4110 = vmul.u32.u64.compose %v4109, %v4108
        %v4111 = vextract.low.u32 %v4110
        %v4112 = vextract.high.u32 %v4110
        %v4113 = vmul.u32.u64.compose %v4109, %v4104
        %v4114 = vextract.low.u32 %v4113
        %v4115 = vextract.high.u32 %v4113
        %v4116 = vmul.u32 %v4109, %v4100
        %v4117 = vadd.s32 %v4112, %v4114
        %vm4118 = vc.u32 %v4112, %v4114
        %v4119 = vadd.s32 %v4115, 1
        %v4120 = vsel %vm4118, %v4119, %v4115
        %v4121 = vadd.s32 %v4116, %v4120
        %v4122 = vadd.s32 %v4121, 536870912
        %v4123 = vshrl.u32 %v4122, 30
        %v4124 = vshll.u32 %v4123, 30
        %v4125 = vsub.s32 %v4121, %v4124
        %vm4126 = vcmp.lt.s32.totalorder %v4125, 0
        %v4127 = vsub.s32 0, %v4125
        %v4128 = vsel %vm4126, %v4127, %v4125
        %v4129 = vclz %v4128
        %v4130 = vsub.s32 %v4129, 2
        %vm4131 = vcmp.gt.s32.totalorder 0, %v4130
        %v4132 = vsel %vm4131, 0, %v4130
        %v4133 = vsub.s32 32, %v4132
        %v4134 = vshll.u32 %v4125, %v4132
        %v4135 = vshrl.u32 %v4117, %v4133
        %v4136 = vor.u32 %v4134, %v4135
        %v4137 = vsub.s32 4294967266, %v4132
        %v4138 = vadd.s32 %v4137, 127
        %v4139 = vshll.u32 %v4138, 23
        %v4140 = vor.u32 4788187, %v4139
        %v4141 = vand.u32 2147483647, %v4140
        %v4143 = vcvt.s32.f32 %v4136
        %v4144 = vmul.f32 %v4143, %v4141
        %v4145 = vxor.u32 %v4144, 2147483648
        %v4146 = vsel %vm4063, %v4145, %v4144
        %v4147 = vsub.s32 4, %v4123
        %v4148 = vsel %vm4063, %v4147, %v4123
        %v4149 = vsel %vm4062, %v1042, %v4146
        %v4150 = vsel %vm4062, 0, %v4148
        %v4151 = vcosq.f32.pop %v4149
        %v4152 = vsinq.f32.pop %v4149
        %vm4153 = vweird.f32 %v1042
        %v4154 = vadd.s32 %v4150, 3
        %v4155 = vand.u32 %v4154, 3
        %vm4156 = vcmp.lt.s32.totalorder %v4155, 2
        %vm4157 = vcmp.eq.s32.totalorder %v4155, 0
        %v4158 = vxor.u32 %v4152, 2147483648
        %v4159 = vsel %vm4157, %v4151, %v4158
        %vm4160 = vcmp.eq.s32.totalorder %v4155, 2
        %v4161 = vxor.u32 %v4151, 2147483648
        %v4162 = vsel %vm4160, %v4161, %v4152
        %v4163 = vsel %vm4156, %v4159, %v4162
        %v4164 = vsel %vm4153, nan, %v4163
        %v4165 = vand.u32 2147483647, %v1043
        %vm4166 = vcmp.le.f32.partialorder %v4165, 0.7853982
        %vm4167 = vcmp.lt.s32.totalorder %v1043, 0
        %v4168 = vand.u32 %v1043, 2139095040
        %v4169 = vshrl.u32 %v4168, 23
        %v4170 = vsub.s32 %v4169, 127
        %v4171 = vand.u32 2147483647, %v1043
        %v4172 = vand.u32 %v4171, 8388607
        %v4173 = vor.u32 %v4172, 8388608
        %v4174 = vsub.s32 0, %v4173
        %v4175 = vadd.s32 %v4170, 1
        %vm4176 = vcmp.gt.s32.totalorder %v4175, 0
        %v4177 = vsel %vm4176, %v4175, 0
        %v4178 = vshrl.u32 %v4177, 5
        %v4179 = vand.u32 %v4177, 31
        %v4180 = vsub.s32 32, %v4179
        %v4181 = vshrl.u32 683565275, %v4180
        %v4182 = vshll.u32 683565275, %v4179
        %v4183 = vshrl.u32 2475754826, %v4180
        %v4184 = vor.u32 %v4182, %v4183
        %v4185 = vshll.u32 2475754826, %v4179
        %v4186 = vshrl.u32 2131351028, %v4180
        %v4187 = vor.u32 %v4185, %v4186
        %v4188 = vshll.u32 2131351028, %v4179
        %v4189 = vshrl.u32 2102212464, %v4180
        %v4190 = vor.u32 %v4188, %v4189
        %v4191 = vshll.u32 2102212464, %v4179
        %v4192 = vshrl.u32 920167782, %v4180
        %v4193 = vor.u32 %v4191, %v4192
        %v4194 = vshll.u32 920167782, %v4179
        %v4195 = vshrl.u32 1326507024, %v4180
        %v4196 = vor.u32 %v4194, %v4195
        %vm4197 = vcmp.lt.s32.totalorder %v4178, 1
        %vm4198 = vcmp.lt.s32.totalorder %v4178, 2
        %vm4199 = vcmp.lt.s32.totalorder %v4178, 3
        %vm4200 = vcmp.lt.s32.totalorder %v4178, 4
        %v4201 = vsel %vm4197, %v4181, %v4184
        %v4202 = vsel %vm4200, %v4190, 2102212464
        %v4203 = vsel %vm4199, %v4187, %v4202
        %v4204 = vsel %vm4198, %v4201, %v4203
        %v4205 = vsel %vm4197, %v4184, %v4187
        %v4206 = vsel %vm4200, %v4193, 920167782
        %v4207 = vsel %vm4199, %v4190, %v4206
        %v4208 = vsel %vm4198, %v4205, %v4207
        %v4209 = vsel %vm4197, %v4187, %v4190
        %v4210 = vsel %vm4200, %v4196, 1326507024
        %v4211 = vsel %vm4199, %v4193, %v4210
        %v4212 = vsel %vm4198, %v4209, %v4211
        %v4213 = vshll.u32 %v4173, 8
        %v4214 = vmul.u32.u64.compose %v4213, %v4212
        %v4215 = vextract.low.u32 %v4214
        %v4216 = vextract.high.u32 %v4214
        %v4217 = vmul.u32.u64.compose %v4213, %v4208
        %v4218 = vextract.low.u32 %v4217
        %v4219 = vextract.high.u32 %v4217
        %v4220 = vmul.u32 %v4213, %v4204
        %v4221 = vadd.s32 %v4216, %v4218
        %vm4222 = vc.u32 %v4216, %v4218
        %v4223 = vadd.s32 %v4219, 1
        %v4224 = vsel %vm4222, %v4223, %v4219
        %v4225 = vadd.s32 %v4220, %v4224
        %v4226 = vadd.s32 %v4225, 536870912
        %v4227 = vshrl.u32 %v4226, 30
        %v4228 = vshll.u32 %v4227, 30
        %v4229 = vsub.s32 %v4225, %v4228
        %vm4230 = vcmp.lt.s32.totalorder %v4229, 0
        %v4231 = vsub.s32 0, %v4229
        %v4232 = vsel %vm4230, %v4231, %v4229
        %v4233 = vclz %v4232
        %v4234 = vsub.s32 %v4233, 2
        %vm4235 = vcmp.gt.s32.totalorder 0, %v4234
        %v4236 = vsel %vm4235, 0, %v4234
        %v4237 = vsub.s32 32, %v4236
        %v4238 = vshll.u32 %v4229, %v4236
        %v4239 = vshrl.u32 %v4221, %v4237
        %v4240 = vor.u32 %v4238, %v4239
        %v4241 = vsub.s32 4294967266, %v4236
        %v4242 = vadd.s32 %v4241, 127
        %v4243 = vshll.u32 %v4242, 23
        %v4244 = vor.u32 4788187, %v4243
        %v4245 = vand.u32 2147483647, %v4244
        %v4247 = vcvt.s32.f32 %v4240
        %v4248 = vmul.f32 %v4247, %v4245
        %v4249 = vxor.u32 %v4248, 2147483648
        %v4250 = vsel %vm4167, %v4249, %v4248
        %v4251 = vsub.s32 4, %v4227
        %v4252 = vsel %vm4167, %v4251, %v4227
        %v4253 = vsel %vm4166, %v1043, %v4250
        %v4254 = vsel %vm4166, 0, %v4252
        %v4255 = vcosq.f32.pop %v4253
        %v4256 = vsinq.f32.pop %v4253
        %vm4257 = vweird.f32 %v1043
        %v4258 = vadd.s32 %v4254, 3
        %v4259 = vand.u32 %v4258, 3
        %vm4260 = vcmp.lt.s32.totalorder %v4259, 2
        %vm4261 = vcmp.eq.s32.totalorder %v4259, 0
        %v4262 = vxor.u32 %v4256, 2147483648
        %v4263 = vsel %vm4261, %v4255, %v4262
        %vm4264 = vcmp.eq.s32.totalorder %v4259, 2
        %v4265 = vxor.u32 %v4255, 2147483648
        %v4266 = vsel %vm4264, %v4265, %v4256
        %v4267 = vsel %vm4260, %v4263, %v4266
        %v4268 = vsel %vm4257, nan, %v4267
        %v4269 = vand.u32 2147483647, %v1044
        %vm4270 = vcmp.le.f32.partialorder %v4269, 0.7853982
        %vm4271 = vcmp.lt.s32.totalorder %v1044, 0
        %v4272 = vand.u32 %v1044, 2139095040
        %v4273 = vshrl.u32 %v4272, 23
        %v4274 = vsub.s32 %v4273, 127
        %v4275 = vand.u32 2147483647, %v1044
        %v4276 = vand.u32 %v4275, 8388607
        %v4277 = vor.u32 %v4276, 8388608
        %v4278 = vsub.s32 0, %v4277
        %v4279 = vadd.s32 %v4274, 1
        %vm4280 = vcmp.gt.s32.totalorder %v4279, 0
        %v4281 = vsel %vm4280, %v4279, 0
        %v4282 = vshrl.u32 %v4281, 5
        %v4283 = vand.u32 %v4281, 31
        %v4284 = vsub.s32 32, %v4283
        %v4285 = vshrl.u32 683565275, %v4284
        %v4286 = vshll.u32 683565275, %v4283
        %v4287 = vshrl.u32 2475754826, %v4284
        %v4288 = vor.u32 %v4286, %v4287
        %v4289 = vshll.u32 2475754826, %v4283
        %v4290 = vshrl.u32 2131351028, %v4284
        %v4291 = vor.u32 %v4289, %v4290
        %v4292 = vshll.u32 2131351028, %v4283
        %v4293 = vshrl.u32 2102212464, %v4284
        %v4294 = vor.u32 %v4292, %v4293
        %v4295 = vshll.u32 2102212464, %v4283
        %v4296 = vshrl.u32 920167782, %v4284
        %v4297 = vor.u32 %v4295, %v4296
        %v4298 = vshll.u32 920167782, %v4283
        %v4299 = vshrl.u32 1326507024, %v4284
        %v4300 = vor.u32 %v4298, %v4299
        %vm4301 = vcmp.lt.s32.totalorder %v4282, 1
        %vm4302 = vcmp.lt.s32.totalorder %v4282, 2
        %vm4303 = vcmp.lt.s32.totalorder %v4282, 3
        %vm4304 = vcmp.lt.s32.totalorder %v4282, 4
        %v4305 = vsel %vm4301, %v4285, %v4288
        %v4306 = vsel %vm4304, %v4294, 2102212464
        %v4307 = vsel %vm4303, %v4291, %v4306
        %v4308 = vsel %vm4302, %v4305, %v4307
        %v4309 = vsel %vm4301, %v4288, %v4291
        %v4310 = vsel %vm4304, %v4297, 920167782
        %v4311 = vsel %vm4303, %v4294, %v4310
        %v4312 = vsel %vm4302, %v4309, %v4311
        %v4313 = vsel %vm4301, %v4291, %v4294
        %v4314 = vsel %vm4304, %v4300, 1326507024
        %v4315 = vsel %vm4303, %v4297, %v4314
        %v4316 = vsel %vm4302, %v4313, %v4315
        %v4317 = vshll.u32 %v4277, 8
        %v4318 = vmul.u32.u64.compose %v4317, %v4316
        %v4319 = vextract.low.u32 %v4318
        %v4320 = vextract.high.u32 %v4318
        %v4321 = vmul.u32.u64.compose %v4317, %v4312
        %v4322 = vextract.low.u32 %v4321
        %v4323 = vextract.high.u32 %v4321
        %v4324 = vmul.u32 %v4317, %v4308
        %v4325 = vadd.s32 %v4320, %v4322
        %vm4326 = vc.u32 %v4320, %v4322
        %v4327 = vadd.s32 %v4323, 1
        %v4328 = vsel %vm4326, %v4327, %v4323
        %v4329 = vadd.s32 %v4324, %v4328
        %v4330 = vadd.s32 %v4329, 536870912
        %v4331 = vshrl.u32 %v4330, 30
        %v4332 = vshll.u32 %v4331, 30
        %v4333 = vsub.s32 %v4329, %v4332
        %vm4334 = vcmp.lt.s32.totalorder %v4333, 0
        %v4335 = vsub.s32 0, %v4333
        %v4336 = vsel %vm4334, %v4335, %v4333
        %v4337 = vclz %v4336
        %v4338 = vsub.s32 %v4337, 2
        %vm4339 = vcmp.gt.s32.totalorder 0, %v4338
        %v4340 = vsel %vm4339, 0, %v4338
        %v4341 = vsub.s32 32, %v4340
        %v4342 = vshll.u32 %v4333, %v4340
        %v4343 = vshrl.u32 %v4325, %v4341
        %v4344 = vor.u32 %v4342, %v4343
        %v4345 = vsub.s32 4294967266, %v4340
        %v4346 = vadd.s32 %v4345, 127
        %v4347 = vshll.u32 %v4346, 23
        %v4348 = vor.u32 4788187, %v4347
        %v4349 = vand.u32 2147483647, %v4348
        %v4351 = vcvt.s32.f32 %v4344
        %v4352 = vmul.f32 %v4351, %v4349
        %v4353 = vxor.u32 %v4352, 2147483648
        %v4354 = vsel %vm4271, %v4353, %v4352
        %v4355 = vsub.s32 4, %v4331
        %v4356 = vsel %vm4271, %v4355, %v4331
        %v4357 = vsel %vm4270, %v1044, %v4354
        %v4358 = vsel %vm4270, 0, %v4356
        %v4359 = vcosq.f32.pop %v4357
        %v4360 = vsinq.f32.pop %v4357
        %vm4361 = vweird.f32 %v1044
        %v4362 = vadd.s32 %v4358, 3
        %v4363 = vand.u32 %v4362, 3
        %vm4364 = vcmp.lt.s32.totalorder %v4363, 2
        %vm4365 = vcmp.eq.s32.totalorder %v4363, 0
        %v4366 = vxor.u32 %v4360, 2147483648
        %v4367 = vsel %vm4365, %v4359, %v4366
        %vm4368 = vcmp.eq.s32.totalorder %v4363, 2
        %v4369 = vxor.u32 %v4359, 2147483648
        %v4370 = vsel %vm4368, %v4369, %v4360
        %v4371 = vsel %vm4364, %v4367, %v4370
        %v4372 = vsel %vm4361, nan, %v4371
        %4373 = vst [vmem:[%s254] sm:$0xff] %v1148
        %4374 = vst [vmem:[%s254 + $0x8] sm:$0xff] %v1252
        %4375 = vst [vmem:[%s254 + $0x10] sm:$0xff] %v1356
        %4376 = vst [vmem:[%s254 + $0x18] sm:$0xff] %v1460
        %4377 = vst [vmem:[%s254 + $0x20] sm:$0xff] %v1564
        %4378 = vst [vmem:[%s254 + $0x28] sm:$0xff] %v1668
        %4379 = vst [vmem:[%s254 + $0x30] sm:$0xff] %v1772
        %4380 = vst [vmem:[%s254 + $0x38] sm:$0xff] %v1876
        %4381 = vst [vmem:[%s254 + $0x40] sm:$0xff] %v1980
        %4382 = vst [vmem:[%s254 + $0x48] sm:$0xff] %v2084
        %4383 = vst [vmem:[%s254 + $0x50] sm:$0xff] %v2188
        %4384 = vst [vmem:[%s254 + $0x58] sm:$0xff] %v2292
        %4385 = vst [vmem:[%s254 + $0x60] sm:$0xff] %v2396
        %4386 = vst [vmem:[%s254 + $0x68] sm:$0xff] %v2500
        %4387 = vst [vmem:[%s254 + $0x70] sm:$0xff] %v2604
        %4388 = vst [vmem:[%s254 + $0x78] sm:$0xff] %v2708
        %4389 = vst [vmem:[%s254 + $0x80] sm:$0xff] %v2812
        %4390 = vst [vmem:[%s254 + $0x88] sm:$0xff] %v2916
        %4391 = vst [vmem:[%s254 + $0x90] sm:$0xff] %v3020
        %4392 = vst [vmem:[%s254 + $0x98] sm:$0xff] %v3124
        %4393 = vst [vmem:[%s254 + $0xa0] sm:$0xff] %v3228
        %4394 = vst [vmem:[%s254 + $0xa8] sm:$0xff] %v3332
        %4395 = vst [vmem:[%s254 + $0xb0] sm:$0xff] %v3436
        %4396 = vst [vmem:[%s254 + $0xb8] sm:$0xff] %v3540
        %4397 = vst [vmem:[%s254 + $0xc0] sm:$0xff] %v3644
        %4398 = vst [vmem:[%s254 + $0xc8] sm:$0xff] %v3748
        %4399 = vst [vmem:[%s254 + $0xd0] sm:$0xff] %v3852
        %4400 = vst [vmem:[%s254 + $0xd8] sm:$0xff] %v3956
        %4401 = vst [vmem:[%s254 + $0xe0] sm:$0xff] %v4060
        %4402 = vst [vmem:[%s254 + $0xe8] sm:$0xff] %v4164
        %4403 = vst [vmem:[%s254 + $0xf0] sm:$0xff] %v4268
        %4404 = vst [vmem:[%s254 + $0xf8] sm:$0xff] %v4372
        %s4405 = sand.u32 %s157, 1
        %s4406 = scalar_lea.sflag [#allocation4], %s4405
        %s4407 = sand.u32 %s157, 1
        %s4408 = smul.addr %s4407, 256
        %s4409 = scalar_lea.vmem [#allocation5], %s4408
        // Predicated region
        $region45: #{_position_embedding_sine_impl.1} parent=39 // pred_check
          %p4410 = pneg %p167
        $region46: #{_position_embedding_sine_impl.1} parent=39 // pred_check_branch
          %4412 = sbr.rel (%p4410) target = $region48
        $region47: #{_position_embedding_sine_impl.1} parent=39 // pred_region
          %s4413 = smul.u32 16, %s25
          %s4415 = ssub.s32 4096, 4096
          %4416 = vsyncadd %s4406, %s4415
          %s4417 = smul.addr %s4413, 2
          %s4418 = smul.addr %s24, 32
          %s4419 = sadd.s32 %s4417, %s4418
          %s4420 = smul.addr %s4419, 128
          %s4421 = scalar_lea.hbm %s5, %s4420
          %s4422 = sshll.u32 %s4409, 4
          %s4423 = int_to_ptr.vmem [resolvable:$true] %s4422
          %4428 = dma.vmem_to_hbm [thread:$0]  %s4423, 4096, %s4421, %s4406, 128, 128, 8
        $region48: #{_position_embedding_sine_impl.1} parent=39 // pred_fallthru
          _
      $region40: #{_position_embedding_sine_impl.1} parent=5 // pred_fallthru
        _
      %p4429 = scmp.le.s32.totalorder 2, %s15
      // Predicated region
      $region49: #{_position_embedding_sine_impl.1} parent=5 // pred_check
        %p4430 = pneg %p4429
      $region50: #{_position_embedding_sine_impl.1} parent=5 // pred_check_branch
        %4432 = sbr.rel (%p4430) target = $region52
      $region51: #{_position_embedding_sine_impl.1} parent=5 // pred_region
        %s4433 = ssub.s32 %s15, 2
        // Predicated region
        $region53: #{_position_embedding_sine_impl.1} parent=51 // pred_check
          %p4434 = pneg %p173
        $region54: #{_position_embedding_sine_impl.1} parent=51 // pred_check_branch
          %4436 = sbr.rel (%p4434) target = $region56
        $region55: #{_position_embedding_sine_impl.1} parent=51 // pred_region
          %s4437 = sand.u32 %s158, 1
          %s4438 = scalar_lea.sflag [#allocation4], %s4437
          %s4439 = sand.u32 %s158, 1
          %s4440 = smul.addr %s4439, 256
          %s4441 = scalar_lea.vmem [#allocation5], %s4440
          %4442 = dma.done %s4438, 4096
        $region56: #{_position_embedding_sine_impl.1} parent=51 // pred_fallthru
          _
      $region52: #{_position_embedding_sine_impl.1} parent=5 // pred_fallthru
        _
    $region6: #{_position_embedding_sine_impl.1} parent=1 // loop_footer
      %s19 = sadd.s32 1, %s15
    $region7: #{_position_embedding_sine_impl.1} parent=1 // loop_footer_branch
      %14 = sbr.rel target = $region3
    $region8: #{_position_embedding_sine_impl.1} parent=1 // loop_exit
      _
    %4443 = vsyncpa [#allocation3], 1
    %s4444 = scalar_lea.sflag [#allocation3], 1
    %4445 = vsyncpa %s4444, 1
    %4446 = vsyncpa [#allocation4], 1
    %s4447 = scalar_lea.sflag [#allocation4], 1
    %4448 = vsyncpa %s4447, 1

</llo_original>
